<compile_context>
chip_gen: v6e
topology: v6e:2x2x1
jax: 0.10.0
libtpu: 0.0.40
codegen_flags: <defaults>
</compile_context>

<pallas_src>
import functools

import jax
import jax.numpy as jnp
from jax import lax
from jax.experimental import pallas as pl
from jax.experimental.pallas import tpu as pltpu

LEAK = 0.2
BN_EPS = 1e-5


def _round_up(n, m):
    return (n + m - 1) // m * m


# ------------------------------ Pallas kernel -------------------------------

def _fused_cnn_kernel(p1_ref, w1_ref, w2_ref, g2_ref, be2_ref,
                      w3_ref, g3_ref, be3_ref, wl_ref, bl_ref, o_ref,
                      *, batch, count2, count3, m3_pad, mb_pad):
    f32 = jnp.float32
    bf16 = jnp.bfloat16
    B = batch

    # ---- conv1: Conv(1->64, k3, s2, p1) + LeakyReLU(0.2)
    # p1 is the phase-split im2col of the raw input with a trailing ones
    # column; the conv1 bias lives in the last row of w1, so padding rows
    # (all-zero patches, zero ones-column) stay exactly 0 after the matmul
    # and the LeakyReLU -- they implement conv2's zero padding.
    y1 = jnp.dot(p1_ref[...], w1_ref[...], preferred_element_type=f32)
    x1 = jnp.where(y1 >= 0.0, y1, LEAK * y1)                 # [B*512, 64] f32
    # Phase-split view: [B, hp, hh, wp, wh, C] with (y_s, x_s) = (2hh+hp, 2wh+wp)
    # and the real 14x14 conv1 output living at y_s, x_s in [1, 15).
    x1v = x1.reshape(B, 2, 8, 2, 16, 64)

    # ---- conv2: Conv(64->128, k3, s2, p1) + BN(batch stats) + LeakyReLU(0.2)
    # Stride-2 tap gather = static contiguous slices of the phase-split value;
    # the 9 taps are folded into one K=576 matmul.
    taps2 = []
    for kh in range(3):
        for kw in range(3):
            t = x1v[:, kh % 2, kh // 2:kh // 2 + 7,
                    kw % 2, kw // 2:kw // 2 + 8, :]          # [B, 7, 8, 64]
            taps2.append(t)
    p2 = jnp.concatenate(taps2, axis=-1)                     # [B, 7, 8, 576]
    p2 = p2.reshape(B * 56, 576).astype(bf16)
    a2 = jnp.dot(p2, w2_ref[...], preferred_element_type=f32)  # [56B, 128] f32
    # Conv bias is redundant in front of batch-stats BatchNorm (it cancels).
    # BN statistics over the real rows only: the 8-wide column grid has one
    # garbage column (c == 7), excluded via a row mask; one-pass mean/var.
    row = lax.broadcasted_iota(jnp.int32, a2.shape, 0)
    mask2 = jnp.where((row & 7) == 7, 0.0, 1.0).astype(f32)
    a2m = a2 * mask2
    mu2 = jnp.sum(a2m, axis=0, keepdims=True) / count2
    ex2 = jnp.sum(a2m * a2m, axis=0, keepdims=True) / count2
    var2 = ex2 - mu2 * mu2
    h2 = (a2 - mu2) * lax.rsqrt(var2 + BN_EPS) * g2_ref[...] + be2_ref[...]
    x2 = jnp.where(h2 >= 0.0, h2, LEAK * h2)                 # [56B, 128] f32
    x2v = x2.reshape(B, 7, 8, 128)                           # garbage col never read

    # ---- conv3: Conv(128->256, k3, s2, p0) + BN(batch stats) + LeakyReLU(0.2)
    # 3x3 output; patch rows ordered (pos, b) so the flatten + linear below is
    # a plain lane-concatenation of per-position row slices.  One K=1152 dot.
    pieces = []
    for r3 in range(3):
        for c3 in range(3):
            taps3 = []
            for kh in range(3):
                for kw in range(3):
                    taps3.append(x2v[:, 2 * r3 + kh, 2 * c3 + kw, :])  # [B,128]
            pieces.append(jnp.concatenate(taps3, axis=-1))             # [B,1152]
    p3 = jnp.concatenate(pieces, axis=0)                     # [9B, 1152]
    if m3_pad > 9 * B:
        p3 = jnp.concatenate(
            [p3, jnp.zeros((m3_pad - 9 * B, 1152), f32)], axis=0)
    a3 = jnp.dot(p3.astype(bf16), w3_ref[...],
                 preferred_element_type=f32)                 # [m3_pad, 256] f32
    mu3 = jnp.sum(a3, axis=0, keepdims=True) / count3        # pad rows are 0
    ex3 = jnp.sum(a3 * a3, axis=0, keepdims=True) / count3
    var3 = ex3 - mu3 * mu3
    h3 = (a3 - mu3) * lax.rsqrt(var3 + BN_EPS) * g3_ref[...] + be3_ref[...]
    x3 = jnp.where(h3 >= 0.0, h3, LEAK * h3)                 # [m3_pad, 256] f32

    # ---- flatten (PyTorch NCHW order folded into wl) + Linear, one matmul.
    feats = jnp.concatenate([x3[p * B:(p + 1) * B, :] for p in range(9)],
                            axis=-1)                         # [B, 2304]
    if mb_pad > B:
        feats = jnp.concatenate(
            [feats, jnp.zeros((mb_pad - B, 2304), f32)], axis=0)
    out = jnp.dot(feats.astype(bf16), wl_ref[...],
                  preferred_element_type=f32) + bl_ref[...]
    o_ref[...] = out                                         # [mb_pad, 128]


# ------------------------------- host glue ----------------------------------

def _conv1_phase_patches(x_nchw):
    """Phase-split im2col for conv1 (k3, s2, p1) with a trailing ones column.

    Returns [B*512, 10]: row (b, hp, hh, wp, wh) holds the 9-tap conv1 patch
    of conv1-output pixel (y, x) = (2hh+hp-1, 2wh+wp-1), or zeros when that
    pixel is outside the real 14x14 grid (this realizes both conv2's zero
    padding ring and the alignment padding)."""
    B, _, H, W = x_nchw.shape                                # 1 x 28 x 28
    xp = jnp.pad(x_nchw[:, 0], ((0, 0), (1, 1), (1, 1)))     # [B, 30, 30]
    oh, ow = (H + 2 - 3) // 2 + 1, (W + 2 - 3) // 2 + 1      # 14, 14
    cols = [xp[:, ki:ki + 2 * oh - 1:2, kj:kj + 2 * ow - 1:2]
            for ki in range(3) for kj in range(3)]
    p = jnp.stack(cols, axis=-1)                             # [B, 14, 14, 9]
    p = jnp.concatenate([p, jnp.ones((B, oh, ow, 1), p.dtype)], axis=-1)
    # Embed at (y_s, x_s) = (y+1, x+1) in a [16, 32] grid, then split each
    # spatial coordinate into (half, parity).
    p = jnp.pad(p, ((0, 0), (1, 1), (1, 17), (0, 0)))        # [B, 16, 32, 10]
    p = p.reshape(B, 8, 2, 16, 2, 10).transpose(0, 2, 1, 4, 3, 5)
    return p.reshape(B * 512, 10)


def init_params(key, n_classes):
    """Parameters in PyTorch layouts (Conv2d [Cout,Cin,KH,KW], Linear [N, F])."""
    ks = jax.random.split(key, 8)
    p = {}
    p["w1"] = 0.1 * jax.random.normal(ks[0], (64, 1, 3, 3), jnp.float32)
    p["b1"] = 0.01 * jax.random.normal(ks[1], (64,), jnp.float32)
    p["w2"] = 0.05 * jax.random.normal(ks[2], (128, 64, 3, 3), jnp.float32)
    p["b2"] = 0.01 * jax.random.normal(ks[3], (128,), jnp.float32)   # no-op pre-BN
    p["w3"] = 0.03 * jax.random.normal(ks[4], (256, 128, 3, 3), jnp.float32)
    p["b3"] = 0.01 * jax.random.normal(ks[5], (256,), jnp.float32)   # no-op pre-BN
    p["g2"] = jnp.ones((128,), jnp.float32)
    p["be2"] = jnp.zeros((128,), jnp.float32)
    p["g3"] = jnp.ones((256,), jnp.float32)
    p["be3"] = jnp.zeros((256,), jnp.float32)
    p["wl"] = 0.02 * jax.random.normal(ks[6], (n_classes, 64 * 4 * 3 * 3),
                                       jnp.float32)
    p["bl"] = 0.01 * jax.random.normal(ks[7], (n_classes,), jnp.float32)
    return p


def cnn_forward(x_nchw, params, n_classes):
    B = x_nchw.shape[0]
    assert x_nchw.shape[1:] == (1, 28, 28), x_nchw.shape
    bf16 = jnp.bfloat16

    # conv1 im2col (tiny: [B*512, 10]) built host-side in the phase-split
    # order the kernel's conv2 gather expects.
    p1 = _conv1_phase_patches(x_nchw).astype(bf16)

    # Kernel-ready weight layouts (trace-time reshapes of PyTorch params).
    w1aug = jnp.concatenate(
        [jnp.transpose(params["w1"], (2, 3, 1, 0)).reshape(9, 64),
         params["b1"].reshape(1, 64)], axis=0).astype(bf16)           # [10, 64]
    w2 = jnp.transpose(params["w2"], (2, 3, 1, 0)).reshape(576, 128).astype(bf16)
    w3 = jnp.transpose(params["w3"], (2, 3, 1, 0)).reshape(1152, 256).astype(bf16)
    # NOTE: params["b2"], params["b3"] are intentionally unused -- a conv bias
    # immediately followed by batch-statistics BatchNorm cancels exactly.
    n_pad = 128
    # PyTorch flatten index = c*9 + pos (NCHW); kernel lane index = pos*256 + c.
    wl = jnp.transpose(params["wl"].reshape(n_classes, 256, 9), (2, 1, 0))
    wl = jnp.pad(wl.reshape(2304, n_classes),
                 ((0, 0), (0, n_pad - n_classes))).astype(bf16)       # [2304, 128]
    bl = jnp.pad(params["bl"].reshape(1, n_classes),
                 ((0, 0), (0, n_pad - n_classes)))                    # [1, 128] f32
    g2 = params["g2"].reshape(1, 128)
    be2 = params["be2"].reshape(1, 128)
    g3 = params["g3"].reshape(1, 256)
    be3 = params["be3"].reshape(1, 256)

    count2 = B * 49                      # real BN samples for conv2 (N*H*W)
    count3 = 9 * B                       # real BN samples for conv3
    m3_pad = _round_up(count3, 8)
    mb_pad = max(8, _round_up(B, 8))

    kernel = functools.partial(_fused_cnn_kernel, batch=B, count2=count2,
                               count3=count3, m3_pad=m3_pad, mb_pad=mb_pad)

    flops = 2 * (B * 512 * 10 * 64 + B * 56 * 576 * 128
                 + m3_pad * 1152 * 256 + mb_pad * 2304 * 128)
    operands = (p1, w1aug, w2, g2, be2, w3, g3, be3, wl, bl)
    bytes_accessed = sum(int(a.size) * a.dtype.itemsize for a in operands) \
        + mb_pad * 128 * 4

    out_pad = pl.pallas_call(
        kernel,
        out_shape=jax.ShapeDtypeStruct((mb_pad, 128), jnp.float32),
        in_specs=[pl.BlockSpec(memory_space=pltpu.MemorySpace.VMEM)] * len(operands),
        out_specs=pl.BlockSpec(memory_space=pltpu.MemorySpace.VMEM),
        cost_estimate=pl.CostEstimate(flops=flops, transcendentals=512,
                                      bytes_accessed=bytes_accessed),
    )(*operands)

    return out_pad[:B, :n_classes]


if __name__ == "__main__":
    n_classes = 10
    key = jax.random.PRNGKey(0)
    k_x, k_p = jax.random.split(key)
    # MNIST-like input (the 64*4*3*3 = 2304 flatten implies 1x28x28).
    x = jax.random.normal(k_x, (2, 1, 28, 28), jnp.float32)
    params = init_params(k_p, n_classes)

    fwd = jax.jit(cnn_forward, static_argnames=("n_classes",))
    out = fwd(x, params, n_classes=n_classes)
    jax.block_until_ready(out)
    assert out.shape == (2, n_classes), out.shape
    assert out.dtype == jnp.float32
    print("KERNEL_OK")
</pallas_src>

<mosaic_0001>
module attributes {stable_mosaic.version = 11 : i64} {
  func.func @_fused_cnn_kernel(%arg0: memref<1024x10xbf16, #tpu.memory_space<vmem>>, %arg1: memref<10x64xbf16, #tpu.memory_space<vmem>>, %arg2: memref<576x128xbf16, #tpu.memory_space<vmem>>, %arg3: memref<1x128xf32, #tpu.memory_space<vmem>>, %arg4: memref<1x128xf32, #tpu.memory_space<vmem>>, %arg5: memref<1152x256xbf16, #tpu.memory_space<vmem>>, %arg6: memref<1x256xf32, #tpu.memory_space<vmem>>, %arg7: memref<1x256xf32, #tpu.memory_space<vmem>>, %arg8: memref<2304x128xbf16, #tpu.memory_space<vmem>>, %arg9: memref<1x128xf32, #tpu.memory_space<vmem>>, %arg10: memref<8x128xf32, #tpu.memory_space<vmem>>) attributes {dimension_semantics = [], scalar_prefetch = 0 : i64, scratch_operands = 0 : i64, tpu.core_type = #tpu.core_type<tc>} {
    %c0 = arith.constant 0 : index
    %c0_0 = arith.constant 0 : index
    %0 = vector.load %arg0[%c0, %c0_0] : memref<1024x10xbf16, #tpu.memory_space<vmem>>, vector<1024x10xbf16>
    %c0_1 = arith.constant 0 : index
    %c0_2 = arith.constant 0 : index
    %1 = vector.load %arg1[%c0_1, %c0_2] : memref<10x64xbf16, #tpu.memory_space<vmem>>, vector<10x64xbf16>
    %cst = arith.constant dense<0.000000e+00> : vector<1024x64xf32>
    %2 = tpu.matmul %0, %1, %cst {dimension_numbers = #tpu.dot_dimension_numbers<[1], [0], [0], [1], [0, 0, 1, 1], [], []>} : vector<1024x10xbf16>, vector<10x64xbf16>, vector<1024x64xf32> -> vector<1024x64xf32>
    %cst_3 = arith.constant 0.000000e+00 : f32
    %3 = vector.broadcast %cst_3 : f32 to vector<1024x64xf32>
    %4 = arith.cmpf oge, %2, %3 : vector<1024x64xf32>
    %cst_4 = arith.constant 2.000000e-01 : f32
    %5 = vector.broadcast %cst_4 : f32 to vector<1024x64xf32>
    %6 = arith.mulf %5, %2 : vector<1024x64xf32>
    %7 = arith.select %4, %2, %6 : vector<1024x64xi1>, vector<1024x64xf32>
    %8 = vector.shape_cast %7 : vector<1024x64xf32> to vector<2x2x8x2x16x64xf32>
    %9 = vector.extract_strided_slice %8 {offsets = [0, 0, 0, 0, 0, 0], sizes = [2, 1, 7, 1, 8, 64], strides = [1, 1, 1, 1, 1, 1]} : vector<2x2x8x2x16x64xf32> to vector<2x1x7x1x8x64xf32>
    %10 = vector.shape_cast %9 : vector<2x1x7x1x8x64xf32> to vector<2x7x8x64xf32>
    %11 = vector.extract_strided_slice %8 {offsets = [0, 0, 0, 1, 0, 0], sizes = [2, 1, 7, 1, 8, 64], strides = [1, 1, 1, 1, 1, 1]} : vector<2x2x8x2x16x64xf32> to vector<2x1x7x1x8x64xf32>
    %12 = vector.shape_cast %11 : vector<2x1x7x1x8x64xf32> to vector<2x7x8x64xf32>
    %13 = vector.extract_strided_slice %8 {offsets = [0, 0, 0, 0, 1, 0], sizes = [2, 1, 7, 1, 8, 64], strides = [1, 1, 1, 1, 1, 1]} : vector<2x2x8x2x16x64xf32> to vector<2x1x7x1x8x64xf32>
    %14 = vector.shape_cast %13 : vector<2x1x7x1x8x64xf32> to vector<2x7x8x64xf32>
    %15 = vector.extract_strided_slice %8 {offsets = [0, 1, 0, 0, 0, 0], sizes = [2, 1, 7, 1, 8, 64], strides = [1, 1, 1, 1, 1, 1]} : vector<2x2x8x2x16x64xf32> to vector<2x1x7x1x8x64xf32>
    %16 = vector.shape_cast %15 : vector<2x1x7x1x8x64xf32> to vector<2x7x8x64xf32>
    %17 = vector.extract_strided_slice %8 {offsets = [0, 1, 0, 1, 0, 0], sizes = [2, 1, 7, 1, 8, 64], strides = [1, 1, 1, 1, 1, 1]} : vector<2x2x8x2x16x64xf32> to vector<2x1x7x1x8x64xf32>
    %18 = vector.shape_cast %17 : vector<2x1x7x1x8x64xf32> to vector<2x7x8x64xf32>
    %19 = vector.extract_strided_slice %8 {offsets = [0, 1, 0, 0, 1, 0], sizes = [2, 1, 7, 1, 8, 64], strides = [1, 1, 1, 1, 1, 1]} : vector<2x2x8x2x16x64xf32> to vector<2x1x7x1x8x64xf32>
    %20 = vector.shape_cast %19 : vector<2x1x7x1x8x64xf32> to vector<2x7x8x64xf32>
    %21 = vector.extract_strided_slice %8 {offsets = [0, 0, 1, 0, 0, 0], sizes = [2, 1, 7, 1, 8, 64], strides = [1, 1, 1, 1, 1, 1]} : vector<2x2x8x2x16x64xf32> to vector<2x1x7x1x8x64xf32>
    %22 = vector.shape_cast %21 : vector<2x1x7x1x8x64xf32> to vector<2x7x8x64xf32>
    %23 = vector.extract_strided_slice %8 {offsets = [0, 0, 1, 1, 0, 0], sizes = [2, 1, 7, 1, 8, 64], strides = [1, 1, 1, 1, 1, 1]} : vector<2x2x8x2x16x64xf32> to vector<2x1x7x1x8x64xf32>
    %24 = vector.shape_cast %23 : vector<2x1x7x1x8x64xf32> to vector<2x7x8x64xf32>
    %25 = vector.extract_strided_slice %8 {offsets = [0, 0, 1, 0, 1, 0], sizes = [2, 1, 7, 1, 8, 64], strides = [1, 1, 1, 1, 1, 1]} : vector<2x2x8x2x16x64xf32> to vector<2x1x7x1x8x64xf32>
    %26 = vector.shape_cast %25 : vector<2x1x7x1x8x64xf32> to vector<2x7x8x64xf32>
    %27 = tpu.concatenate %10, %12, %14, %16, %18, %20, %22, %24, %26 in 3 : vector<2x7x8x64xf32>, vector<2x7x8x64xf32>, vector<2x7x8x64xf32>, vector<2x7x8x64xf32>, vector<2x7x8x64xf32>, vector<2x7x8x64xf32>, vector<2x7x8x64xf32>, vector<2x7x8x64xf32>, vector<2x7x8x64xf32> -> vector<2x7x8x576xf32>
    %28 = vector.shape_cast %27 : vector<2x7x8x576xf32> to vector<112x576xf32>
    %29 = arith.truncf %28 : vector<112x576xf32> to vector<112x576xbf16>
    %c0_5 = arith.constant 0 : index
    %c0_6 = arith.constant 0 : index
    %30 = vector.load %arg2[%c0_5, %c0_6] : memref<576x128xbf16, #tpu.memory_space<vmem>>, vector<576x128xbf16>
    %cst_7 = arith.constant dense<0.000000e+00> : vector<112x128xf32>
    %31 = tpu.matmul %29, %30, %cst_7 {dimension_numbers = #tpu.dot_dimension_numbers<[1], [0], [0], [1], [0, 0, 1, 1], [], []>} : vector<112x576xbf16>, vector<576x128xbf16>, vector<112x128xf32> -> vector<112x128xf32>
    %32 = tpu.iota {dimensions = array<i32: 0>} : vector<112x128xi32>
    %c7_i32 = arith.constant 7 : i32
    %33 = vector.broadcast %c7_i32 : i32 to vector<112x128xi32>
    %34 = arith.andi %32, %33 : vector<112x128xi32>
    %c7_i32_8 = arith.constant 7 : i32
    %35 = vector.broadcast %c7_i32_8 : i32 to vector<112x128xi32>
    %36 = arith.cmpi eq, %34, %35 : vector<112x128xi32>
    %cst_9 = arith.constant 0.000000e+00 : f32
    %cst_10 = arith.constant 1.000000e+00 : f32
    %37 = vector.broadcast %cst_9 : f32 to vector<112x128xf32>
    %38 = vector.broadcast %cst_10 : f32 to vector<112x128xf32>
    %39 = arith.select %36, %37, %38 : vector<112x128xi1>, vector<112x128xf32>
    %40 = arith.mulf %31, %39 : vector<112x128xf32>
    %cst_11 = arith.constant dense<0.000000e+00> : vector<128xf32>
    %41 = vector.multi_reduction <add>, %40, %cst_11 [0] : vector<112x128xf32> to vector<128xf32>
    %42 = vector.shape_cast %41 : vector<128xf32> to vector<1x128xf32>
    %cst_12 = arith.constant 9.800000e+01 : f32
    %43 = vector.broadcast %cst_12 : f32 to vector<1x128xf32>
    %44 = arith.divf %42, %43 : vector<1x128xf32>
    %45 = arith.mulf %40, %40 : vector<112x128xf32>
    %cst_13 = arith.constant dense<0.000000e+00> : vector<128xf32>
    %46 = vector.multi_reduction <add>, %45, %cst_13 [0] : vector<112x128xf32> to vector<128xf32>
    %47 = vector.shape_cast %46 : vector<128xf32> to vector<1x128xf32>
    %cst_14 = arith.constant 9.800000e+01 : f32
    %48 = vector.broadcast %cst_14 : f32 to vector<1x128xf32>
    %49 = arith.divf %47, %48 : vector<1x128xf32>
    %50 = arith.mulf %44, %44 : vector<1x128xf32>
    %51 = arith.subf %49, %50 : vector<1x128xf32>
    %52 = vector.broadcast %44 : vector<1x128xf32> to vector<112x128xf32>
    %53 = arith.subf %31, %52 : vector<112x128xf32>
    %cst_15 = arith.constant 9.99999974E-6 : f32
    %54 = vector.broadcast %cst_15 : f32 to vector<1x128xf32>
    %55 = arith.addf %51, %54 : vector<1x128xf32>
    %56 = math.rsqrt %55 : vector<1x128xf32>
    %57 = vector.broadcast %56 : vector<1x128xf32> to vector<112x128xf32>
    %58 = arith.mulf %53, %57 : vector<112x128xf32>
    %c0_16 = arith.constant 0 : index
    %c0_17 = arith.constant 0 : index
    %59 = vector.load %arg3[%c0_16, %c0_17] : memref<1x128xf32, #tpu.memory_space<vmem>>, vector<1x128xf32>
    %60 = vector.broadcast %59 : vector<1x128xf32> to vector<112x128xf32>
    %61 = arith.mulf %58, %60 : vector<112x128xf32>
    %c0_18 = arith.constant 0 : index
    %c0_19 = arith.constant 0 : index
    %62 = vector.load %arg4[%c0_18, %c0_19] : memref<1x128xf32, #tpu.memory_space<vmem>>, vector<1x128xf32>
    %63 = vector.broadcast %62 : vector<1x128xf32> to vector<112x128xf32>
    %64 = arith.addf %61, %63 : vector<112x128xf32>
    %cst_20 = arith.constant 0.000000e+00 : f32
    %65 = vector.broadcast %cst_20 : f32 to vector<112x128xf32>
    %66 = arith.cmpf oge, %64, %65 : vector<112x128xf32>
    %cst_21 = arith.constant 2.000000e-01 : f32
    %67 = vector.broadcast %cst_21 : f32 to vector<112x128xf32>
    %68 = arith.mulf %67, %64 : vector<112x128xf32>
    %69 = arith.select %66, %64, %68 : vector<112x128xi1>, vector<112x128xf32>
    %70 = vector.shape_cast %69 : vector<112x128xf32> to vector<2x7x8x128xf32>
    %71 = vector.extract_strided_slice %70 {offsets = [0, 0, 0, 0], sizes = [2, 1, 1, 128], strides = [1, 1, 1, 1]} : vector<2x7x8x128xf32> to vector<2x1x1x128xf32>
    %72 = vector.shape_cast %71 : vector<2x1x1x128xf32> to vector<2x128xf32>
    %73 = vector.extract_strided_slice %70 {offsets = [0, 0, 1, 0], sizes = [2, 1, 1, 128], strides = [1, 1, 1, 1]} : vector<2x7x8x128xf32> to vector<2x1x1x128xf32>
    %74 = vector.shape_cast %73 : vector<2x1x1x128xf32> to vector<2x128xf32>
    %75 = vector.extract_strided_slice %70 {offsets = [0, 0, 2, 0], sizes = [2, 1, 1, 128], strides = [1, 1, 1, 1]} : vector<2x7x8x128xf32> to vector<2x1x1x128xf32>
    %76 = vector.shape_cast %75 : vector<2x1x1x128xf32> to vector<2x128xf32>
    %77 = vector.extract_strided_slice %70 {offsets = [0, 1, 0, 0], sizes = [2, 1, 1, 128], strides = [1, 1, 1, 1]} : vector<2x7x8x128xf32> to vector<2x1x1x128xf32>
    %78 = vector.shape_cast %77 : vector<2x1x1x128xf32> to vector<2x128xf32>
    %79 = vector.extract_strided_slice %70 {offsets = [0, 1, 1, 0], sizes = [2, 1, 1, 128], strides = [1, 1, 1, 1]} : vector<2x7x8x128xf32> to vector<2x1x1x128xf32>
    %80 = vector.shape_cast %79 : vector<2x1x1x128xf32> to vector<2x128xf32>
    %81 = vector.extract_strided_slice %70 {offsets = [0, 1, 2, 0], sizes = [2, 1, 1, 128], strides = [1, 1, 1, 1]} : vector<2x7x8x128xf32> to vector<2x1x1x128xf32>
    %82 = vector.shape_cast %81 : vector<2x1x1x128xf32> to vector<2x128xf32>
    %83 = vector.extract_strided_slice %70 {offsets = [0, 2, 0, 0], sizes = [2, 1, 1, 128], strides = [1, 1, 1, 1]} : vector<2x7x8x128xf32> to vector<2x1x1x128xf32>
    %84 = vector.shape_cast %83 : vector<2x1x1x128xf32> to vector<2x128xf32>
    %85 = vector.extract_strided_slice %70 {offsets = [0, 2, 1, 0], sizes = [2, 1, 1, 128], strides = [1, 1, 1, 1]} : vector<2x7x8x128xf32> to vector<2x1x1x128xf32>
    %86 = vector.shape_cast %85 : vector<2x1x1x128xf32> to vector<2x128xf32>
    %87 = vector.extract_strided_slice %70 {offsets = [0, 2, 2, 0], sizes = [2, 1, 1, 128], strides = [1, 1, 1, 1]} : vector<2x7x8x128xf32> to vector<2x1x1x128xf32>
    %88 = vector.shape_cast %87 : vector<2x1x1x128xf32> to vector<2x128xf32>
    %89 = tpu.concatenate %72, %74, %76, %78, %80, %82, %84, %86, %88 in 1 : vector<2x128xf32>, vector<2x128xf32>, vector<2x128xf32>, vector<2x128xf32>, vector<2x128xf32>, vector<2x128xf32>, vector<2x128xf32>, vector<2x128xf32>, vector<2x128xf32> -> vector<2x1152xf32>
    %90 = vector.extract_strided_slice %70 {offsets = [0, 0, 2, 0], sizes = [2, 1, 1, 128], strides = [1, 1, 1, 1]} : vector<2x7x8x128xf32> to vector<2x1x1x128xf32>
    %91 = vector.shape_cast %90 : vector<2x1x1x128xf32> to vector<2x128xf32>
    %92 = vector.extract_strided_slice %70 {offsets = [0, 0, 3, 0], sizes = [2, 1, 1, 128], strides = [1, 1, 1, 1]} : vector<2x7x8x128xf32> to vector<2x1x1x128xf32>
    %93 = vector.shape_cast %92 : vector<2x1x1x128xf32> to vector<2x128xf32>
    %94 = vector.extract_strided_slice %70 {offsets = [0, 0, 4, 0], sizes = [2, 1, 1, 128], strides = [1, 1, 1, 1]} : vector<2x7x8x128xf32> to vector<2x1x1x128xf32>
    %95 = vector.shape_cast %94 : vector<2x1x1x128xf32> to vector<2x128xf32>
    %96 = vector.extract_strided_slice %70 {offsets = [0, 1, 2, 0], sizes = [2, 1, 1, 128], strides = [1, 1, 1, 1]} : vector<2x7x8x128xf32> to vector<2x1x1x128xf32>
    %97 = vector.shape_cast %96 : vector<2x1x1x128xf32> to vector<2x128xf32>
    %98 = vector.extract_strided_slice %70 {offsets = [0, 1, 3, 0], sizes = [2, 1, 1, 128], strides = [1, 1, 1, 1]} : vector<2x7x8x128xf32> to vector<2x1x1x128xf32>
    %99 = vector.shape_cast %98 : vector<2x1x1x128xf32> to vector<2x128xf32>
    %100 = vector.extract_strided_slice %70 {offsets = [0, 1, 4, 0], sizes = [2, 1, 1, 128], strides = [1, 1, 1, 1]} : vector<2x7x8x128xf32> to vector<2x1x1x128xf32>
    %101 = vector.shape_cast %100 : vector<2x1x1x128xf32> to vector<2x128xf32>
    %102 = vector.extract_strided_slice %70 {offsets = [0, 2, 2, 0], sizes = [2, 1, 1, 128], strides = [1, 1, 1, 1]} : vector<2x7x8x128xf32> to vector<2x1x1x128xf32>
    %103 = vector.shape_cast %102 : vector<2x1x1x128xf32> to vector<2x128xf32>
    %104 = vector.extract_strided_slice %70 {offsets = [0, 2, 3, 0], sizes = [2, 1, 1, 128], strides = [1, 1, 1, 1]} : vector<2x7x8x128xf32> to vector<2x1x1x128xf32>
    %105 = vector.shape_cast %104 : vector<2x1x1x128xf32> to vector<2x128xf32>
    %106 = vector.extract_strided_slice %70 {offsets = [0, 2, 4, 0], sizes = [2, 1, 1, 128], strides = [1, 1, 1, 1]} : vector<2x7x8x128xf32> to vector<2x1x1x128xf32>
    %107 = vector.shape_cast %106 : vector<2x1x1x128xf32> to vector<2x128xf32>
    %108 = tpu.concatenate %91, %93, %95, %97, %99, %101, %103, %105, %107 in 1 : vector<2x128xf32>, vector<2x128xf32>, vector<2x128xf32>, vector<2x128xf32>, vector<2x128xf32>, vector<2x128xf32>, vector<2x128xf32>, vector<2x128xf32>, vector<2x128xf32> -> vector<2x1152xf32>
    %109 = vector.extract_strided_slice %70 {offsets = [0, 0, 4, 0], sizes = [2, 1, 1, 128], strides = [1, 1, 1, 1]} : vector<2x7x8x128xf32> to vector<2x1x1x128xf32>
    %110 = vector.shape_cast %109 : vector<2x1x1x128xf32> to vector<2x128xf32>
    %111 = vector.extract_strided_slice %70 {offsets = [0, 0, 5, 0], sizes = [2, 1, 1, 128], strides = [1, 1, 1, 1]} : vector<2x7x8x128xf32> to vector<2x1x1x128xf32>
    %112 = vector.shape_cast %111 : vector<2x1x1x128xf32> to vector<2x128xf32>
    %113 = vector.extract_strided_slice %70 {offsets = [0, 0, 6, 0], sizes = [2, 1, 1, 128], strides = [1, 1, 1, 1]} : vector<2x7x8x128xf32> to vector<2x1x1x128xf32>
    %114 = vector.shape_cast %113 : vector<2x1x1x128xf32> to vector<2x128xf32>
    %115 = vector.extract_strided_slice %70 {offsets = [0, 1, 4, 0], sizes = [2, 1, 1, 128], strides = [1, 1, 1, 1]} : vector<2x7x8x128xf32> to vector<2x1x1x128xf32>
    %116 = vector.shape_cast %115 : vector<2x1x1x128xf32> to vector<2x128xf32>
    %117 = vector.extract_strided_slice %70 {offsets = [0, 1, 5, 0], sizes = [2, 1, 1, 128], strides = [1, 1, 1, 1]} : vector<2x7x8x128xf32> to vector<2x1x1x128xf32>
    %118 = vector.shape_cast %117 : vector<2x1x1x128xf32> to vector<2x128xf32>
    %119 = vector.extract_strided_slice %70 {offsets = [0, 1, 6, 0], sizes = [2, 1, 1, 128], strides = [1, 1, 1, 1]} : vector<2x7x8x128xf32> to vector<2x1x1x128xf32>
    %120 = vector.shape_cast %119 : vector<2x1x1x128xf32> to vector<2x128xf32>
    %121 = vector.extract_strided_slice %70 {offsets = [0, 2, 4, 0], sizes = [2, 1, 1, 128], strides = [1, 1, 1, 1]} : vector<2x7x8x128xf32> to vector<2x1x1x128xf32>
    %122 = vector.shape_cast %121 : vector<2x1x1x128xf32> to vector<2x128xf32>
    %123 = vector.extract_strided_slice %70 {offsets = [0, 2, 5, 0], sizes = [2, 1, 1, 128], strides = [1, 1, 1, 1]} : vector<2x7x8x128xf32> to vector<2x1x1x128xf32>
    %124 = vector.shape_cast %123 : vector<2x1x1x128xf32> to vector<2x128xf32>
    %125 = vector.extract_strided_slice %70 {offsets = [0, 2, 6, 0], sizes = [2, 1, 1, 128], strides = [1, 1, 1, 1]} : vector<2x7x8x128xf32> to vector<2x1x1x128xf32>
    %126 = vector.shape_cast %125 : vector<2x1x1x128xf32> to vector<2x128xf32>
    %127 = tpu.concatenate %110, %112, %114, %116, %118, %120, %122, %124, %126 in 1 : vector<2x128xf32>, vector<2x128xf32>, vector<2x128xf32>, vector<2x128xf32>, vector<2x128xf32>, vector<2x128xf32>, vector<2x128xf32>, vector<2x128xf32>, vector<2x128xf32> -> vector<2x1152xf32>
    %128 = vector.extract_strided_slice %70 {offsets = [0, 2, 0, 0], sizes = [2, 1, 1, 128], strides = [1, 1, 1, 1]} : vector<2x7x8x128xf32> to vector<2x1x1x128xf32>
    %129 = vector.shape_cast %128 : vector<2x1x1x128xf32> to vector<2x128xf32>
    %130 = vector.extract_strided_slice %70 {offsets = [0, 2, 1, 0], sizes = [2, 1, 1, 128], strides = [1, 1, 1, 1]} : vector<2x7x8x128xf32> to vector<2x1x1x128xf32>
    %131 = vector.shape_cast %130 : vector<2x1x1x128xf32> to vector<2x128xf32>
    %132 = vector.extract_strided_slice %70 {offsets = [0, 2, 2, 0], sizes = [2, 1, 1, 128], strides = [1, 1, 1, 1]} : vector<2x7x8x128xf32> to vector<2x1x1x128xf32>
    %133 = vector.shape_cast %132 : vector<2x1x1x128xf32> to vector<2x128xf32>
    %134 = vector.extract_strided_slice %70 {offsets = [0, 3, 0, 0], sizes = [2, 1, 1, 128], strides = [1, 1, 1, 1]} : vector<2x7x8x128xf32> to vector<2x1x1x128xf32>
    %135 = vector.shape_cast %134 : vector<2x1x1x128xf32> to vector<2x128xf32>
    %136 = vector.extract_strided_slice %70 {offsets = [0, 3, 1, 0], sizes = [2, 1, 1, 128], strides = [1, 1, 1, 1]} : vector<2x7x8x128xf32> to vector<2x1x1x128xf32>
    %137 = vector.shape_cast %136 : vector<2x1x1x128xf32> to vector<2x128xf32>
    %138 = vector.extract_strided_slice %70 {offsets = [0, 3, 2, 0], sizes = [2, 1, 1, 128], strides = [1, 1, 1, 1]} : vector<2x7x8x128xf32> to vector<2x1x1x128xf32>
    %139 = vector.shape_cast %138 : vector<2x1x1x128xf32> to vector<2x128xf32>
    %140 = vector.extract_strided_slice %70 {offsets = [0, 4, 0, 0], sizes = [2, 1, 1, 128], strides = [1, 1, 1, 1]} : vector<2x7x8x128xf32> to vector<2x1x1x128xf32>
    %141 = vector.shape_cast %140 : vector<2x1x1x128xf32> to vector<2x128xf32>
    %142 = vector.extract_strided_slice %70 {offsets = [0, 4, 1, 0], sizes = [2, 1, 1, 128], strides = [1, 1, 1, 1]} : vector<2x7x8x128xf32> to vector<2x1x1x128xf32>
    %143 = vector.shape_cast %142 : vector<2x1x1x128xf32> to vector<2x128xf32>
    %144 = vector.extract_strided_slice %70 {offsets = [0, 4, 2, 0], sizes = [2, 1, 1, 128], strides = [1, 1, 1, 1]} : vector<2x7x8x128xf32> to vector<2x1x1x128xf32>
    %145 = vector.shape_cast %144 : vector<2x1x1x128xf32> to vector<2x128xf32>
    %146 = tpu.concatenate %129, %131, %133, %135, %137, %139, %141, %143, %145 in 1 : vector<2x128xf32>, vector<2x128xf32>, vector<2x128xf32>, vector<2x128xf32>, vector<2x128xf32>, vector<2x128xf32>, vector<2x128xf32>, vector<2x128xf32>, vector<2x128xf32> -> vector<2x1152xf32>
    %147 = vector.extract_strided_slice %70 {offsets = [0, 2, 2, 0], sizes = [2, 1, 1, 128], strides = [1, 1, 1, 1]} : vector<2x7x8x128xf32> to vector<2x1x1x128xf32>
    %148 = vector.shape_cast %147 : vector<2x1x1x128xf32> to vector<2x128xf32>
    %149 = vector.extract_strided_slice %70 {offsets = [0, 2, 3, 0], sizes = [2, 1, 1, 128], strides = [1, 1, 1, 1]} : vector<2x7x8x128xf32> to vector<2x1x1x128xf32>
    %150 = vector.shape_cast %149 : vector<2x1x1x128xf32> to vector<2x128xf32>
    %151 = vector.extract_strided_slice %70 {offsets = [0, 2, 4, 0], sizes = [2, 1, 1, 128], strides = [1, 1, 1, 1]} : vector<2x7x8x128xf32> to vector<2x1x1x128xf32>
    %152 = vector.shape_cast %151 : vector<2x1x1x128xf32> to vector<2x128xf32>
    %153 = vector.extract_strided_slice %70 {offsets = [0, 3, 2, 0], sizes = [2, 1, 1, 128], strides = [1, 1, 1, 1]} : vector<2x7x8x128xf32> to vector<2x1x1x128xf32>
    %154 = vector.shape_cast %153 : vector<2x1x1x128xf32> to vector<2x128xf32>
    %155 = vector.extract_strided_slice %70 {offsets = [0, 3, 3, 0], sizes = [2, 1, 1, 128], strides = [1, 1, 1, 1]} : vector<2x7x8x128xf32> to vector<2x1x1x128xf32>
    %156 = vector.shape_cast %155 : vector<2x1x1x128xf32> to vector<2x128xf32>
    %157 = vector.extract_strided_slice %70 {offsets = [0, 3, 4, 0], sizes = [2, 1, 1, 128], strides = [1, 1, 1, 1]} : vector<2x7x8x128xf32> to vector<2x1x1x128xf32>
    %158 = vector.shape_cast %157 : vector<2x1x1x128xf32> to vector<2x128xf32>
    %159 = vector.extract_strided_slice %70 {offsets = [0, 4, 2, 0], sizes = [2, 1, 1, 128], strides = [1, 1, 1, 1]} : vector<2x7x8x128xf32> to vector<2x1x1x128xf32>
    %160 = vector.shape_cast %159 : vector<2x1x1x128xf32> to vector<2x128xf32>
    %161 = vector.extract_strided_slice %70 {offsets = [0, 4, 3, 0], sizes = [2, 1, 1, 128], strides = [1, 1, 1, 1]} : vector<2x7x8x128xf32> to vector<2x1x1x128xf32>
    %162 = vector.shape_cast %161 : vector<2x1x1x128xf32> to vector<2x128xf32>
    %163 = vector.extract_strided_slice %70 {offsets = [0, 4, 4, 0], sizes = [2, 1, 1, 128], strides = [1, 1, 1, 1]} : vector<2x7x8x128xf32> to vector<2x1x1x128xf32>
    %164 = vector.shape_cast %163 : vector<2x1x1x128xf32> to vector<2x128xf32>
    %165 = tpu.concatenate %148, %150, %152, %154, %156, %158, %160, %162, %164 in 1 : vector<2x128xf32>, vector<2x128xf32>, vector<2x128xf32>, vector<2x128xf32>, vector<2x128xf32>, vector<2x128xf32>, vector<2x128xf32>, vector<2x128xf32>, vector<2x128xf32> -> vector<2x1152xf32>
    %166 = vector.extract_strided_slice %70 {offsets = [0, 2, 4, 0], sizes = [2, 1, 1, 128], strides = [1, 1, 1, 1]} : vector<2x7x8x128xf32> to vector<2x1x1x128xf32>
    %167 = vector.shape_cast %166 : vector<2x1x1x128xf32> to vector<2x128xf32>
    %168 = vector.extract_strided_slice %70 {offsets = [0, 2, 5, 0], sizes = [2, 1, 1, 128], strides = [1, 1, 1, 1]} : vector<2x7x8x128xf32> to vector<2x1x1x128xf32>
    %169 = vector.shape_cast %168 : vector<2x1x1x128xf32> to vector<2x128xf32>
    %170 = vector.extract_strided_slice %70 {offsets = [0, 2, 6, 0], sizes = [2, 1, 1, 128], strides = [1, 1, 1, 1]} : vector<2x7x8x128xf32> to vector<2x1x1x128xf32>
    %171 = vector.shape_cast %170 : vector<2x1x1x128xf32> to vector<2x128xf32>
    %172 = vector.extract_strided_slice %70 {offsets = [0, 3, 4, 0], sizes = [2, 1, 1, 128], strides = [1, 1, 1, 1]} : vector<2x7x8x128xf32> to vector<2x1x1x128xf32>
    %173 = vector.shape_cast %172 : vector<2x1x1x128xf32> to vector<2x128xf32>
    %174 = vector.extract_strided_slice %70 {offsets = [0, 3, 5, 0], sizes = [2, 1, 1, 128], strides = [1, 1, 1, 1]} : vector<2x7x8x128xf32> to vector<2x1x1x128xf32>
    %175 = vector.shape_cast %174 : vector<2x1x1x128xf32> to vector<2x128xf32>
    %176 = vector.extract_strided_slice %70 {offsets = [0, 3, 6, 0], sizes = [2, 1, 1, 128], strides = [1, 1, 1, 1]} : vector<2x7x8x128xf32> to vector<2x1x1x128xf32>
    %177 = vector.shape_cast %176 : vector<2x1x1x128xf32> to vector<2x128xf32>
    %178 = vector.extract_strided_slice %70 {offsets = [0, 4, 4, 0], sizes = [2, 1, 1, 128], strides = [1, 1, 1, 1]} : vector<2x7x8x128xf32> to vector<2x1x1x128xf32>
    %179 = vector.shape_cast %178 : vector<2x1x1x128xf32> to vector<2x128xf32>
    %180 = vector.extract_strided_slice %70 {offsets = [0, 4, 5, 0], sizes = [2, 1, 1, 128], strides = [1, 1, 1, 1]} : vector<2x7x8x128xf32> to vector<2x1x1x128xf32>
    %181 = vector.shape_cast %180 : vector<2x1x1x128xf32> to vector<2x128xf32>
    %182 = vector.extract_strided_slice %70 {offsets = [0, 4, 6, 0], sizes = [2, 1, 1, 128], strides = [1, 1, 1, 1]} : vector<2x7x8x128xf32> to vector<2x1x1x128xf32>
    %183 = vector.shape_cast %182 : vector<2x1x1x128xf32> to vector<2x128xf32>
    %184 = tpu.concatenate %167, %169, %171, %173, %175, %177, %179, %181, %183 in 1 : vector<2x128xf32>, vector<2x128xf32>, vector<2x128xf32>, vector<2x128xf32>, vector<2x128xf32>, vector<2x128xf32>, vector<2x128xf32>, vector<2x128xf32>, vector<2x128xf32> -> vector<2x1152xf32>
    %185 = vector.extract_strided_slice %70 {offsets = [0, 4, 0, 0], sizes = [2, 1, 1, 128], strides = [1, 1, 1, 1]} : vector<2x7x8x128xf32> to vector<2x1x1x128xf32>
    %186 = vector.shape_cast %185 : vector<2x1x1x128xf32> to vector<2x128xf32>
    %187 = vector.extract_strided_slice %70 {offsets = [0, 4, 1, 0], sizes = [2, 1, 1, 128], strides = [1, 1, 1, 1]} : vector<2x7x8x128xf32> to vector<2x1x1x128xf32>
    %188 = vector.shape_cast %187 : vector<2x1x1x128xf32> to vector<2x128xf32>
    %189 = vector.extract_strided_slice %70 {offsets = [0, 4, 2, 0], sizes = [2, 1, 1, 128], strides = [1, 1, 1, 1]} : vector<2x7x8x128xf32> to vector<2x1x1x128xf32>
    %190 = vector.shape_cast %189 : vector<2x1x1x128xf32> to vector<2x128xf32>
    %191 = vector.extract_strided_slice %70 {offsets = [0, 5, 0, 0], sizes = [2, 1, 1, 128], strides = [1, 1, 1, 1]} : vector<2x7x8x128xf32> to vector<2x1x1x128xf32>
    %192 = vector.shape_cast %191 : vector<2x1x1x128xf32> to vector<2x128xf32>
    %193 = vector.extract_strided_slice %70 {offsets = [0, 5, 1, 0], sizes = [2, 1, 1, 128], strides = [1, 1, 1, 1]} : vector<2x7x8x128xf32> to vector<2x1x1x128xf32>
    %194 = vector.shape_cast %193 : vector<2x1x1x128xf32> to vector<2x128xf32>
    %195 = vector.extract_strided_slice %70 {offsets = [0, 5, 2, 0], sizes = [2, 1, 1, 128], strides = [1, 1, 1, 1]} : vector<2x7x8x128xf32> to vector<2x1x1x128xf32>
    %196 = vector.shape_cast %195 : vector<2x1x1x128xf32> to vector<2x128xf32>
    %197 = vector.extract_strided_slice %70 {offsets = [0, 6, 0, 0], sizes = [2, 1, 1, 128], strides = [1, 1, 1, 1]} : vector<2x7x8x128xf32> to vector<2x1x1x128xf32>
    %198 = vector.shape_cast %197 : vector<2x1x1x128xf32> to vector<2x128xf32>
    %199 = vector.extract_strided_slice %70 {offsets = [0, 6, 1, 0], sizes = [2, 1, 1, 128], strides = [1, 1, 1, 1]} : vector<2x7x8x128xf32> to vector<2x1x1x128xf32>
    %200 = vector.shape_cast %199 : vector<2x1x1x128xf32> to vector<2x128xf32>
    %201 = vector.extract_strided_slice %70 {offsets = [0, 6, 2, 0], sizes = [2, 1, 1, 128], strides = [1, 1, 1, 1]} : vector<2x7x8x128xf32> to vector<2x1x1x128xf32>
    %202 = vector.shape_cast %201 : vector<2x1x1x128xf32> to vector<2x128xf32>
    %203 = tpu.concatenate %186, %188, %190, %192, %194, %196, %198, %200, %202 in 1 : vector<2x128xf32>, vector<2x128xf32>, vector<2x128xf32>, vector<2x128xf32>, vector<2x128xf32>, vector<2x128xf32>, vector<2x128xf32>, vector<2x128xf32>, vector<2x128xf32> -> vector<2x1152xf32>
    %204 = vector.extract_strided_slice %70 {offsets = [0, 4, 2, 0], sizes = [2, 1, 1, 128], strides = [1, 1, 1, 1]} : vector<2x7x8x128xf32> to vector<2x1x1x128xf32>
    %205 = vector.shape_cast %204 : vector<2x1x1x128xf32> to vector<2x128xf32>
    %206 = vector.extract_strided_slice %70 {offsets = [0, 4, 3, 0], sizes = [2, 1, 1, 128], strides = [1, 1, 1, 1]} : vector<2x7x8x128xf32> to vector<2x1x1x128xf32>
    %207 = vector.shape_cast %206 : vector<2x1x1x128xf32> to vector<2x128xf32>
    %208 = vector.extract_strided_slice %70 {offsets = [0, 4, 4, 0], sizes = [2, 1, 1, 128], strides = [1, 1, 1, 1]} : vector<2x7x8x128xf32> to vector<2x1x1x128xf32>
    %209 = vector.shape_cast %208 : vector<2x1x1x128xf32> to vector<2x128xf32>
    %210 = vector.extract_strided_slice %70 {offsets = [0, 5, 2, 0], sizes = [2, 1, 1, 128], strides = [1, 1, 1, 1]} : vector<2x7x8x128xf32> to vector<2x1x1x128xf32>
    %211 = vector.shape_cast %210 : vector<2x1x1x128xf32> to vector<2x128xf32>
    %212 = vector.extract_strided_slice %70 {offsets = [0, 5, 3, 0], sizes = [2, 1, 1, 128], strides = [1, 1, 1, 1]} : vector<2x7x8x128xf32> to vector<2x1x1x128xf32>
    %213 = vector.shape_cast %212 : vector<2x1x1x128xf32> to vector<2x128xf32>
    %214 = vector.extract_strided_slice %70 {offsets = [0, 5, 4, 0], sizes = [2, 1, 1, 128], strides = [1, 1, 1, 1]} : vector<2x7x8x128xf32> to vector<2x1x1x128xf32>
    %215 = vector.shape_cast %214 : vector<2x1x1x128xf32> to vector<2x128xf32>
    %216 = vector.extract_strided_slice %70 {offsets = [0, 6, 2, 0], sizes = [2, 1, 1, 128], strides = [1, 1, 1, 1]} : vector<2x7x8x128xf32> to vector<2x1x1x128xf32>
    %217 = vector.shape_cast %216 : vector<2x1x1x128xf32> to vector<2x128xf32>
    %218 = vector.extract_strided_slice %70 {offsets = [0, 6, 3, 0], sizes = [2, 1, 1, 128], strides = [1, 1, 1, 1]} : vector<2x7x8x128xf32> to vector<2x1x1x128xf32>
    %219 = vector.shape_cast %218 : vector<2x1x1x128xf32> to vector<2x128xf32>
    %220 = vector.extract_strided_slice %70 {offsets = [0, 6, 4, 0], sizes = [2, 1, 1, 128], strides = [1, 1, 1, 1]} : vector<2x7x8x128xf32> to vector<2x1x1x128xf32>
    %221 = vector.shape_cast %220 : vector<2x1x1x128xf32> to vector<2x128xf32>
    %222 = tpu.concatenate %205, %207, %209, %211, %213, %215, %217, %219, %221 in 1 : vector<2x128xf32>, vector<2x128xf32>, vector<2x128xf32>, vector<2x128xf32>, vector<2x128xf32>, vector<2x128xf32>, vector<2x128xf32>, vector<2x128xf32>, vector<2x128xf32> -> vector<2x1152xf32>
    %223 = vector.extract_strided_slice %70 {offsets = [0, 4, 4, 0], sizes = [2, 1, 1, 128], strides = [1, 1, 1, 1]} : vector<2x7x8x128xf32> to vector<2x1x1x128xf32>
    %224 = vector.shape_cast %223 : vector<2x1x1x128xf32> to vector<2x128xf32>
    %225 = vector.extract_strided_slice %70 {offsets = [0, 4, 5, 0], sizes = [2, 1, 1, 128], strides = [1, 1, 1, 1]} : vector<2x7x8x128xf32> to vector<2x1x1x128xf32>
    %226 = vector.shape_cast %225 : vector<2x1x1x128xf32> to vector<2x128xf32>
    %227 = vector.extract_strided_slice %70 {offsets = [0, 4, 6, 0], sizes = [2, 1, 1, 128], strides = [1, 1, 1, 1]} : vector<2x7x8x128xf32> to vector<2x1x1x128xf32>
    %228 = vector.shape_cast %227 : vector<2x1x1x128xf32> to vector<2x128xf32>
    %229 = vector.extract_strided_slice %70 {offsets = [0, 5, 4, 0], sizes = [2, 1, 1, 128], strides = [1, 1, 1, 1]} : vector<2x7x8x128xf32> to vector<2x1x1x128xf32>
    %230 = vector.shape_cast %229 : vector<2x1x1x128xf32> to vector<2x128xf32>
    %231 = vector.extract_strided_slice %70 {offsets = [0, 5, 5, 0], sizes = [2, 1, 1, 128], strides = [1, 1, 1, 1]} : vector<2x7x8x128xf32> to vector<2x1x1x128xf32>
    %232 = vector.shape_cast %231 : vector<2x1x1x128xf32> to vector<2x128xf32>
    %233 = vector.extract_strided_slice %70 {offsets = [0, 5, 6, 0], sizes = [2, 1, 1, 128], strides = [1, 1, 1, 1]} : vector<2x7x8x128xf32> to vector<2x1x1x128xf32>
    %234 = vector.shape_cast %233 : vector<2x1x1x128xf32> to vector<2x128xf32>
    %235 = vector.extract_strided_slice %70 {offsets = [0, 6, 4, 0], sizes = [2, 1, 1, 128], strides = [1, 1, 1, 1]} : vector<2x7x8x128xf32> to vector<2x1x1x128xf32>
    %236 = vector.shape_cast %235 : vector<2x1x1x128xf32> to vector<2x128xf32>
    %237 = vector.extract_strided_slice %70 {offsets = [0, 6, 5, 0], sizes = [2, 1, 1, 128], strides = [1, 1, 1, 1]} : vector<2x7x8x128xf32> to vector<2x1x1x128xf32>
    %238 = vector.shape_cast %237 : vector<2x1x1x128xf32> to vector<2x128xf32>
    %239 = vector.extract_strided_slice %70 {offsets = [0, 6, 6, 0], sizes = [2, 1, 1, 128], strides = [1, 1, 1, 1]} : vector<2x7x8x128xf32> to vector<2x1x1x128xf32>
    %240 = vector.shape_cast %239 : vector<2x1x1x128xf32> to vector<2x128xf32>
    %241 = tpu.concatenate %224, %226, %228, %230, %232, %234, %236, %238, %240 in 1 : vector<2x128xf32>, vector<2x128xf32>, vector<2x128xf32>, vector<2x128xf32>, vector<2x128xf32>, vector<2x128xf32>, vector<2x128xf32>, vector<2x128xf32>, vector<2x128xf32> -> vector<2x1152xf32>
    %242 = tpu.concatenate %89, %108, %127, %146, %165, %184, %203, %222, %241 in 0 : vector<2x1152xf32>, vector<2x1152xf32>, vector<2x1152xf32>, vector<2x1152xf32>, vector<2x1152xf32>, vector<2x1152xf32>, vector<2x1152xf32>, vector<2x1152xf32>, vector<2x1152xf32> -> vector<18x1152xf32>
    %cst_22 = arith.constant 0.000000e+00 : f32
    %243 = vector.broadcast %cst_22 : f32 to vector<6x1152xf32>
    %244 = tpu.concatenate %242, %243 in 0 : vector<18x1152xf32>, vector<6x1152xf32> -> vector<24x1152xf32>
    %245 = arith.truncf %244 : vector<24x1152xf32> to vector<24x1152xbf16>
    %c0_23 = arith.constant 0 : index
    %c0_24 = arith.constant 0 : index
    %246 = vector.load %arg5[%c0_23, %c0_24] : memref<1152x256xbf16, #tpu.memory_space<vmem>>, vector<1152x256xbf16>
    %cst_25 = arith.constant dense<0.000000e+00> : vector<24x256xf32>
    %247 = tpu.matmul %245, %246, %cst_25 {dimension_numbers = #tpu.dot_dimension_numbers<[1], [0], [0], [1], [0, 0, 1, 1], [], []>} : vector<24x1152xbf16>, vector<1152x256xbf16>, vector<24x256xf32> -> vector<24x256xf32>
    %cst_26 = arith.constant dense<0.000000e+00> : vector<256xf32>
    %248 = vector.multi_reduction <add>, %247, %cst_26 [0] : vector<24x256xf32> to vector<256xf32>
    %249 = vector.shape_cast %248 : vector<256xf32> to vector<1x256xf32>
    %cst_27 = arith.constant 1.800000e+01 : f32
    %250 = vector.broadcast %cst_27 : f32 to vector<1x256xf32>
    %251 = arith.divf %249, %250 : vector<1x256xf32>
    %252 = arith.mulf %247, %247 : vector<24x256xf32>
    %cst_28 = arith.constant dense<0.000000e+00> : vector<256xf32>
    %253 = vector.multi_reduction <add>, %252, %cst_28 [0] : vector<24x256xf32> to vector<256xf32>
    %254 = vector.shape_cast %253 : vector<256xf32> to vector<1x256xf32>
    %cst_29 = arith.constant 1.800000e+01 : f32
    %255 = vector.broadcast %cst_29 : f32 to vector<1x256xf32>
    %256 = arith.divf %254, %255 : vector<1x256xf32>
    %257 = arith.mulf %251, %251 : vector<1x256xf32>
    %258 = arith.subf %256, %257 : vector<1x256xf32>
    %259 = vector.broadcast %251 : vector<1x256xf32> to vector<24x256xf32>
    %260 = arith.subf %247, %259 : vector<24x256xf32>
    %cst_30 = arith.constant 9.99999974E-6 : f32
    %261 = vector.broadcast %cst_30 : f32 to vector<1x256xf32>
    %262 = arith.addf %258, %261 : vector<1x256xf32>
    %263 = math.rsqrt %262 : vector<1x256xf32>
    %264 = vector.broadcast %263 : vector<1x256xf32> to vector<24x256xf32>
    %265 = arith.mulf %260, %264 : vector<24x256xf32>
    %c0_31 = arith.constant 0 : index
    %c0_32 = arith.constant 0 : index
    %266 = vector.load %arg6[%c0_31, %c0_32] : memref<1x256xf32, #tpu.memory_space<vmem>>, vector<1x256xf32>
    %267 = vector.broadcast %266 : vector<1x256xf32> to vector<24x256xf32>
    %268 = arith.mulf %265, %267 : vector<24x256xf32>
    %c0_33 = arith.constant 0 : index
    %c0_34 = arith.constant 0 : index
    %269 = vector.load %arg7[%c0_33, %c0_34] : memref<1x256xf32, #tpu.memory_space<vmem>>, vector<1x256xf32>
    %270 = vector.broadcast %269 : vector<1x256xf32> to vector<24x256xf32>
    %271 = arith.addf %268, %270 : vector<24x256xf32>
    %cst_35 = arith.constant 0.000000e+00 : f32
    %272 = vector.broadcast %cst_35 : f32 to vector<24x256xf32>
    %273 = arith.cmpf oge, %271, %272 : vector<24x256xf32>
    %cst_36 = arith.constant 2.000000e-01 : f32
    %274 = vector.broadcast %cst_36 : f32 to vector<24x256xf32>
    %275 = arith.mulf %274, %271 : vector<24x256xf32>
    %276 = arith.select %273, %271, %275 : vector<24x256xi1>, vector<24x256xf32>
    %277 = vector.extract_strided_slice %276 {offsets = [0, 0], sizes = [2, 256], strides = [1, 1]} : vector<24x256xf32> to vector<2x256xf32>
    %278 = vector.extract_strided_slice %276 {offsets = [2, 0], sizes = [2, 256], strides = [1, 1]} : vector<24x256xf32> to vector<2x256xf32>
    %279 = vector.extract_strided_slice %276 {offsets = [4, 0], sizes = [2, 256], strides = [1, 1]} : vector<24x256xf32> to vector<2x256xf32>
    %280 = vector.extract_strided_slice %276 {offsets = [6, 0], sizes = [2, 256], strides = [1, 1]} : vector<24x256xf32> to vector<2x256xf32>
    %281 = vector.extract_strided_slice %276 {offsets = [8, 0], sizes = [2, 256], strides = [1, 1]} : vector<24x256xf32> to vector<2x256xf32>
    %282 = vector.extract_strided_slice %276 {offsets = [10, 0], sizes = [2, 256], strides = [1, 1]} : vector<24x256xf32> to vector<2x256xf32>
    %283 = vector.extract_strided_slice %276 {offsets = [12, 0], sizes = [2, 256], strides = [1, 1]} : vector<24x256xf32> to vector<2x256xf32>
    %284 = vector.extract_strided_slice %276 {offsets = [14, 0], sizes = [2, 256], strides = [1, 1]} : vector<24x256xf32> to vector<2x256xf32>
    %285 = vector.extract_strided_slice %276 {offsets = [16, 0], sizes = [2, 256], strides = [1, 1]} : vector<24x256xf32> to vector<2x256xf32>
    %286 = tpu.concatenate %277, %278, %279, %280, %281, %282, %283, %284, %285 in 1 : vector<2x256xf32>, vector<2x256xf32>, vector<2x256xf32>, vector<2x256xf32>, vector<2x256xf32>, vector<2x256xf32>, vector<2x256xf32>, vector<2x256xf32>, vector<2x256xf32> -> vector<2x2304xf32>
    %cst_37 = arith.constant 0.000000e+00 : f32
    %287 = vector.broadcast %cst_37 : f32 to vector<6x2304xf32>
    %288 = tpu.concatenate %286, %287 in 0 : vector<2x2304xf32>, vector<6x2304xf32> -> vector<8x2304xf32>
    %289 = arith.truncf %288 : vector<8x2304xf32> to vector<8x2304xbf16>
    %c0_38 = arith.constant 0 : index
    %c0_39 = arith.constant 0 : index
    %290 = vector.load %arg8[%c0_38, %c0_39] : memref<2304x128xbf16, #tpu.memory_space<vmem>>, vector<2304x128xbf16>
    %cst_40 = arith.constant dense<0.000000e+00> : vector<8x128xf32>
    %291 = tpu.matmul %289, %290, %cst_40 {dimension_numbers = #tpu.dot_dimension_numbers<[1], [0], [0], [1], [0, 0, 1, 1], [], []>} : vector<8x2304xbf16>, vector<2304x128xbf16>, vector<8x128xf32> -> vector<8x128xf32>
    %c0_41 = arith.constant 0 : index
    %c0_42 = arith.constant 0 : index
    %292 = vector.load %arg9[%c0_41, %c0_42] : memref<1x128xf32, #tpu.memory_space<vmem>>, vector<1x128xf32>
    %293 = vector.broadcast %292 : vector<1x128xf32> to vector<8x128xf32>
    %294 = arith.addf %291, %293 : vector<8x128xf32>
    %c0_43 = arith.constant 0 : index
    %c0_44 = arith.constant 0 : index
    %295 = vector.load %arg10[%c0_43, %c0_44] : memref<8x128xf32, #tpu.memory_space<vmem>>, vector<8x128xf32>
    tpu.vector_store %arg10[%c0_43, %c0_44], %294 {strides = array<i32>} : memref<8x128xf32, #tpu.memory_space<vmem>>, vector<8x128xf32>,
    return
  }
}

</mosaic_0001>

<llo_original>
// kernel: cnn_forward.1
$region0: #{cnn_forward.1}
  #allocation0 [shape = 'u32[]', space=smem, size = 0x4, offset = 0x4, fixed_abs, tag = 'smem constant byte address 0x4 - core index']
  #allocation1 [shape = 'u32[144,128]{1,0:T(1,128)}', space=vmem, size = 0x12000, scoped, tag = 'internal scratch']
  %s0 = inlined_call_operand.vmem [shape: bf16[1024,10], index: 0, kind: input, shape index: {}]
  %s1 = inlined_call_operand.vmem [shape: bf16[10,64], index: 1, kind: input, shape index: {}]
  %s2 = inlined_call_operand.vmem [shape: bf16[576,128], index: 2, kind: input, shape index: {}]
  %s3 = inlined_call_operand.vmem [shape: f32[1,128], index: 3, kind: input, shape index: {}]
  %s4 = inlined_call_operand.vmem [shape: f32[1,128], index: 4, kind: input, shape index: {}]
  %s5 = inlined_call_operand.vmem [shape: bf16[1152,256], index: 5, kind: input, shape index: {}]
  %s6 = inlined_call_operand.vmem [shape: f32[1,256], index: 6, kind: input, shape index: {}]
  %s7 = inlined_call_operand.vmem [shape: f32[1,256], index: 7, kind: input, shape index: {}]
  %s8 = inlined_call_operand.vmem [shape: bf16[2304,128], index: 8, kind: input, shape index: {}]
  %s9 = inlined_call_operand.vmem [shape: f32[1,128], index: 9, kind: input, shape index: {}]
  %s10 = inlined_call_operand.vmem [shape: f32[8,128], index: 10, kind: output, shape index: {}]
  %s11 = sld [smem:[#allocation0]]
  $region50: #{cnn_forward.1} parent=0
    _
  %s13 = ssub.s32 1, %s11
  %s14 = scalar_select 0, %s13, %s11
  // Predicated region
  $region2: #{cnn_forward.1} parent=0 // pred_check
    _
  $region3: #{cnn_forward.1} parent=0 // pred_check_branch
    %16 = sbr.rel (0) target = $region5
  $region4: #{cnn_forward.1} parent=0 // pred_region
    _
  $region5: #{cnn_forward.1} parent=0 // pred_fallthru
    _
  // Predicated region
  $region6: #{cnn_forward.1} parent=0 // pred_check
    _
  $region7: #{cnn_forward.1} parent=0 // pred_check_branch
    %18 = sbr.rel (0) target = $region9
  $region8: #{cnn_forward.1} parent=0 // pred_region
    _
  $region9: #{cnn_forward.1} parent=0 // pred_fallthru
    _
  // Predicated region
  $region10: #{cnn_forward.1} parent=0 // pred_check
    _
  $region11: #{cnn_forward.1} parent=0 // pred_check_branch
    %20 = sbr.rel (0) target = $region13
  $region12: #{cnn_forward.1} parent=0 // pred_region
    _
  $region13: #{cnn_forward.1} parent=0 // pred_fallthru
    _
  // Predicated region
  $region14: #{cnn_forward.1} parent=0 // pred_check
    _
  $region15: #{cnn_forward.1} parent=0 // pred_check_branch
    %22 = sbr.rel (0) target = $region17
  $region16: #{cnn_forward.1} parent=0 // pred_region
    _
  $region17: #{cnn_forward.1} parent=0 // pred_fallthru
    _
  // Predicated region
  $region18: #{cnn_forward.1} parent=0 // pred_check
    _
  $region19: #{cnn_forward.1} parent=0 // pred_check_branch
    %24 = sbr.rel (0) target = $region21
  $region20: #{cnn_forward.1} parent=0 // pred_region
    _
  $region21: #{cnn_forward.1} parent=0 // pred_fallthru
    _
  // Predicated region
  $region22: #{cnn_forward.1} parent=0 // pred_check
    _
  $region23: #{cnn_forward.1} parent=0 // pred_check_branch
    %26 = sbr.rel (0) target = $region25
  $region24: #{cnn_forward.1} parent=0 // pred_region
    _
  $region25: #{cnn_forward.1} parent=0 // pred_fallthru
    _
  // Predicated region
  $region26: #{cnn_forward.1} parent=0 // pred_check
    _
  $region27: #{cnn_forward.1} parent=0 // pred_check_branch
    %28 = sbr.rel (0) target = $region29
  $region28: #{cnn_forward.1} parent=0 // pred_region
    _
  $region29: #{cnn_forward.1} parent=0 // pred_fallthru
    _
  // Predicated region
  $region30: #{cnn_forward.1} parent=0 // pred_check
    _
  $region31: #{cnn_forward.1} parent=0 // pred_check_branch
    %30 = sbr.rel (0) target = $region33
  $region32: #{cnn_forward.1} parent=0 // pred_region
    _
  $region33: #{cnn_forward.1} parent=0 // pred_fallthru
    _
  // Predicated region
  $region34: #{cnn_forward.1} parent=0 // pred_check
    _
  $region35: #{cnn_forward.1} parent=0 // pred_check_branch
    %32 = sbr.rel (0) target = $region37
  $region36: #{cnn_forward.1} parent=0 // pred_region
    _
  $region37: #{cnn_forward.1} parent=0 // pred_fallthru
    _
  // Predicated region
  $region38: #{cnn_forward.1} parent=0 // pred_check
    _
  $region39: #{cnn_forward.1} parent=0 // pred_check_branch
    %34 = sbr.rel (0) target = $region41
  $region40: #{cnn_forward.1} parent=0 // pred_region
    _
  $region41: #{cnn_forward.1} parent=0 // pred_fallthru
    _
  %v36 = vld [vmem:[%s0] sm:$0xf]
  %v37 = vld [vmem:[%s0 + $0x4] sm:$0xf]
  %v38 = vld [vmem:[%s0 + $0x8] sm:$0xf]
  %v39 = vld [vmem:[%s0 + $0xc] sm:$0xf]
  %v40 = vld [vmem:[%s0 + $0x10] sm:$0xf]
  %v41 = vld [vmem:[%s0 + $0x14] sm:$0xf]
  %v42 = vld [vmem:[%s0 + $0x18] sm:$0xf]
  %v43 = vld [vmem:[%s0 + $0x1c] sm:$0xf]
  %v44 = vld [vmem:[%s0 + $0x20] sm:$0xf]
  %v45 = vld [vmem:[%s0 + $0x24] sm:$0xf]
  %v46 = vld [vmem:[%s0 + $0x28] sm:$0xf]
  %v47 = vld [vmem:[%s0 + $0x2c] sm:$0xf]
  %v48 = vld [vmem:[%s0 + $0x30] sm:$0xf]
  %v49 = vld [vmem:[%s0 + $0x34] sm:$0xf]
  %v50 = vld [vmem:[%s0 + $0x38] sm:$0xf]
  %v51 = vld [vmem:[%s0 + $0x3c] sm:$0xf]
  %v52 = vld [vmem:[%s0 + $0x40] sm:$0xf]
  %v53 = vld [vmem:[%s0 + $0x44] sm:$0xf]
  %v54 = vld [vmem:[%s0 + $0x48] sm:$0xf]
  %v55 = vld [vmem:[%s0 + $0x4c] sm:$0xf]
  %v56 = vld [vmem:[%s0 + $0x50] sm:$0xf]
  %v57 = vld [vmem:[%s0 + $0x54] sm:$0xf]
  %v58 = vld [vmem:[%s0 + $0x58] sm:$0xf]
  %v59 = vld [vmem:[%s0 + $0x5c] sm:$0xf]
  %v60 = vld [vmem:[%s0 + $0x60] sm:$0xf]
  %v61 = vld [vmem:[%s0 + $0x64] sm:$0xf]
  %v62 = vld [vmem:[%s0 + $0x68] sm:$0xf]
  %v63 = vld [vmem:[%s0 + $0x6c] sm:$0xf]
  %v64 = vld [vmem:[%s0 + $0x70] sm:$0xf]
  %v65 = vld [vmem:[%s0 + $0x74] sm:$0xf]
  %v66 = vld [vmem:[%s0 + $0x78] sm:$0xf]
  %v67 = vld [vmem:[%s0 + $0x7c] sm:$0xf]
  %v68 = vld [vmem:[%s0 + $0x80] sm:$0xf]
  %v69 = vld [vmem:[%s0 + $0x84] sm:$0xf]
  %v70 = vld [vmem:[%s0 + $0x88] sm:$0xf]
  %v71 = vld [vmem:[%s0 + $0x8c] sm:$0xf]
  %v72 = vld [vmem:[%s0 + $0x90] sm:$0xf]
  %v73 = vld [vmem:[%s0 + $0x94] sm:$0xf]
  %v74 = vld [vmem:[%s0 + $0x98] sm:$0xf]
  %v75 = vld [vmem:[%s0 + $0x9c] sm:$0xf]
  %v76 = vld [vmem:[%s0 + $0xa0] sm:$0xf]
  %v77 = vld [vmem:[%s0 + $0xa4] sm:$0xf]
  %v78 = vld [vmem:[%s0 + $0xa8] sm:$0xf]
  %v79 = vld [vmem:[%s0 + $0xac] sm:$0xf]
  %v80 = vld [vmem:[%s0 + $0xb0] sm:$0xf]
  %v81 = vld [vmem:[%s0 + $0xb4] sm:$0xf]
  %v82 = vld [vmem:[%s0 + $0xb8] sm:$0xf]
  %v83 = vld [vmem:[%s0 + $0xbc] sm:$0xf]
  %v84 = vld [vmem:[%s0 + $0xc0] sm:$0xf]
  %v85 = vld [vmem:[%s0 + $0xc4] sm:$0xf]
  %v86 = vld [vmem:[%s0 + $0xc8] sm:$0xf]
  %v87 = vld [vmem:[%s0 + $0xcc] sm:$0xf]
  %v88 = vld [vmem:[%s0 + $0xd0] sm:$0xf]
  %v89 = vld [vmem:[%s0 + $0xd4] sm:$0xf]
  %v90 = vld [vmem:[%s0 + $0xd8] sm:$0xf]
  %v91 = vld [vmem:[%s0 + $0xdc] sm:$0xf]
  %v92 = vld [vmem:[%s0 + $0xe0] sm:$0xf]
  %v93 = vld [vmem:[%s0 + $0xe4] sm:$0xf]
  %v94 = vld [vmem:[%s0 + $0xe8] sm:$0xf]
  %v95 = vld [vmem:[%s0 + $0xec] sm:$0xf]
  %v96 = vld [vmem:[%s0 + $0xf0] sm:$0xf]
  %v97 = vld [vmem:[%s0 + $0xf4] sm:$0xf]
  %v98 = vld [vmem:[%s0 + $0xf8] sm:$0xf]
  %v99 = vld [vmem:[%s0 + $0xfc] sm:$0xf]
  %v100 = vld [vmem:[%s0 + $0x100] sm:$0xf]
  %v101 = vld [vmem:[%s0 + $0x104] sm:$0xf]
  %v102 = vld [vmem:[%s0 + $0x108] sm:$0xf]
  %v103 = vld [vmem:[%s0 + $0x10c] sm:$0xf]
  %v104 = vld [vmem:[%s0 + $0x110] sm:$0xf]
  %v105 = vld [vmem:[%s0 + $0x114] sm:$0xf]
  %v106 = vld [vmem:[%s0 + $0x118] sm:$0xf]
  %v107 = vld [vmem:[%s0 + $0x11c] sm:$0xf]
  %v108 = vld [vmem:[%s0 + $0x120] sm:$0xf]
  %v109 = vld [vmem:[%s0 + $0x124] sm:$0xf]
  %v110 = vld [vmem:[%s0 + $0x128] sm:$0xf]
  %v111 = vld [vmem:[%s0 + $0x12c] sm:$0xf]
  %v112 = vld [vmem:[%s0 + $0x130] sm:$0xf]
  %v113 = vld [vmem:[%s0 + $0x134] sm:$0xf]
  %v114 = vld [vmem:[%s0 + $0x138] sm:$0xf]
  %v115 = vld [vmem:[%s0 + $0x13c] sm:$0xf]
  %v116 = vld [vmem:[%s0 + $0x140] sm:$0xf]
  %v117 = vld [vmem:[%s0 + $0x144] sm:$0xf]
  %v118 = vld [vmem:[%s0 + $0x148] sm:$0xf]
  %v119 = vld [vmem:[%s0 + $0x14c] sm:$0xf]
  %v120 = vld [vmem:[%s0 + $0x150] sm:$0xf]
  %v121 = vld [vmem:[%s0 + $0x154] sm:$0xf]
  %v122 = vld [vmem:[%s0 + $0x158] sm:$0xf]
  %v123 = vld [vmem:[%s0 + $0x15c] sm:$0xf]
  %v124 = vld [vmem:[%s0 + $0x160] sm:$0xf]
  %v125 = vld [vmem:[%s0 + $0x164] sm:$0xf]
  %v126 = vld [vmem:[%s0 + $0x168] sm:$0xf]
  %v127 = vld [vmem:[%s0 + $0x16c] sm:$0xf]
  %v128 = vld [vmem:[%s0 + $0x170] sm:$0xf]
  %v129 = vld [vmem:[%s0 + $0x174] sm:$0xf]
  %v130 = vld [vmem:[%s0 + $0x178] sm:$0xf]
  %v131 = vld [vmem:[%s0 + $0x17c] sm:$0xf]
  %v132 = vld [vmem:[%s0 + $0x180] sm:$0xf]
  %v133 = vld [vmem:[%s0 + $0x184] sm:$0xf]
  %v134 = vld [vmem:[%s0 + $0x188] sm:$0xf]
  %v135 = vld [vmem:[%s0 + $0x18c] sm:$0xf]
  %v136 = vld [vmem:[%s0 + $0x190] sm:$0xf]
  %v137 = vld [vmem:[%s0 + $0x194] sm:$0xf]
  %v138 = vld [vmem:[%s0 + $0x198] sm:$0xf]
  %v139 = vld [vmem:[%s0 + $0x19c] sm:$0xf]
  %v140 = vld [vmem:[%s0 + $0x1a0] sm:$0xf]
  %v141 = vld [vmem:[%s0 + $0x1a4] sm:$0xf]
  %v142 = vld [vmem:[%s0 + $0x1a8] sm:$0xf]
  %v143 = vld [vmem:[%s0 + $0x1ac] sm:$0xf]
  %v144 = vld [vmem:[%s0 + $0x1b0] sm:$0xf]
  %v145 = vld [vmem:[%s0 + $0x1b4] sm:$0xf]
  %v146 = vld [vmem:[%s0 + $0x1b8] sm:$0xf]
  %v147 = vld [vmem:[%s0 + $0x1bc] sm:$0xf]
  %v148 = vld [vmem:[%s0 + $0x1c0] sm:$0xf]
  %v149 = vld [vmem:[%s0 + $0x1c4] sm:$0xf]
  %v150 = vld [vmem:[%s0 + $0x1c8] sm:$0xf]
  %v151 = vld [vmem:[%s0 + $0x1cc] sm:$0xf]
  %v152 = vld [vmem:[%s0 + $0x1d0] sm:$0xf]
  %v153 = vld [vmem:[%s0 + $0x1d4] sm:$0xf]
  %v154 = vld [vmem:[%s0 + $0x1d8] sm:$0xf]
  %v155 = vld [vmem:[%s0 + $0x1dc] sm:$0xf]
  %v156 = vld [vmem:[%s0 + $0x1e0] sm:$0xf]
  %v157 = vld [vmem:[%s0 + $0x1e4] sm:$0xf]
  %v158 = vld [vmem:[%s0 + $0x1e8] sm:$0xf]
  %v159 = vld [vmem:[%s0 + $0x1ec] sm:$0xf]
  %v160 = vld [vmem:[%s0 + $0x1f0] sm:$0xf]
  %v161 = vld [vmem:[%s0 + $0x1f4] sm:$0xf]
  %v162 = vld [vmem:[%s0 + $0x1f8] sm:$0xf]
  %v163 = vld [vmem:[%s0 + $0x1fc] sm:$0xf]
  %v164 = vld [vmem:[%s1] sm:$0xf]
  %v165 = vld [vmem:[%s1 + $0x4] sm:$0x1]
  %v294 = vunpack.c.l.b16 %v36
  %v295 = vunpack.c.l.b16 %v37
  %v296 = vunpack.c.l.b16 %v38
  %v297 = vunpack.c.l.b16 %v39
  %v298 = vunpack.c.l.b16 %v40
  %v299 = vunpack.c.l.b16 %v41
  %v300 = vunpack.c.l.b16 %v42
  %v301 = vunpack.c.l.b16 %v43
  %v302 = vunpack.c.l.b16 %v44
  %v303 = vunpack.c.l.b16 %v45
  %v304 = vunpack.c.l.b16 %v46
  %v305 = vunpack.c.l.b16 %v47
  %v306 = vunpack.c.l.b16 %v48
  %v307 = vunpack.c.l.b16 %v49
  %v308 = vunpack.c.l.b16 %v50
  %v309 = vunpack.c.l.b16 %v51
  %v310 = vunpack.c.l.b16 %v52
  %v311 = vunpack.c.l.b16 %v53
  %v312 = vunpack.c.l.b16 %v54
  %v313 = vunpack.c.l.b16 %v55
  %v314 = vunpack.c.l.b16 %v56
  %v315 = vunpack.c.l.b16 %v57
  %v316 = vunpack.c.l.b16 %v58
  %v317 = vunpack.c.l.b16 %v59
  %v318 = vunpack.c.l.b16 %v60
  %v319 = vunpack.c.l.b16 %v61
  %v320 = vunpack.c.l.b16 %v62
  %v321 = vunpack.c.l.b16 %v63
  %v322 = vunpack.c.l.b16 %v64
  %v323 = vunpack.c.l.b16 %v65
  %v324 = vunpack.c.l.b16 %v66
  %v325 = vunpack.c.l.b16 %v67
  %v326 = vunpack.c.l.b16 %v68
  %v327 = vunpack.c.l.b16 %v69
  %v328 = vunpack.c.l.b16 %v70
  %v329 = vunpack.c.l.b16 %v71
  %v330 = vunpack.c.l.b16 %v72
  %v331 = vunpack.c.l.b16 %v73
  %v332 = vunpack.c.l.b16 %v74
  %v333 = vunpack.c.l.b16 %v75
  %v334 = vunpack.c.l.b16 %v76
  %v335 = vunpack.c.l.b16 %v77
  %v336 = vunpack.c.l.b16 %v78
  %v337 = vunpack.c.l.b16 %v79
  %v338 = vunpack.c.l.b16 %v80
  %v339 = vunpack.c.l.b16 %v81
  %v340 = vunpack.c.l.b16 %v82
  %v341 = vunpack.c.l.b16 %v83
  %v342 = vunpack.c.l.b16 %v84
  %v343 = vunpack.c.l.b16 %v85
  %v344 = vunpack.c.l.b16 %v86
  %v345 = vunpack.c.l.b16 %v87
  %v346 = vunpack.c.l.b16 %v88
  %v347 = vunpack.c.l.b16 %v89
  %v348 = vunpack.c.l.b16 %v90
  %v349 = vunpack.c.l.b16 %v91
  %v350 = vunpack.c.l.b16 %v92
  %v351 = vunpack.c.l.b16 %v93
  %v352 = vunpack.c.l.b16 %v94
  %v353 = vunpack.c.l.b16 %v95
  %v354 = vunpack.c.l.b16 %v96
  %v355 = vunpack.c.l.b16 %v97
  %v356 = vunpack.c.l.b16 %v98
  %v357 = vunpack.c.l.b16 %v99
  %v358 = vunpack.c.l.b16 %v100
  %v359 = vunpack.c.l.b16 %v101
  %v360 = vunpack.c.l.b16 %v102
  %v361 = vunpack.c.l.b16 %v103
  %v362 = vunpack.c.l.b16 %v104
  %v363 = vunpack.c.l.b16 %v105
  %v364 = vunpack.c.l.b16 %v106
  %v365 = vunpack.c.l.b16 %v107
  %v366 = vunpack.c.l.b16 %v108
  %v367 = vunpack.c.l.b16 %v109
  %v368 = vunpack.c.l.b16 %v110
  %v369 = vunpack.c.l.b16 %v111
  %v370 = vunpack.c.l.b16 %v112
  %v371 = vunpack.c.l.b16 %v113
  %v372 = vunpack.c.l.b16 %v114
  %v373 = vunpack.c.l.b16 %v115
  %v374 = vunpack.c.l.b16 %v116
  %v375 = vunpack.c.l.b16 %v117
  %v376 = vunpack.c.l.b16 %v118
  %v377 = vunpack.c.l.b16 %v119
  %v378 = vunpack.c.l.b16 %v120
  %v379 = vunpack.c.l.b16 %v121
  %v380 = vunpack.c.l.b16 %v122
  %v381 = vunpack.c.l.b16 %v123
  %v382 = vunpack.c.l.b16 %v124
  %v383 = vunpack.c.l.b16 %v125
  %v384 = vunpack.c.l.b16 %v126
  %v385 = vunpack.c.l.b16 %v127
  %v386 = vunpack.c.l.b16 %v128
  %v387 = vunpack.c.l.b16 %v129
  %v388 = vunpack.c.l.b16 %v130
  %v389 = vunpack.c.l.b16 %v131
  %v390 = vunpack.c.l.b16 %v132
  %v391 = vunpack.c.l.b16 %v133
  %v392 = vunpack.c.l.b16 %v134
  %v393 = vunpack.c.l.b16 %v135
  %v394 = vunpack.c.l.b16 %v136
  %v395 = vunpack.c.l.b16 %v137
  %v396 = vunpack.c.l.b16 %v138
  %v397 = vunpack.c.l.b16 %v139
  %v398 = vunpack.c.l.b16 %v140
  %v399 = vunpack.c.l.b16 %v141
  %v400 = vunpack.c.l.b16 %v142
  %v401 = vunpack.c.l.b16 %v143
  %v402 = vunpack.c.l.b16 %v144
  %v403 = vunpack.c.l.b16 %v145
  %v404 = vunpack.c.l.b16 %v146
  %v405 = vunpack.c.l.b16 %v147
  %v406 = vunpack.c.l.b16 %v148
  %v407 = vunpack.c.l.b16 %v149
  %v408 = vunpack.c.l.b16 %v150
  %v409 = vunpack.c.l.b16 %v151
  %v410 = vunpack.c.l.b16 %v152
  %v411 = vunpack.c.l.b16 %v153
  %v412 = vunpack.c.l.b16 %v154
  %v413 = vunpack.c.l.b16 %v155
  %v414 = vunpack.c.l.b16 %v156
  %v415 = vunpack.c.l.b16 %v157
  %v416 = vunpack.c.l.b16 %v158
  %v417 = vunpack.c.l.b16 %v159
  %v418 = vunpack.c.l.b16 %v160
  %v419 = vunpack.c.l.b16 %v161
  %v420 = vunpack.c.l.b16 %v162
  %v421 = vunpack.c.l.b16 %v163
  %v422 = vpack.c.b16 %v295, %v294
  %v423 = vpack.c.b16 %v297, %v296
  %v424 = vpack.c.b16 %v299, %v298
  %v425 = vpack.c.b16 %v301, %v300
  %v426 = vpack.c.b16 %v303, %v302
  %v427 = vpack.c.b16 %v305, %v304
  %v428 = vpack.c.b16 %v307, %v306
  %v429 = vpack.c.b16 %v309, %v308
  %v430 = vpack.c.b16 %v311, %v310
  %v431 = vpack.c.b16 %v313, %v312
  %v432 = vpack.c.b16 %v315, %v314
  %v433 = vpack.c.b16 %v317, %v316
  %v434 = vpack.c.b16 %v319, %v318
  %v435 = vpack.c.b16 %v321, %v320
  %v436 = vpack.c.b16 %v323, %v322
  %v437 = vpack.c.b16 %v325, %v324
  %v438 = vpack.c.b16 %v327, %v326
  %v439 = vpack.c.b16 %v329, %v328
  %v440 = vpack.c.b16 %v331, %v330
  %v441 = vpack.c.b16 %v333, %v332
  %v442 = vpack.c.b16 %v335, %v334
  %v443 = vpack.c.b16 %v337, %v336
  %v444 = vpack.c.b16 %v339, %v338
  %v445 = vpack.c.b16 %v341, %v340
  %v446 = vpack.c.b16 %v343, %v342
  %v447 = vpack.c.b16 %v345, %v344
  %v448 = vpack.c.b16 %v347, %v346
  %v449 = vpack.c.b16 %v349, %v348
  %v450 = vpack.c.b16 %v351, %v350
  %v451 = vpack.c.b16 %v353, %v352
  %v452 = vpack.c.b16 %v355, %v354
  %v453 = vpack.c.b16 %v357, %v356
  %v454 = vpack.c.b16 %v359, %v358
  %v455 = vpack.c.b16 %v361, %v360
  %v456 = vpack.c.b16 %v363, %v362
  %v457 = vpack.c.b16 %v365, %v364
  %v458 = vpack.c.b16 %v367, %v366
  %v459 = vpack.c.b16 %v369, %v368
  %v460 = vpack.c.b16 %v371, %v370
  %v461 = vpack.c.b16 %v373, %v372
  %v462 = vpack.c.b16 %v375, %v374
  %v463 = vpack.c.b16 %v377, %v376
  %v464 = vpack.c.b16 %v379, %v378
  %v465 = vpack.c.b16 %v381, %v380
  %v466 = vpack.c.b16 %v383, %v382
  %v467 = vpack.c.b16 %v385, %v384
  %v468 = vpack.c.b16 %v387, %v386
  %v469 = vpack.c.b16 %v389, %v388
  %v470 = vpack.c.b16 %v391, %v390
  %v471 = vpack.c.b16 %v393, %v392
  %v472 = vpack.c.b16 %v395, %v394
  %v473 = vpack.c.b16 %v397, %v396
  %v474 = vpack.c.b16 %v399, %v398
  %v475 = vpack.c.b16 %v401, %v400
  %v476 = vpack.c.b16 %v403, %v402
  %v477 = vpack.c.b16 %v405, %v404
  %v478 = vpack.c.b16 %v407, %v406
  %v479 = vpack.c.b16 %v409, %v408
  %v480 = vpack.c.b16 %v411, %v410
  %v481 = vpack.c.b16 %v413, %v412
  %v482 = vpack.c.b16 %v415, %v414
  %v483 = vpack.c.b16 %v417, %v416
  %v484 = vpack.c.b16 %v419, %v418
  %v485 = vpack.c.b16 %v421, %v420
  %v488 = vunpack.c.l.b16 %v164
  %v489 = vunpack.c.l.b16 %v165
  %v490 = vpack.c.b16 %v489, %v488
  %vm491 = vcmask 80896
  %v493 = vsel %vm491, %v422, 0
  %v496 = vsel %vm491, %v423, 0
  %v499 = vsel %vm491, %v424, 0
  %v502 = vsel %vm491, %v425, 0
  %v505 = vsel %vm491, %v426, 0
  %v508 = vsel %vm491, %v427, 0
  %v511 = vsel %vm491, %v428, 0
  %v514 = vsel %vm491, %v429, 0
  %v517 = vsel %vm491, %v430, 0
  %v520 = vsel %vm491, %v431, 0
  %v523 = vsel %vm491, %v432, 0
  %v526 = vsel %vm491, %v433, 0
  %v529 = vsel %vm491, %v434, 0
  %v532 = vsel %vm491, %v435, 0
  %v535 = vsel %vm491, %v436, 0
  %v538 = vsel %vm491, %v437, 0
  %v541 = vsel %vm491, %v438, 0
  %v544 = vsel %vm491, %v439, 0
  %v547 = vsel %vm491, %v440, 0
  %v550 = vsel %vm491, %v441, 0
  %v553 = vsel %vm491, %v442, 0
  %v556 = vsel %vm491, %v443, 0
  %v559 = vsel %vm491, %v444, 0
  %v562 = vsel %vm491, %v445, 0
  %v565 = vsel %vm491, %v446, 0
  %v568 = vsel %vm491, %v447, 0
  %v571 = vsel %vm491, %v448, 0
  %v574 = vsel %vm491, %v449, 0
  %v577 = vsel %vm491, %v450, 0
  %v580 = vsel %vm491, %v451, 0
  %v583 = vsel %vm491, %v452, 0
  %v586 = vsel %vm491, %v453, 0
  %v589 = vsel %vm491, %v454, 0
  %v592 = vsel %vm491, %v455, 0
  %v595 = vsel %vm491, %v456, 0
  %v598 = vsel %vm491, %v457, 0
  %v601 = vsel %vm491, %v458, 0
  %v604 = vsel %vm491, %v459, 0
  %v607 = vsel %vm491, %v460, 0
  %v610 = vsel %vm491, %v461, 0
  %v613 = vsel %vm491, %v462, 0
  %v616 = vsel %vm491, %v463, 0
  %v619 = vsel %vm491, %v464, 0
  %v622 = vsel %vm491, %v465, 0
  %v625 = vsel %vm491, %v466, 0
  %v628 = vsel %vm491, %v467, 0
  %v631 = vsel %vm491, %v468, 0
  %v634 = vsel %vm491, %v469, 0
  %v637 = vsel %vm491, %v470, 0
  %v640 = vsel %vm491, %v471, 0
  %v643 = vsel %vm491, %v472, 0
  %v646 = vsel %vm491, %v473, 0
  %v649 = vsel %vm491, %v474, 0
  %v652 = vsel %vm491, %v475, 0
  %v655 = vsel %vm491, %v476, 0
  %v658 = vsel %vm491, %v477, 0
  %v661 = vsel %vm491, %v478, 0
  %v664 = vsel %vm491, %v479, 0
  %v667 = vsel %vm491, %v480, 0
  %v670 = vsel %vm491, %v481, 0
  %v673 = vsel %vm491, %v482, 0
  %v676 = vsel %vm491, %v483, 0
  %v679 = vsel %vm491, %v484, 0
  %v682 = vsel %vm491, %v485, 0
  %vm684 = vcmask 1044480
  %v686 = vsel %vm684, %v490, 0
  %688 = vmatprep.subr.bf16.mxu0 0
  %689 = vmatpush1.bf16.msra.mxu0 0
  %690 = vmatprep.subr.bf16.mxu0 0
  %691 = vmatpush1.bf16.msra.mxu0 0
  %692 = vmatprep.subr.bf16.mxu0 0
  %693 = vmatpush1.bf16.msra.mxu0 0
  %694 = vmatprep.subr.bf16.mxu0 0
  %695 = vmatpush1.bf16.msra.mxu0 0
  %696 = vmatprep.subr.bf16.mxu0 0
  %697 = vmatpush1.bf16.msra.mxu0 0
  %698 = vmatprep.subr.bf16.mxu0 0
  %699 = vmatpush1.bf16.msra.mxu0 0
  %700 = vmatprep.subr.bf16.mxu0 0
  %701 = vmatpush1.bf16.msra.mxu0 0
  %702 = vmatprep.subr.bf16.mxu0 0
  %703 = vmatpush1.bf16.msra.mxu0 %v686
  %704 = vmatprep.subr.bf16.mxu0 0
  %705 = vmatpush2.bf16.msra.mxu0 0
  %706 = vmatprep.subr.bf16.mxu0 0
  %707 = vmatpush2.bf16.msra.mxu0 0
  %708 = vmatprep.subr.bf16.mxu0 0
  %709 = vmatpush2.bf16.msra.mxu0 0
  %710 = vmatprep.subr.bf16.mxu0 0
  %711 = vmatpush2.bf16.msra.mxu0 0
  %712 = vmatprep.subr.bf16.mxu0 0
  %713 = vmatpush2.bf16.msra.mxu0 0
  %714 = vmatprep.subr.bf16.mxu0 0
  %715 = vmatpush2.bf16.msra.mxu0 0
  %716 = vmatprep.subr.bf16.mxu0 0
  %717 = vmatpush2.bf16.msra.mxu0 0
  %718 = vmatprep.subr.bf16.mxu0 0
  %719 = vmatpush2.bf16.msra.mxu0 0
  %720 = vmatprep.mubr.bf16.mxu0 0
  %721 = vmatmul.mubr.bf16.gmra.mxu0 %v493
  %v722 = vpop.f32.mrf.mxu0
  %v723 = vadd.f32 0.0, %v722
  %v724 = vpop.f32.mrf.mxu0
  %v725 = vpop.f32.mrf.mxu0
  %v726 = vadd.f32 0.0, %v725
  %v727 = vpop.f32.mrf.mxu0
  %728 = vmatprep.mubr.bf16.mxu0 0
  %729 = vmatmul.mubr.bf16.gmra.mxu0 %v496
  %v730 = vpop.f32.mrf.mxu0
  %v731 = vadd.f32 0.0, %v730
  %v732 = vpop.f32.mrf.mxu0
  %v733 = vpop.f32.mrf.mxu0
  %v734 = vpop.f32.mrf.mxu0
  %735 = vmatprep.mubr.bf16.mxu0 0
  %736 = vmatmul.mubr.bf16.gmra.mxu0 %v499
  %v737 = vpop.f32.mrf.mxu0
  %v738 = vadd.f32 0.0, %v737
  %v739 = vpop.f32.mrf.mxu0
  %v740 = vpop.f32.mrf.mxu0
  %v741 = vadd.f32 0.0, %v740
  %v742 = vpop.f32.mrf.mxu0
  %743 = vmatprep.mubr.bf16.mxu0 0
  %744 = vmatmul.mubr.bf16.gmra.mxu0 %v502
  %v745 = vpop.f32.mrf.mxu0
  %v746 = vadd.f32 0.0, %v745
  %v747 = vpop.f32.mrf.mxu0
  %v748 = vpop.f32.mrf.mxu0
  %v749 = vpop.f32.mrf.mxu0
  %750 = vmatprep.mubr.bf16.mxu0 0
  %751 = vmatmul.mubr.bf16.gmra.mxu0 %v505
  %v752 = vpop.f32.mrf.mxu0
  %v753 = vadd.f32 0.0, %v752
  %v754 = vpop.f32.mrf.mxu0
  %v755 = vpop.f32.mrf.mxu0
  %v756 = vadd.f32 0.0, %v755
  %v757 = vpop.f32.mrf.mxu0
  %758 = vmatprep.mubr.bf16.mxu0 0
  %759 = vmatmul.mubr.bf16.gmra.mxu0 %v508
  %v760 = vpop.f32.mrf.mxu0
  %v761 = vadd.f32 0.0, %v760
  %v762 = vpop.f32.mrf.mxu0
  %v763 = vpop.f32.mrf.mxu0
  %v764 = vpop.f32.mrf.mxu0
  %765 = vmatprep.mubr.bf16.mxu0 0
  %766 = vmatmul.mubr.bf16.gmra.mxu0 %v511
  %v767 = vpop.f32.mrf.mxu0
  %v768 = vadd.f32 0.0, %v767
  %v769 = vpop.f32.mrf.mxu0
  %v770 = vpop.f32.mrf.mxu0
  %v771 = vadd.f32 0.0, %v770
  %v772 = vpop.f32.mrf.mxu0
  %773 = vmatprep.mubr.bf16.mxu0 0
  %774 = vmatmul.mubr.bf16.gmra.mxu0 %v514
  %v775 = vpop.f32.mrf.mxu0
  %v776 = vadd.f32 0.0, %v775
  %v777 = vpop.f32.mrf.mxu0
  %v778 = vpop.f32.mrf.mxu0
  %v779 = vpop.f32.mrf.mxu0
  %780 = vmatprep.mubr.bf16.mxu0 0
  %781 = vmatmul.mubr.bf16.gmra.mxu0 %v517
  %v782 = vpop.f32.mrf.mxu0
  %v783 = vadd.f32 0.0, %v782
  %v784 = vpop.f32.mrf.mxu0
  %v785 = vpop.f32.mrf.mxu0
  %v786 = vadd.f32 0.0, %v785
  %v787 = vpop.f32.mrf.mxu0
  %788 = vmatprep.mubr.bf16.mxu0 0
  %789 = vmatmul.mubr.bf16.gmra.mxu0 %v520
  %v790 = vpop.f32.mrf.mxu0
  %v791 = vadd.f32 0.0, %v790
  %v792 = vpop.f32.mrf.mxu0
  %v793 = vpop.f32.mrf.mxu0
  %v794 = vpop.f32.mrf.mxu0
  %795 = vmatprep.mubr.bf16.mxu0 0
  %796 = vmatmul.mubr.bf16.gmra.mxu0 %v523
  %v797 = vpop.f32.mrf.mxu0
  %v798 = vadd.f32 0.0, %v797
  %v799 = vpop.f32.mrf.mxu0
  %v800 = vpop.f32.mrf.mxu0
  %v801 = vadd.f32 0.0, %v800
  %v802 = vpop.f32.mrf.mxu0
  %803 = vmatprep.mubr.bf16.mxu0 0
  %804 = vmatmul.mubr.bf16.gmra.mxu0 %v526
  %v805 = vpop.f32.mrf.mxu0
  %v806 = vadd.f32 0.0, %v805
  %v807 = vpop.f32.mrf.mxu0
  %v808 = vpop.f32.mrf.mxu0
  %v809 = vpop.f32.mrf.mxu0
  %810 = vmatprep.mubr.bf16.mxu0 0
  %811 = vmatmul.mubr.bf16.gmra.mxu0 %v529
  %v812 = vpop.f32.mrf.mxu0
  %v813 = vadd.f32 0.0, %v812
  %v814 = vpop.f32.mrf.mxu0
  %v815 = vpop.f32.mrf.mxu0
  %v816 = vadd.f32 0.0, %v815
  %v817 = vpop.f32.mrf.mxu0
  %818 = vmatprep.mubr.bf16.mxu0 0
  %819 = vmatmul.mubr.bf16.gmra.mxu0 %v532
  %v820 = vpop.f32.mrf.mxu0
  %v821 = vadd.f32 0.0, %v820
  %v822 = vpop.f32.mrf.mxu0
  %v823 = vpop.f32.mrf.mxu0
  %v824 = vpop.f32.mrf.mxu0
  %825 = vmatprep.mubr.bf16.mxu0 0
  %826 = vmatmul.mubr.bf16.gmra.mxu0 %v535
  %v827 = vpop.f32.mrf.mxu0
  %v828 = vadd.f32 0.0, %v827
  %v829 = vpop.f32.mrf.mxu0
  %v830 = vpop.f32.mrf.mxu0
  %v831 = vadd.f32 0.0, %v830
  %v832 = vpop.f32.mrf.mxu0
  %833 = vmatprep.mubr.bf16.mxu0 0
  %834 = vmatmul.mubr.bf16.gmra.mxu0 %v538
  %v835 = vpop.f32.mrf.mxu0
  %v836 = vadd.f32 0.0, %v835
  %v837 = vpop.f32.mrf.mxu0
  %v838 = vpop.f32.mrf.mxu0
  %v839 = vpop.f32.mrf.mxu0
  %840 = vmatprep.mubr.bf16.mxu0 0
  %841 = vmatmul.mubr.bf16.gmra.mxu0 %v541
  %v842 = vpop.f32.mrf.mxu0
  %v843 = vadd.f32 0.0, %v842
  %v844 = vpop.f32.mrf.mxu0
  %v845 = vpop.f32.mrf.mxu0
  %v846 = vadd.f32 0.0, %v845
  %v847 = vpop.f32.mrf.mxu0
  %848 = vmatprep.mubr.bf16.mxu0 0
  %849 = vmatmul.mubr.bf16.gmra.mxu0 %v544
  %v850 = vpop.f32.mrf.mxu0
  %v851 = vadd.f32 0.0, %v850
  %v852 = vpop.f32.mrf.mxu0
  %v853 = vpop.f32.mrf.mxu0
  %v854 = vpop.f32.mrf.mxu0
  %855 = vmatprep.mubr.bf16.mxu0 0
  %856 = vmatmul.mubr.bf16.gmra.mxu0 %v547
  %v857 = vpop.f32.mrf.mxu0
  %v858 = vadd.f32 0.0, %v857
  %v859 = vpop.f32.mrf.mxu0
  %v860 = vpop.f32.mrf.mxu0
  %v861 = vadd.f32 0.0, %v860
  %v862 = vpop.f32.mrf.mxu0
  %863 = vmatprep.mubr.bf16.mxu0 0
  %864 = vmatmul.mubr.bf16.gmra.mxu0 %v550
  %v865 = vpop.f32.mrf.mxu0
  %v866 = vadd.f32 0.0, %v865
  %v867 = vpop.f32.mrf.mxu0
  %v868 = vpop.f32.mrf.mxu0
  %v869 = vpop.f32.mrf.mxu0
  %870 = vmatprep.mubr.bf16.mxu0 0
  %871 = vmatmul.mubr.bf16.gmra.mxu0 %v553
  %v872 = vpop.f32.mrf.mxu0
  %v873 = vadd.f32 0.0, %v872
  %v874 = vpop.f32.mrf.mxu0
  %v875 = vpop.f32.mrf.mxu0
  %v876 = vadd.f32 0.0, %v875
  %v877 = vpop.f32.mrf.mxu0
  %878 = vmatprep.mubr.bf16.mxu0 0
  %879 = vmatmul.mubr.bf16.gmra.mxu0 %v556
  %v880 = vpop.f32.mrf.mxu0
  %v881 = vadd.f32 0.0, %v880
  %v882 = vpop.f32.mrf.mxu0
  %v883 = vpop.f32.mrf.mxu0
  %v884 = vpop.f32.mrf.mxu0
  %885 = vmatprep.mubr.bf16.mxu0 0
  %886 = vmatmul.mubr.bf16.gmra.mxu0 %v559
  %v887 = vpop.f32.mrf.mxu0
  %v888 = vadd.f32 0.0, %v887
  %v889 = vpop.f32.mrf.mxu0
  %v890 = vpop.f32.mrf.mxu0
  %v891 = vadd.f32 0.0, %v890
  %v892 = vpop.f32.mrf.mxu0
  %893 = vmatprep.mubr.bf16.mxu0 0
  %894 = vmatmul.mubr.bf16.gmra.mxu0 %v562
  %v895 = vpop.f32.mrf.mxu0
  %v896 = vadd.f32 0.0, %v895
  %v897 = vpop.f32.mrf.mxu0
  %v898 = vpop.f32.mrf.mxu0
  %v899 = vpop.f32.mrf.mxu0
  %900 = vmatprep.mubr.bf16.mxu0 0
  %901 = vmatmul.mubr.bf16.gmra.mxu0 %v565
  %v902 = vpop.f32.mrf.mxu0
  %v903 = vadd.f32 0.0, %v902
  %v904 = vpop.f32.mrf.mxu0
  %v905 = vpop.f32.mrf.mxu0
  %v906 = vadd.f32 0.0, %v905
  %v907 = vpop.f32.mrf.mxu0
  %908 = vmatprep.mubr.bf16.mxu0 0
  %909 = vmatmul.mubr.bf16.gmra.mxu0 %v568
  %v910 = vpop.f32.mrf.mxu0
  %v911 = vadd.f32 0.0, %v910
  %v912 = vpop.f32.mrf.mxu0
  %v913 = vpop.f32.mrf.mxu0
  %v914 = vpop.f32.mrf.mxu0
  %915 = vmatprep.mubr.bf16.mxu0 0
  %916 = vmatmul.mubr.bf16.gmra.mxu0 %v571
  %v917 = vpop.f32.mrf.mxu0
  %v918 = vadd.f32 0.0, %v917
  %v919 = vpop.f32.mrf.mxu0
  %v920 = vpop.f32.mrf.mxu0
  %v921 = vadd.f32 0.0, %v920
  %v922 = vpop.f32.mrf.mxu0
  %923 = vmatprep.mubr.bf16.mxu0 0
  %924 = vmatmul.mubr.bf16.gmra.mxu0 %v574
  %v925 = vpop.f32.mrf.mxu0
  %v926 = vadd.f32 0.0, %v925
  %v927 = vpop.f32.mrf.mxu0
  %v928 = vpop.f32.mrf.mxu0
  %v929 = vpop.f32.mrf.mxu0
  %930 = vmatprep.mubr.bf16.mxu0 0
  %931 = vmatmul.mubr.bf16.gmra.mxu0 %v577
  %v932 = vpop.f32.mrf.mxu0
  %v933 = vadd.f32 0.0, %v932
  %v934 = vpop.f32.mrf.mxu0
  %v935 = vpop.f32.mrf.mxu0
  %v936 = vadd.f32 0.0, %v935
  %v937 = vpop.f32.mrf.mxu0
  %938 = vmatprep.mubr.bf16.mxu0 0
  %939 = vmatmul.mubr.bf16.gmra.mxu0 %v580
  %v940 = vpop.f32.mrf.mxu0
  %v941 = vadd.f32 0.0, %v940
  %v942 = vpop.f32.mrf.mxu0
  %v943 = vpop.f32.mrf.mxu0
  %v944 = vpop.f32.mrf.mxu0
  %945 = vmatprep.mubr.bf16.mxu0 0
  %946 = vmatmul.mubr.bf16.gmra.mxu0 %v583
  %v947 = vpop.f32.mrf.mxu0
  %v948 = vpop.f32.mrf.mxu0
  %v949 = vpop.f32.mrf.mxu0
  %v950 = vpop.f32.mrf.mxu0
  %951 = vmatprep.mubr.bf16.mxu0 0
  %952 = vmatmul.mubr.bf16.gmra.mxu0 %v586
  %v953 = vpop.f32.mrf.mxu0
  %v954 = vpop.f32.mrf.mxu0
  %v955 = vpop.f32.mrf.mxu0
  %v956 = vpop.f32.mrf.mxu0
  %957 = vmatprep.mubr.bf16.mxu0 0
  %958 = vmatmul.mubr.bf16.gmra.mxu0 %v589
  %v959 = vpop.f32.mrf.mxu0
  %v960 = vadd.f32 0.0, %v959
  %v961 = vpop.f32.mrf.mxu0
  %v962 = vpop.f32.mrf.mxu0
  %v963 = vadd.f32 0.0, %v962
  %v964 = vpop.f32.mrf.mxu0
  %965 = vmatprep.mubr.bf16.mxu0 0
  %966 = vmatmul.mubr.bf16.gmra.mxu0 %v592
  %v967 = vpop.f32.mrf.mxu0
  %v968 = vadd.f32 0.0, %v967
  %v969 = vpop.f32.mrf.mxu0
  %v970 = vpop.f32.mrf.mxu0
  %v971 = vpop.f32.mrf.mxu0
  %972 = vmatprep.mubr.bf16.mxu0 0
  %973 = vmatmul.mubr.bf16.gmra.mxu0 %v595
  %v974 = vpop.f32.mrf.mxu0
  %v975 = vadd.f32 0.0, %v974
  %v976 = vpop.f32.mrf.mxu0
  %v977 = vpop.f32.mrf.mxu0
  %v978 = vadd.f32 0.0, %v977
  %v979 = vpop.f32.mrf.mxu0
  %980 = vmatprep.mubr.bf16.mxu0 0
  %981 = vmatmul.mubr.bf16.gmra.mxu0 %v598
  %v982 = vpop.f32.mrf.mxu0
  %v983 = vadd.f32 0.0, %v982
  %v984 = vpop.f32.mrf.mxu0
  %v985 = vpop.f32.mrf.mxu0
  %v986 = vpop.f32.mrf.mxu0
  %987 = vmatprep.mubr.bf16.mxu0 0
  %988 = vmatmul.mubr.bf16.gmra.mxu0 %v601
  %v989 = vpop.f32.mrf.mxu0
  %v990 = vadd.f32 0.0, %v989
  %v991 = vpop.f32.mrf.mxu0
  %v992 = vpop.f32.mrf.mxu0
  %v993 = vadd.f32 0.0, %v992
  %v994 = vpop.f32.mrf.mxu0
  %995 = vmatprep.mubr.bf16.mxu0 0
  %996 = vmatmul.mubr.bf16.gmra.mxu0 %v604
  %v997 = vpop.f32.mrf.mxu0
  %v998 = vadd.f32 0.0, %v997
  %v999 = vpop.f32.mrf.mxu0
  %v1000 = vpop.f32.mrf.mxu0
  %v1001 = vpop.f32.mrf.mxu0
  %1002 = vmatprep.mubr.bf16.mxu0 0
  %1003 = vmatmul.mubr.bf16.gmra.mxu0 %v607
  %v1004 = vpop.f32.mrf.mxu0
  %v1005 = vadd.f32 0.0, %v1004
  %v1006 = vpop.f32.mrf.mxu0
  %v1007 = vpop.f32.mrf.mxu0
  %v1008 = vadd.f32 0.0, %v1007
  %v1009 = vpop.f32.mrf.mxu0
  %1010 = vmatprep.mubr.bf16.mxu0 0
  %1011 = vmatmul.mubr.bf16.gmra.mxu0 %v610
  %v1012 = vpop.f32.mrf.mxu0
  %v1013 = vadd.f32 0.0, %v1012
  %v1014 = vpop.f32.mrf.mxu0
  %v1015 = vpop.f32.mrf.mxu0
  %v1016 = vpop.f32.mrf.mxu0
  %1017 = vmatprep.mubr.bf16.mxu0 0
  %1018 = vmatmul.mubr.bf16.gmra.mxu0 %v613
  %v1019 = vpop.f32.mrf.mxu0
  %v1020 = vadd.f32 0.0, %v1019
  %v1021 = vpop.f32.mrf.mxu0
  %v1022 = vpop.f32.mrf.mxu0
  %v1023 = vadd.f32 0.0, %v1022
  %v1024 = vpop.f32.mrf.mxu0
  %1025 = vmatprep.mubr.bf16.mxu0 0
  %1026 = vmatmul.mubr.bf16.gmra.mxu0 %v616
  %v1027 = vpop.f32.mrf.mxu0
  %v1028 = vadd.f32 0.0, %v1027
  %v1029 = vpop.f32.mrf.mxu0
  %v1030 = vpop.f32.mrf.mxu0
  %v1031 = vpop.f32.mrf.mxu0
  %1032 = vmatprep.mubr.bf16.mxu0 0
  %1033 = vmatmul.mubr.bf16.gmra.mxu0 %v619
  %v1034 = vpop.f32.mrf.mxu0
  %v1035 = vadd.f32 0.0, %v1034
  %v1036 = vpop.f32.mrf.mxu0
  %v1037 = vpop.f32.mrf.mxu0
  %v1038 = vadd.f32 0.0, %v1037
  %v1039 = vpop.f32.mrf.mxu0
  %1040 = vmatprep.mubr.bf16.mxu0 0
  %1041 = vmatmul.mubr.bf16.gmra.mxu0 %v622
  %v1042 = vpop.f32.mrf.mxu0
  %v1043 = vadd.f32 0.0, %v1042
  %v1044 = vpop.f32.mrf.mxu0
  %v1045 = vpop.f32.mrf.mxu0
  %v1046 = vpop.f32.mrf.mxu0
  %1047 = vmatprep.mubr.bf16.mxu0 0
  %1048 = vmatmul.mubr.bf16.gmra.mxu0 %v625
  %v1049 = vpop.f32.mrf.mxu0
  %v1050 = vadd.f32 0.0, %v1049
  %v1051 = vpop.f32.mrf.mxu0
  %v1052 = vpop.f32.mrf.mxu0
  %v1053 = vadd.f32 0.0, %v1052
  %v1054 = vpop.f32.mrf.mxu0
  %1055 = vmatprep.mubr.bf16.mxu0 0
  %1056 = vmatmul.mubr.bf16.gmra.mxu0 %v628
  %v1057 = vpop.f32.mrf.mxu0
  %v1058 = vadd.f32 0.0, %v1057
  %v1059 = vpop.f32.mrf.mxu0
  %v1060 = vpop.f32.mrf.mxu0
  %v1061 = vpop.f32.mrf.mxu0
  %1062 = vmatprep.mubr.bf16.mxu0 0
  %1063 = vmatmul.mubr.bf16.gmra.mxu0 %v631
  %v1064 = vpop.f32.mrf.mxu0
  %v1065 = vadd.f32 0.0, %v1064
  %v1066 = vpop.f32.mrf.mxu0
  %v1067 = vpop.f32.mrf.mxu0
  %v1068 = vadd.f32 0.0, %v1067
  %v1069 = vpop.f32.mrf.mxu0
  %1070 = vmatprep.mubr.bf16.mxu0 0
  %1071 = vmatmul.mubr.bf16.gmra.mxu0 %v634
  %v1072 = vpop.f32.mrf.mxu0
  %v1073 = vadd.f32 0.0, %v1072
  %v1074 = vpop.f32.mrf.mxu0
  %v1075 = vpop.f32.mrf.mxu0
  %v1076 = vpop.f32.mrf.mxu0
  %1077 = vmatprep.mubr.bf16.mxu0 0
  %1078 = vmatmul.mubr.bf16.gmra.mxu0 %v637
  %v1079 = vpop.f32.mrf.mxu0
  %v1080 = vadd.f32 0.0, %v1079
  %v1081 = vpop.f32.mrf.mxu0
  %v1082 = vpop.f32.mrf.mxu0
  %v1083 = vadd.f32 0.0, %v1082
  %v1084 = vpop.f32.mrf.mxu0
  %1085 = vmatprep.mubr.bf16.mxu0 0
  %1086 = vmatmul.mubr.bf16.gmra.mxu0 %v640
  %v1087 = vpop.f32.mrf.mxu0
  %v1088 = vadd.f32 0.0, %v1087
  %v1089 = vpop.f32.mrf.mxu0
  %v1090 = vpop.f32.mrf.mxu0
  %v1091 = vpop.f32.mrf.mxu0
  %1092 = vmatprep.mubr.bf16.mxu0 0
  %1093 = vmatmul.mubr.bf16.gmra.mxu0 %v643
  %v1094 = vpop.f32.mrf.mxu0
  %v1095 = vadd.f32 0.0, %v1094
  %v1096 = vpop.f32.mrf.mxu0
  %v1097 = vpop.f32.mrf.mxu0
  %v1098 = vadd.f32 0.0, %v1097
  %v1099 = vpop.f32.mrf.mxu0
  %1100 = vmatprep.mubr.bf16.mxu0 0
  %1101 = vmatmul.mubr.bf16.gmra.mxu0 %v646
  %v1102 = vpop.f32.mrf.mxu0
  %v1103 = vadd.f32 0.0, %v1102
  %v1104 = vpop.f32.mrf.mxu0
  %v1105 = vpop.f32.mrf.mxu0
  %v1106 = vpop.f32.mrf.mxu0
  %1107 = vmatprep.mubr.bf16.mxu0 0
  %1108 = vmatmul.mubr.bf16.gmra.mxu0 %v649
  %v1109 = vpop.f32.mrf.mxu0
  %v1110 = vadd.f32 0.0, %v1109
  %v1111 = vpop.f32.mrf.mxu0
  %v1112 = vpop.f32.mrf.mxu0
  %v1113 = vadd.f32 0.0, %v1112
  %v1114 = vpop.f32.mrf.mxu0
  %1115 = vmatprep.mubr.bf16.mxu0 0
  %1116 = vmatmul.mubr.bf16.gmra.mxu0 %v652
  %v1117 = vpop.f32.mrf.mxu0
  %v1118 = vadd.f32 0.0, %v1117
  %v1119 = vpop.f32.mrf.mxu0
  %v1120 = vpop.f32.mrf.mxu0
  %v1121 = vpop.f32.mrf.mxu0
  %1122 = vmatprep.mubr.bf16.mxu0 0
  %1123 = vmatmul.mubr.bf16.gmra.mxu0 %v655
  %v1124 = vpop.f32.mrf.mxu0
  %v1125 = vadd.f32 0.0, %v1124
  %v1126 = vpop.f32.mrf.mxu0
  %v1127 = vpop.f32.mrf.mxu0
  %v1128 = vadd.f32 0.0, %v1127
  %v1129 = vpop.f32.mrf.mxu0
  %1130 = vmatprep.mubr.bf16.mxu0 0
  %1131 = vmatmul.mubr.bf16.gmra.mxu0 %v658
  %v1132 = vpop.f32.mrf.mxu0
  %v1133 = vadd.f32 0.0, %v1132
  %v1134 = vpop.f32.mrf.mxu0
  %v1135 = vpop.f32.mrf.mxu0
  %v1136 = vpop.f32.mrf.mxu0
  %1137 = vmatprep.mubr.bf16.mxu0 0
  %1138 = vmatmul.mubr.bf16.gmra.mxu0 %v661
  %v1139 = vpop.f32.mrf.mxu0
  %v1140 = vadd.f32 0.0, %v1139
  %v1141 = vpop.f32.mrf.mxu0
  %v1142 = vpop.f32.mrf.mxu0
  %v1143 = vadd.f32 0.0, %v1142
  %v1144 = vpop.f32.mrf.mxu0
  %1145 = vmatprep.mubr.bf16.mxu0 0
  %1146 = vmatmul.mubr.bf16.gmra.mxu0 %v664
  %v1147 = vpop.f32.mrf.mxu0
  %v1148 = vadd.f32 0.0, %v1147
  %v1149 = vpop.f32.mrf.mxu0
  %v1150 = vpop.f32.mrf.mxu0
  %v1151 = vpop.f32.mrf.mxu0
  %1152 = vmatprep.mubr.bf16.mxu0 0
  %1153 = vmatmul.mubr.bf16.gmra.mxu0 %v667
  %v1154 = vpop.f32.mrf.mxu0
  %v1155 = vadd.f32 0.0, %v1154
  %v1156 = vpop.f32.mrf.mxu0
  %v1157 = vpop.f32.mrf.mxu0
  %v1158 = vadd.f32 0.0, %v1157
  %v1159 = vpop.f32.mrf.mxu0
  %1160 = vmatprep.mubr.bf16.mxu0 0
  %1161 = vmatmul.mubr.bf16.gmra.mxu0 %v670
  %v1162 = vpop.f32.mrf.mxu0
  %v1163 = vadd.f32 0.0, %v1162
  %v1164 = vpop.f32.mrf.mxu0
  %v1165 = vpop.f32.mrf.mxu0
  %v1166 = vpop.f32.mrf.mxu0
  %1167 = vmatprep.mubr.bf16.mxu0 0
  %1168 = vmatmul.mubr.bf16.gmra.mxu0 %v673
  %v1169 = vpop.f32.mrf.mxu0
  %v1170 = vadd.f32 0.0, %v1169
  %v1171 = vpop.f32.mrf.mxu0
  %v1172 = vpop.f32.mrf.mxu0
  %v1173 = vadd.f32 0.0, %v1172
  %v1174 = vpop.f32.mrf.mxu0
  %1175 = vmatprep.mubr.bf16.mxu0 0
  %1176 = vmatmul.mubr.bf16.gmra.mxu0 %v676
  %v1177 = vpop.f32.mrf.mxu0
  %v1178 = vadd.f32 0.0, %v1177
  %v1179 = vpop.f32.mrf.mxu0
  %v1180 = vpop.f32.mrf.mxu0
  %v1181 = vpop.f32.mrf.mxu0
  %1182 = vmatprep.mubr.bf16.mxu0 0
  %1183 = vmatmul.mubr.bf16.gmra.mxu0 %v679
  %v1184 = vpop.f32.mrf.mxu0
  %v1185 = vpop.f32.mrf.mxu0
  %v1186 = vpop.f32.mrf.mxu0
  %v1187 = vpop.f32.mrf.mxu0
  %1188 = vmatprep.mubr.bf16.mxu0 0
  %1189 = vmatmul.mubr.bf16.gmra.mxu0 %v682
  %v1190 = vpop.f32.mrf.mxu0
  %v1191 = vpop.f32.mrf.mxu0
  %v1192 = vpop.f32.mrf.mxu0
  %v1193 = vpop.f32.mrf.mxu0
  %1194 = vdwg.mxu0
  %vm1195 = vcmp.ge.f32.partialorder %v723, 0.0
  %vm1196 = vcmp.ge.f32.partialorder %v726, 0.0
  %vm1197 = vcmp.ge.f32.partialorder %v731, 0.0
  %vm1198 = vcmp.ge.f32.partialorder %v738, 0.0
  %vm1199 = vcmp.ge.f32.partialorder %v741, 0.0
  %vm1200 = vcmp.ge.f32.partialorder %v746, 0.0
  %vm1201 = vcmp.ge.f32.partialorder %v753, 0.0
  %vm1202 = vcmp.ge.f32.partialorder %v756, 0.0
  %vm1203 = vcmp.ge.f32.partialorder %v761, 0.0
  %vm1204 = vcmp.ge.f32.partialorder %v768, 0.0
  %vm1205 = vcmp.ge.f32.partialorder %v771, 0.0
  %vm1206 = vcmp.ge.f32.partialorder %v776, 0.0
  %vm1207 = vcmp.ge.f32.partialorder %v783, 0.0
  %vm1208 = vcmp.ge.f32.partialorder %v786, 0.0
  %vm1209 = vcmp.ge.f32.partialorder %v791, 0.0
  %vm1210 = vcmp.ge.f32.partialorder %v798, 0.0
  %vm1211 = vcmp.ge.f32.partialorder %v801, 0.0
  %vm1212 = vcmp.ge.f32.partialorder %v806, 0.0
  %vm1213 = vcmp.ge.f32.partialorder %v813, 0.0
  %vm1214 = vcmp.ge.f32.partialorder %v816, 0.0
  %vm1215 = vcmp.ge.f32.partialorder %v821, 0.0
  %vm1216 = vcmp.ge.f32.partialorder %v828, 0.0
  %vm1217 = vcmp.ge.f32.partialorder %v831, 0.0
  %vm1218 = vcmp.ge.f32.partialorder %v836, 0.0
  %vm1219 = vcmp.ge.f32.partialorder %v843, 0.0
  %vm1220 = vcmp.ge.f32.partialorder %v846, 0.0
  %vm1221 = vcmp.ge.f32.partialorder %v851, 0.0
  %vm1222 = vcmp.ge.f32.partialorder %v858, 0.0
  %vm1223 = vcmp.ge.f32.partialorder %v861, 0.0
  %vm1224 = vcmp.ge.f32.partialorder %v866, 0.0
  %vm1225 = vcmp.ge.f32.partialorder %v873, 0.0
  %vm1226 = vcmp.ge.f32.partialorder %v876, 0.0
  %vm1227 = vcmp.ge.f32.partialorder %v881, 0.0
  %vm1228 = vcmp.ge.f32.partialorder %v888, 0.0
  %vm1229 = vcmp.ge.f32.partialorder %v891, 0.0
  %vm1230 = vcmp.ge.f32.partialorder %v896, 0.0
  %vm1231 = vcmp.ge.f32.partialorder %v903, 0.0
  %vm1232 = vcmp.ge.f32.partialorder %v906, 0.0
  %vm1233 = vcmp.ge.f32.partialorder %v911, 0.0
  %vm1234 = vcmp.ge.f32.partialorder %v918, 0.0
  %vm1235 = vcmp.ge.f32.partialorder %v921, 0.0
  %vm1236 = vcmp.ge.f32.partialorder %v926, 0.0
  %vm1237 = vcmp.ge.f32.partialorder %v933, 0.0
  %vm1238 = vcmp.ge.f32.partialorder %v936, 0.0
  %vm1239 = vcmp.ge.f32.partialorder %v941, 0.0
  %vm1240 = vcmp.ge.f32.partialorder %v960, 0.0
  %vm1241 = vcmp.ge.f32.partialorder %v963, 0.0
  %vm1242 = vcmp.ge.f32.partialorder %v968, 0.0
  %vm1243 = vcmp.ge.f32.partialorder %v975, 0.0
  %vm1244 = vcmp.ge.f32.partialorder %v978, 0.0
  %vm1245 = vcmp.ge.f32.partialorder %v983, 0.0
  %vm1246 = vcmp.ge.f32.partialorder %v990, 0.0
  %vm1247 = vcmp.ge.f32.partialorder %v993, 0.0
  %vm1248 = vcmp.ge.f32.partialorder %v998, 0.0
  %vm1249 = vcmp.ge.f32.partialorder %v1005, 0.0
  %vm1250 = vcmp.ge.f32.partialorder %v1008, 0.0
  %vm1251 = vcmp.ge.f32.partialorder %v1013, 0.0
  %vm1252 = vcmp.ge.f32.partialorder %v1020, 0.0
  %vm1253 = vcmp.ge.f32.partialorder %v1023, 0.0
  %vm1254 = vcmp.ge.f32.partialorder %v1028, 0.0
  %vm1255 = vcmp.ge.f32.partialorder %v1035, 0.0
  %vm1256 = vcmp.ge.f32.partialorder %v1038, 0.0
  %vm1257 = vcmp.ge.f32.partialorder %v1043, 0.0
  %vm1258 = vcmp.ge.f32.partialorder %v1050, 0.0
  %vm1259 = vcmp.ge.f32.partialorder %v1053, 0.0
  %vm1260 = vcmp.ge.f32.partialorder %v1058, 0.0
  %vm1261 = vcmp.ge.f32.partialorder %v1065, 0.0
  %vm1262 = vcmp.ge.f32.partialorder %v1068, 0.0
  %vm1263 = vcmp.ge.f32.partialorder %v1073, 0.0
  %vm1264 = vcmp.ge.f32.partialorder %v1080, 0.0
  %vm1265 = vcmp.ge.f32.partialorder %v1083, 0.0
  %vm1266 = vcmp.ge.f32.partialorder %v1088, 0.0
  %vm1267 = vcmp.ge.f32.partialorder %v1095, 0.0
  %vm1268 = vcmp.ge.f32.partialorder %v1098, 0.0
  %vm1269 = vcmp.ge.f32.partialorder %v1103, 0.0
  %vm1270 = vcmp.ge.f32.partialorder %v1110, 0.0
  %vm1271 = vcmp.ge.f32.partialorder %v1113, 0.0
  %vm1272 = vcmp.ge.f32.partialorder %v1118, 0.0
  %vm1273 = vcmp.ge.f32.partialorder %v1125, 0.0
  %vm1274 = vcmp.ge.f32.partialorder %v1128, 0.0
  %vm1275 = vcmp.ge.f32.partialorder %v1133, 0.0
  %vm1276 = vcmp.ge.f32.partialorder %v1140, 0.0
  %vm1277 = vcmp.ge.f32.partialorder %v1143, 0.0
  %vm1278 = vcmp.ge.f32.partialorder %v1148, 0.0
  %vm1279 = vcmp.ge.f32.partialorder %v1155, 0.0
  %vm1280 = vcmp.ge.f32.partialorder %v1158, 0.0
  %vm1281 = vcmp.ge.f32.partialorder %v1163, 0.0
  %vm1282 = vcmp.ge.f32.partialorder %v1170, 0.0
  %vm1283 = vcmp.ge.f32.partialorder %v1173, 0.0
  %vm1284 = vcmp.ge.f32.partialorder %v1178, 0.0
  %v1285 = vmul.f32 %v723, 0.2
  %v1286 = vmul.f32 %v726, 0.2
  %v1287 = vmul.f32 %v731, 0.2
  %v1288 = vmul.f32 %v738, 0.2
  %v1289 = vmul.f32 %v741, 0.2
  %v1290 = vmul.f32 %v746, 0.2
  %v1291 = vmul.f32 %v753, 0.2
  %v1292 = vmul.f32 %v756, 0.2
  %v1293 = vmul.f32 %v761, 0.2
  %v1294 = vmul.f32 %v768, 0.2
  %v1295 = vmul.f32 %v771, 0.2
  %v1296 = vmul.f32 %v776, 0.2
  %v1297 = vmul.f32 %v783, 0.2
  %v1298 = vmul.f32 %v786, 0.2
  %v1299 = vmul.f32 %v791, 0.2
  %v1300 = vmul.f32 %v798, 0.2
  %v1301 = vmul.f32 %v801, 0.2
  %v1302 = vmul.f32 %v806, 0.2
  %v1303 = vmul.f32 %v813, 0.2
  %v1304 = vmul.f32 %v816, 0.2
  %v1305 = vmul.f32 %v821, 0.2
  %v1306 = vmul.f32 %v828, 0.2
  %v1307 = vmul.f32 %v831, 0.2
  %v1308 = vmul.f32 %v836, 0.2
  %v1309 = vmul.f32 %v843, 0.2
  %v1310 = vmul.f32 %v846, 0.2
  %v1311 = vmul.f32 %v851, 0.2
  %v1312 = vmul.f32 %v858, 0.2
  %v1313 = vmul.f32 %v861, 0.2
  %v1314 = vmul.f32 %v866, 0.2
  %v1315 = vmul.f32 %v873, 0.2
  %v1316 = vmul.f32 %v876, 0.2
  %v1317 = vmul.f32 %v881, 0.2
  %v1318 = vmul.f32 %v888, 0.2
  %v1319 = vmul.f32 %v891, 0.2
  %v1320 = vmul.f32 %v896, 0.2
  %v1321 = vmul.f32 %v903, 0.2
  %v1322 = vmul.f32 %v906, 0.2
  %v1323 = vmul.f32 %v911, 0.2
  %v1324 = vmul.f32 %v918, 0.2
  %v1325 = vmul.f32 %v921, 0.2
  %v1326 = vmul.f32 %v926, 0.2
  %v1327 = vmul.f32 %v933, 0.2
  %v1328 = vmul.f32 %v936, 0.2
  %v1329 = vmul.f32 %v941, 0.2
  %v1330 = vmul.f32 %v960, 0.2
  %v1331 = vmul.f32 %v963, 0.2
  %v1332 = vmul.f32 %v968, 0.2
  %v1333 = vmul.f32 %v975, 0.2
  %v1334 = vmul.f32 %v978, 0.2
  %v1335 = vmul.f32 %v983, 0.2
  %v1336 = vmul.f32 %v990, 0.2
  %v1337 = vmul.f32 %v993, 0.2
  %v1338 = vmul.f32 %v998, 0.2
  %v1339 = vmul.f32 %v1005, 0.2
  %v1340 = vmul.f32 %v1008, 0.2
  %v1341 = vmul.f32 %v1013, 0.2
  %v1342 = vmul.f32 %v1020, 0.2
  %v1343 = vmul.f32 %v1023, 0.2
  %v1344 = vmul.f32 %v1028, 0.2
  %v1345 = vmul.f32 %v1035, 0.2
  %v1346 = vmul.f32 %v1038, 0.2
  %v1347 = vmul.f32 %v1043, 0.2
  %v1348 = vmul.f32 %v1050, 0.2
  %v1349 = vmul.f32 %v1053, 0.2
  %v1350 = vmul.f32 %v1058, 0.2
  %v1351 = vmul.f32 %v1065, 0.2
  %v1352 = vmul.f32 %v1068, 0.2
  %v1353 = vmul.f32 %v1073, 0.2
  %v1354 = vmul.f32 %v1080, 0.2
  %v1355 = vmul.f32 %v1083, 0.2
  %v1356 = vmul.f32 %v1088, 0.2
  %v1357 = vmul.f32 %v1095, 0.2
  %v1358 = vmul.f32 %v1098, 0.2
  %v1359 = vmul.f32 %v1103, 0.2
  %v1360 = vmul.f32 %v1110, 0.2
  %v1361 = vmul.f32 %v1113, 0.2
  %v1362 = vmul.f32 %v1118, 0.2
  %v1363 = vmul.f32 %v1125, 0.2
  %v1364 = vmul.f32 %v1128, 0.2
  %v1365 = vmul.f32 %v1133, 0.2
  %v1366 = vmul.f32 %v1140, 0.2
  %v1367 = vmul.f32 %v1143, 0.2
  %v1368 = vmul.f32 %v1148, 0.2
  %v1369 = vmul.f32 %v1155, 0.2
  %v1370 = vmul.f32 %v1158, 0.2
  %v1371 = vmul.f32 %v1163, 0.2
  %v1372 = vmul.f32 %v1170, 0.2
  %v1373 = vmul.f32 %v1173, 0.2
  %v1374 = vmul.f32 %v1178, 0.2
  %v1375 = vsel %vm1195, %v723, %v1285
  %v1376 = vsel %vm1196, %v726, %v1286
  %v1377 = vsel %vm1197, %v731, %v1287
  %v1378 = vsel %vm1198, %v738, %v1288
  %v1379 = vsel %vm1199, %v741, %v1289
  %v1380 = vsel %vm1200, %v746, %v1290
  %v1381 = vsel %vm1201, %v753, %v1291
  %v1382 = vsel %vm1202, %v756, %v1292
  %v1383 = vsel %vm1203, %v761, %v1293
  %v1384 = vsel %vm1204, %v768, %v1294
  %v1385 = vsel %vm1205, %v771, %v1295
  %v1386 = vsel %vm1206, %v776, %v1296
  %v1387 = vsel %vm1207, %v783, %v1297
  %v1388 = vsel %vm1208, %v786, %v1298
  %v1389 = vsel %vm1209, %v791, %v1299
  %v1390 = vsel %vm1210, %v798, %v1300
  %v1391 = vsel %vm1211, %v801, %v1301
  %v1392 = vsel %vm1212, %v806, %v1302
  %v1393 = vsel %vm1213, %v813, %v1303
  %v1394 = vsel %vm1214, %v816, %v1304
  %v1395 = vsel %vm1215, %v821, %v1305
  %v1396 = vsel %vm1216, %v828, %v1306
  %v1397 = vsel %vm1217, %v831, %v1307
  %v1398 = vsel %vm1218, %v836, %v1308
  %v1399 = vsel %vm1219, %v843, %v1309
  %v1400 = vsel %vm1220, %v846, %v1310
  %v1401 = vsel %vm1221, %v851, %v1311
  %v1402 = vsel %vm1222, %v858, %v1312
  %v1403 = vsel %vm1223, %v861, %v1313
  %v1404 = vsel %vm1224, %v866, %v1314
  %v1405 = vsel %vm1225, %v873, %v1315
  %v1406 = vsel %vm1226, %v876, %v1316
  %v1407 = vsel %vm1227, %v881, %v1317
  %v1408 = vsel %vm1228, %v888, %v1318
  %v1409 = vsel %vm1229, %v891, %v1319
  %v1410 = vsel %vm1230, %v896, %v1320
  %v1411 = vsel %vm1231, %v903, %v1321
  %v1412 = vsel %vm1232, %v906, %v1322
  %v1413 = vsel %vm1233, %v911, %v1323
  %v1414 = vsel %vm1234, %v918, %v1324
  %v1415 = vsel %vm1235, %v921, %v1325
  %v1416 = vsel %vm1236, %v926, %v1326
  %v1417 = vsel %vm1237, %v933, %v1327
  %v1418 = vsel %vm1238, %v936, %v1328
  %v1419 = vsel %vm1239, %v941, %v1329
  %v1420 = vsel %vm1240, %v960, %v1330
  %v1421 = vsel %vm1241, %v963, %v1331
  %v1422 = vsel %vm1242, %v968, %v1332
  %v1423 = vsel %vm1243, %v975, %v1333
  %v1424 = vsel %vm1244, %v978, %v1334
  %v1425 = vsel %vm1245, %v983, %v1335
  %v1426 = vsel %vm1246, %v990, %v1336
  %v1427 = vsel %vm1247, %v993, %v1337
  %v1428 = vsel %vm1248, %v998, %v1338
  %v1429 = vsel %vm1249, %v1005, %v1339
  %v1430 = vsel %vm1250, %v1008, %v1340
  %v1431 = vsel %vm1251, %v1013, %v1341
  %v1432 = vsel %vm1252, %v1020, %v1342
  %v1433 = vsel %vm1253, %v1023, %v1343
  %v1434 = vsel %vm1254, %v1028, %v1344
  %v1435 = vsel %vm1255, %v1035, %v1345
  %v1436 = vsel %vm1256, %v1038, %v1346
  %v1437 = vsel %vm1257, %v1043, %v1347
  %v1438 = vsel %vm1258, %v1050, %v1348
  %v1439 = vsel %vm1259, %v1053, %v1349
  %v1440 = vsel %vm1260, %v1058, %v1350
  %v1441 = vsel %vm1261, %v1065, %v1351
  %v1442 = vsel %vm1262, %v1068, %v1352
  %v1443 = vsel %vm1263, %v1073, %v1353
  %v1444 = vsel %vm1264, %v1080, %v1354
  %v1445 = vsel %vm1265, %v1083, %v1355
  %v1446 = vsel %vm1266, %v1088, %v1356
  %v1447 = vsel %vm1267, %v1095, %v1357
  %v1448 = vsel %vm1268, %v1098, %v1358
  %v1449 = vsel %vm1269, %v1103, %v1359
  %v1450 = vsel %vm1270, %v1110, %v1360
  %v1451 = vsel %vm1271, %v1113, %v1361
  %v1452 = vsel %vm1272, %v1118, %v1362
  %v1453 = vsel %vm1273, %v1125, %v1363
  %v1454 = vsel %vm1274, %v1128, %v1364
  %v1455 = vsel %vm1275, %v1133, %v1365
  %v1456 = vsel %vm1276, %v1140, %v1366
  %v1457 = vsel %vm1277, %v1143, %v1367
  %v1458 = vsel %vm1278, %v1148, %v1368
  %v1459 = vsel %vm1279, %v1155, %v1369
  %v1460 = vsel %vm1280, %v1158, %v1370
  %v1461 = vsel %vm1281, %v1163, %v1371
  %v1462 = vsel %vm1282, %v1170, %v1372
  %v1463 = vsel %vm1283, %v1173, %v1373
  %v1464 = vsel %vm1284, %v1178, %v1374
  %1479 = vrot.lane.b32.xlu0 %v1377, 64
  %v1480 = vpop.permute.xlu0 %1479
  %1481 = vrot.lane.b32.xlu0 %v1380, 64
  %v1482 = vpop.permute.xlu0 %1481
  %1483 = vrot.lane.b32.xlu0 %v1383, 64
  %v1484 = vpop.permute.xlu0 %1483
  %1485 = vrot.lane.b32.xlu0 %v1386, 64
  %v1486 = vpop.permute.xlu0 %1485
  %1487 = vrot.lane.b32.xlu0 %v1389, 64
  %v1488 = vpop.permute.xlu0 %1487
  %1489 = vrot.lane.b32.xlu0 %v1392, 64
  %v1490 = vpop.permute.xlu0 %1489
  %1491 = vrot.lane.b32.xlu0 %v1395, 64
  %v1492 = vpop.permute.xlu0 %1491
  %1493 = vrot.lane.b32.xlu0 %v1422, 64
  %v1494 = vpop.permute.xlu0 %1493
  %1495 = vrot.lane.b32.xlu0 %v1425, 64
  %v1496 = vpop.permute.xlu0 %1495
  %1497 = vrot.lane.b32.xlu0 %v1428, 64
  %v1498 = vpop.permute.xlu0 %1497
  %1499 = vrot.lane.b32.xlu0 %v1431, 64
  %v1500 = vpop.permute.xlu0 %1499
  %1501 = vrot.lane.b32.xlu0 %v1434, 64
  %v1502 = vpop.permute.xlu0 %1501
  %1503 = vrot.lane.b32.xlu0 %v1437, 64
  %v1504 = vpop.permute.xlu0 %1503
  %1505 = vrot.lane.b32.xlu0 %v1440, 64
  %v1506 = vpop.permute.xlu0 %1505
  %vm1549 = vcmask 1046528
  %v1550 = vrot.slane %v1375, 1
  %v1551 = vrot.slane %v1376, 1
  %v1552 = vsel %vm1549, %v1550, %v1551
  %v1553 = vrot.slane %v1378, 1
  %v1554 = vrot.slane %v1379, 1
  %v1555 = vsel %vm1549, %v1553, %v1554
  %v1556 = vrot.slane %v1381, 1
  %v1557 = vrot.slane %v1382, 1
  %v1558 = vsel %vm1549, %v1556, %v1557
  %v1559 = vrot.slane %v1384, 1
  %v1560 = vrot.slane %v1385, 1
  %v1561 = vsel %vm1549, %v1559, %v1560
  %v1562 = vrot.slane %v1387, 1
  %v1563 = vrot.slane %v1388, 1
  %v1564 = vsel %vm1549, %v1562, %v1563
  %v1565 = vrot.slane %v1390, 1
  %v1566 = vrot.slane %v1391, 1
  %v1567 = vsel %vm1549, %v1565, %v1566
  %v1568 = vrot.slane %v1393, 1
  %v1569 = vrot.slane %v1394, 1
  %v1570 = vsel %vm1549, %v1568, %v1569
  %v1571 = vrot.slane %v1420, 1
  %v1572 = vrot.slane %v1421, 1
  %v1573 = vsel %vm1549, %v1571, %v1572
  %v1574 = vrot.slane %v1423, 1
  %v1575 = vrot.slane %v1424, 1
  %v1576 = vsel %vm1549, %v1574, %v1575
  %v1577 = vrot.slane %v1426, 1
  %v1578 = vrot.slane %v1427, 1
  %v1579 = vsel %vm1549, %v1577, %v1578
  %v1580 = vrot.slane %v1429, 1
  %v1581 = vrot.slane %v1430, 1
  %v1582 = vsel %vm1549, %v1580, %v1581
  %v1583 = vrot.slane %v1432, 1
  %v1584 = vrot.slane %v1433, 1
  %v1585 = vsel %vm1549, %v1583, %v1584
  %v1586 = vrot.slane %v1435, 1
  %v1587 = vrot.slane %v1436, 1
  %v1588 = vsel %vm1549, %v1586, %v1587
  %v1589 = vrot.slane %v1438, 1
  %v1590 = vrot.slane %v1439, 1
  %v1591 = vsel %vm1549, %v1589, %v1590
  %1620 = vrot.lane.b32.xlu0 %v1399, 64
  %v1621 = vpop.permute.xlu0 %1620
  %1622 = vrot.lane.b32.xlu0 %v1402, 64
  %v1623 = vpop.permute.xlu0 %1622
  %1624 = vrot.lane.b32.xlu0 %v1405, 64
  %v1625 = vpop.permute.xlu0 %1624
  %1626 = vrot.lane.b32.xlu0 %v1408, 64
  %v1627 = vpop.permute.xlu0 %1626
  %1628 = vrot.lane.b32.xlu0 %v1411, 64
  %v1629 = vpop.permute.xlu0 %1628
  %1630 = vrot.lane.b32.xlu0 %v1414, 64
  %v1631 = vpop.permute.xlu0 %1630
  %1632 = vrot.lane.b32.xlu0 %v1417, 64
  %v1633 = vpop.permute.xlu0 %1632
  %1634 = vrot.lane.b32.xlu0 %v1444, 64
  %v1635 = vpop.permute.xlu0 %1634
  %1636 = vrot.lane.b32.xlu0 %v1447, 64
  %v1637 = vpop.permute.xlu0 %1636
  %1638 = vrot.lane.b32.xlu0 %v1450, 64
  %v1639 = vpop.permute.xlu0 %1638
  %1640 = vrot.lane.b32.xlu0 %v1453, 64
  %v1641 = vpop.permute.xlu0 %1640
  %1642 = vrot.lane.b32.xlu0 %v1456, 64
  %v1643 = vpop.permute.xlu0 %1642
  %1644 = vrot.lane.b32.xlu0 %v1459, 64
  %v1645 = vpop.permute.xlu0 %1644
  %1646 = vrot.lane.b32.xlu0 %v1462, 64
  %v1647 = vpop.permute.xlu0 %1646
  %v1676 = vrot.slane %v1399, 1
  %v1677 = vrot.slane %v1400, 1
  %v1678 = vsel %vm1549, %v1676, %v1677
  %v1679 = vrot.slane %v1402, 1
  %v1680 = vrot.slane %v1403, 1
  %v1681 = vsel %vm1549, %v1679, %v1680
  %v1682 = vrot.slane %v1405, 1
  %v1683 = vrot.slane %v1406, 1
  %v1684 = vsel %vm1549, %v1682, %v1683
  %v1685 = vrot.slane %v1408, 1
  %v1686 = vrot.slane %v1409, 1
  %v1687 = vsel %vm1549, %v1685, %v1686
  %v1688 = vrot.slane %v1411, 1
  %v1689 = vrot.slane %v1412, 1
  %v1690 = vsel %vm1549, %v1688, %v1689
  %v1691 = vrot.slane %v1414, 1
  %v1692 = vrot.slane %v1415, 1
  %v1693 = vsel %vm1549, %v1691, %v1692
  %v1694 = vrot.slane %v1417, 1
  %v1695 = vrot.slane %v1418, 1
  %v1696 = vsel %vm1549, %v1694, %v1695
  %v1697 = vrot.slane %v1444, 1
  %v1698 = vrot.slane %v1445, 1
  %v1699 = vsel %vm1549, %v1697, %v1698
  %v1700 = vrot.slane %v1447, 1
  %v1701 = vrot.slane %v1448, 1
  %v1702 = vsel %vm1549, %v1700, %v1701
  %v1703 = vrot.slane %v1450, 1
  %v1704 = vrot.slane %v1451, 1
  %v1705 = vsel %vm1549, %v1703, %v1704
  %v1706 = vrot.slane %v1453, 1
  %v1707 = vrot.slane %v1454, 1
  %v1708 = vsel %vm1549, %v1706, %v1707
  %v1709 = vrot.slane %v1456, 1
  %v1710 = vrot.slane %v1457, 1
  %v1711 = vsel %vm1549, %v1709, %v1710
  %v1712 = vrot.slane %v1459, 1
  %v1713 = vrot.slane %v1460, 1
  %v1714 = vsel %vm1549, %v1712, %v1713
  %v1715 = vrot.slane %v1462, 1
  %v1716 = vrot.slane %v1463, 1
  %v1717 = vsel %vm1549, %v1715, %v1716
  %1718 = vrot.lane.b32.xlu0 %v1678, 64
  %v1719 = vpop.permute.xlu0 %1718
  %1720 = vrot.lane.b32.xlu0 %v1681, 64
  %v1721 = vpop.permute.xlu0 %1720
  %1722 = vrot.lane.b32.xlu0 %v1684, 64
  %v1723 = vpop.permute.xlu0 %1722
  %1724 = vrot.lane.b32.xlu0 %v1687, 64
  %v1725 = vpop.permute.xlu0 %1724
  %1726 = vrot.lane.b32.xlu0 %v1690, 64
  %v1727 = vpop.permute.xlu0 %1726
  %1728 = vrot.lane.b32.xlu0 %v1693, 64
  %v1729 = vpop.permute.xlu0 %1728
  %1730 = vrot.lane.b32.xlu0 %v1696, 64
  %v1731 = vpop.permute.xlu0 %1730
  %1732 = vrot.lane.b32.xlu0 %v1699, 64
  %v1733 = vpop.permute.xlu0 %1732
  %1734 = vrot.lane.b32.xlu0 %v1702, 64
  %v1735 = vpop.permute.xlu0 %1734
  %1736 = vrot.lane.b32.xlu0 %v1705, 64
  %v1737 = vpop.permute.xlu0 %1736
  %1738 = vrot.lane.b32.xlu0 %v1708, 64
  %v1739 = vpop.permute.xlu0 %1738
  %1740 = vrot.lane.b32.xlu0 %v1711, 64
  %v1741 = vpop.permute.xlu0 %1740
  %1742 = vrot.lane.b32.xlu0 %v1714, 64
  %v1743 = vpop.permute.xlu0 %1742
  %1744 = vrot.lane.b32.xlu0 %v1717, 64
  %v1745 = vpop.permute.xlu0 %1744
  %1762 = vrot.lane.b32.xlu0 %v1398, 64
  %v1763 = vpop.permute.xlu0 %1762
  %1764 = vrot.lane.b32.xlu0 %v1443, 64
  %v1765 = vpop.permute.xlu0 %1764
  %v1772 = vrot.slane %v1396, 1
  %v1773 = vrot.slane %v1397, 1
  %v1774 = vsel %vm1549, %v1772, %v1773
  %v1775 = vrot.slane %v1441, 1
  %v1776 = vrot.slane %v1442, 1
  %v1777 = vsel %vm1549, %v1775, %v1776
  %vm1780 = vcmask 523264
  %v1781 = vsel %vm1780, %v1375, %v1480
  %v1782 = vsel %vm1780, %v1378, %v1482
  %v1783 = vsel %vm1780, %v1381, %v1484
  %v1784 = vsel %vm1780, %v1384, %v1486
  %v1785 = vsel %vm1780, %v1387, %v1488
  %v1786 = vsel %vm1780, %v1390, %v1490
  %v1787 = vsel %vm1780, %v1393, %v1492
  %v1788 = vsel %vm1780, %v1420, %v1494
  %v1789 = vsel %vm1780, %v1423, %v1496
  %v1790 = vsel %vm1780, %v1426, %v1498
  %v1791 = vsel %vm1780, %v1429, %v1500
  %v1792 = vsel %vm1780, %v1432, %v1502
  %v1793 = vsel %vm1780, %v1435, %v1504
  %v1794 = vsel %vm1780, %v1438, %v1506
  %v1795 = vsel %vm1780, %v1552, %v1621
  %v1796 = vsel %vm1780, %v1555, %v1623
  %v1797 = vsel %vm1780, %v1558, %v1625
  %v1798 = vsel %vm1780, %v1561, %v1627
  %v1799 = vsel %vm1780, %v1564, %v1629
  %v1800 = vsel %vm1780, %v1567, %v1631
  %v1801 = vsel %vm1780, %v1570, %v1633
  %v1802 = vsel %vm1780, %v1573, %v1635
  %v1803 = vsel %vm1780, %v1576, %v1637
  %v1804 = vsel %vm1780, %v1579, %v1639
  %v1805 = vsel %vm1780, %v1582, %v1641
  %v1806 = vsel %vm1780, %v1585, %v1643
  %v1807 = vsel %vm1780, %v1588, %v1645
  %v1808 = vsel %vm1780, %v1591, %v1647
  %v1809 = vsel %vm1780, %v1401, %v1719
  %v1810 = vsel %vm1780, %v1404, %v1721
  %v1811 = vsel %vm1780, %v1407, %v1723
  %v1812 = vsel %vm1780, %v1410, %v1725
  %v1813 = vsel %vm1780, %v1413, %v1727
  %v1814 = vsel %vm1780, %v1416, %v1729
  %v1815 = vsel %vm1780, %v1419, %v1731
  %v1816 = vsel %vm1780, %v1446, %v1733
  %v1817 = vsel %vm1780, %v1449, %v1735
  %v1818 = vsel %vm1780, %v1452, %v1737
  %v1819 = vsel %vm1780, %v1455, %v1739
  %v1820 = vsel %vm1780, %v1458, %v1741
  %v1821 = vsel %vm1780, %v1461, %v1743
  %v1822 = vsel %vm1780, %v1464, %v1745
  %v1823 = vsel %vm1780, %v1396, %v1763
  %v1824 = vsel %vm1780, %v1441, %v1765
  %v1825 = vpack.c.bf16 %v1782, %v1781
  %v1826 = vpack.c.bf16 %v1796, %v1795
  %v1827 = vpack.c.bf16 %v1810, %v1809
  %v1828 = vpack.c.bf16 %v1783, %v1782
  %v1829 = vpack.c.bf16 %v1558, %v1555
  %v1830 = vpack.c.bf16 %v1784, %v1783
  %v1831 = vpack.c.bf16 %v1798, %v1797
  %v1832 = vpack.c.bf16 %v1812, %v1811
  %v1833 = vpack.c.bf16 %v1785, %v1784
  %v1834 = vpack.c.bf16 %v1564, %v1561
  %v1835 = vpack.c.bf16 %v1786, %v1785
  %v1836 = vpack.c.bf16 %v1800, %v1799
  %v1837 = vpack.c.bf16 %v1814, %v1813
  %v1838 = vpack.c.bf16 %v1787, %v1786
  %v1839 = vpack.c.bf16 %v1570, %v1567
  %v1840 = vpack.c.bf16 %v1788, %v1787
  %v1841 = vpack.c.bf16 %v1802, %v1801
  %v1842 = vpack.c.bf16 %v1816, %v1815
  %v1843 = vpack.c.bf16 %v1789, %v1823
  %v1844 = vpack.c.bf16 %v1576, %v1774
  %v1845 = vpack.c.bf16 %v1790, %v1789
  %v1846 = vpack.c.bf16 %v1804, %v1803
  %v1847 = vpack.c.bf16 %v1818, %v1817
  %v1848 = vpack.c.bf16 %v1791, %v1790
  %v1849 = vpack.c.bf16 %v1582, %v1579
  %v1850 = vpack.c.bf16 %v1792, %v1791
  %v1851 = vpack.c.bf16 %v1806, %v1805
  %v1852 = vpack.c.bf16 %v1820, %v1819
  %v1853 = vpack.c.bf16 %v1793, %v1792
  %v1854 = vpack.c.bf16 %v1588, %v1585
  %v1855 = vpack.c.bf16 %v1794, %v1793
  %v1856 = vpack.c.bf16 %v1808, %v1807
  %v1857 = vpack.c.bf16 %v1822, %v1821
  %v1858 = vpack.c.bf16 %v1824, %v1794
  %v1859 = vpack.c.bf16 %v1777, %v1591
  %v1860 = vld [vmem:[%s2] sm:$0xf]
  %v1861 = vld [vmem:[%s2 + $0x4] sm:$0xf]
  %v1862 = vld [vmem:[%s2 + $0x8] sm:$0xf]
  %v1863 = vld [vmem:[%s2 + $0xc] sm:$0xf]
  %v1864 = vld [vmem:[%s2 + $0x10] sm:$0xf]
  %v1865 = vld [vmem:[%s2 + $0x14] sm:$0xf]
  %v1866 = vld [vmem:[%s2 + $0x18] sm:$0xf]
  %v1867 = vld [vmem:[%s2 + $0x1c] sm:$0xf]
  %v1868 = vld [vmem:[%s2 + $0x20] sm:$0xf]
  %v1869 = vld [vmem:[%s2 + $0x24] sm:$0xf]
  %v1870 = vld [vmem:[%s2 + $0x28] sm:$0xf]
  %v1871 = vld [vmem:[%s2 + $0x2c] sm:$0xf]
  %v1872 = vld [vmem:[%s2 + $0x30] sm:$0xf]
  %v1873 = vld [vmem:[%s2 + $0x34] sm:$0xf]
  %v1874 = vld [vmem:[%s2 + $0x38] sm:$0xf]
  %v1875 = vld [vmem:[%s2 + $0x3c] sm:$0xf]
  %v1876 = vld [vmem:[%s2 + $0x40] sm:$0xf]
  %v1877 = vld [vmem:[%s2 + $0x44] sm:$0xf]
  %v1878 = vld [vmem:[%s2 + $0x48] sm:$0xf]
  %v1879 = vld [vmem:[%s2 + $0x4c] sm:$0xf]
  %v1880 = vld [vmem:[%s2 + $0x50] sm:$0xf]
  %v1881 = vld [vmem:[%s2 + $0x54] sm:$0xf]
  %v1882 = vld [vmem:[%s2 + $0x58] sm:$0xf]
  %v1883 = vld [vmem:[%s2 + $0x5c] sm:$0xf]
  %v1884 = vld [vmem:[%s2 + $0x60] sm:$0xf]
  %v1885 = vld [vmem:[%s2 + $0x64] sm:$0xf]
  %v1886 = vld [vmem:[%s2 + $0x68] sm:$0xf]
  %v1887 = vld [vmem:[%s2 + $0x6c] sm:$0xf]
  %v1888 = vld [vmem:[%s2 + $0x70] sm:$0xf]
  %v1889 = vld [vmem:[%s2 + $0x74] sm:$0xf]
  %v1890 = vld [vmem:[%s2 + $0x78] sm:$0xf]
  %v1891 = vld [vmem:[%s2 + $0x7c] sm:$0xf]
  %v1892 = vld [vmem:[%s2 + $0x80] sm:$0xf]
  %v1893 = vld [vmem:[%s2 + $0x84] sm:$0xf]
  %v1894 = vld [vmem:[%s2 + $0x88] sm:$0xf]
  %v1895 = vld [vmem:[%s2 + $0x8c] sm:$0xf]
  %v1896 = vld [vmem:[%s2 + $0x90] sm:$0xf]
  %v1897 = vld [vmem:[%s2 + $0x94] sm:$0xf]
  %v1898 = vld [vmem:[%s2 + $0x98] sm:$0xf]
  %v1899 = vld [vmem:[%s2 + $0x9c] sm:$0xf]
  %v1900 = vld [vmem:[%s2 + $0xa0] sm:$0xf]
  %v1901 = vld [vmem:[%s2 + $0xa4] sm:$0xf]
  %v1902 = vld [vmem:[%s2 + $0xa8] sm:$0xf]
  %v1903 = vld [vmem:[%s2 + $0xac] sm:$0xf]
  %v1904 = vld [vmem:[%s2 + $0xb0] sm:$0xf]
  %v1905 = vld [vmem:[%s2 + $0xb4] sm:$0xf]
  %v1906 = vld [vmem:[%s2 + $0xb8] sm:$0xf]
  %v1907 = vld [vmem:[%s2 + $0xbc] sm:$0xf]
  %v1908 = vld [vmem:[%s2 + $0xc0] sm:$0xf]
  %v1909 = vld [vmem:[%s2 + $0xc4] sm:$0xf]
  %v1910 = vld [vmem:[%s2 + $0xc8] sm:$0xf]
  %v1911 = vld [vmem:[%s2 + $0xcc] sm:$0xf]
  %v1912 = vld [vmem:[%s2 + $0xd0] sm:$0xf]
  %v1913 = vld [vmem:[%s2 + $0xd4] sm:$0xf]
  %v1914 = vld [vmem:[%s2 + $0xd8] sm:$0xf]
  %v1915 = vld [vmem:[%s2 + $0xdc] sm:$0xf]
  %v1916 = vld [vmem:[%s2 + $0xe0] sm:$0xf]
  %v1917 = vld [vmem:[%s2 + $0xe4] sm:$0xf]
  %v1918 = vld [vmem:[%s2 + $0xe8] sm:$0xf]
  %v1919 = vld [vmem:[%s2 + $0xec] sm:$0xf]
  %v1920 = vld [vmem:[%s2 + $0xf0] sm:$0xf]
  %v1921 = vld [vmem:[%s2 + $0xf4] sm:$0xf]
  %v1922 = vld [vmem:[%s2 + $0xf8] sm:$0xf]
  %v1923 = vld [vmem:[%s2 + $0xfc] sm:$0xf]
  %v1924 = vld [vmem:[%s2 + $0x100] sm:$0xf]
  %v1925 = vld [vmem:[%s2 + $0x104] sm:$0xf]
  %v1926 = vld [vmem:[%s2 + $0x108] sm:$0xf]
  %v1927 = vld [vmem:[%s2 + $0x10c] sm:$0xf]
  %v1928 = vld [vmem:[%s2 + $0x110] sm:$0xf]
  %v1929 = vld [vmem:[%s2 + $0x114] sm:$0xf]
  %v1930 = vld [vmem:[%s2 + $0x118] sm:$0xf]
  %v1931 = vld [vmem:[%s2 + $0x11c] sm:$0xf]
  %v2004 = vunpack.c.l.b16 %v1860
  %v2005 = vunpack.c.l.b16 %v1861
  %v2006 = vunpack.c.l.b16 %v1862
  %v2007 = vunpack.c.l.b16 %v1863
  %v2008 = vunpack.c.l.b16 %v1864
  %v2009 = vunpack.c.l.b16 %v1865
  %v2010 = vunpack.c.l.b16 %v1866
  %v2011 = vunpack.c.l.b16 %v1867
  %v2012 = vunpack.c.l.b16 %v1868
  %v2013 = vunpack.c.l.b16 %v1869
  %v2014 = vunpack.c.l.b16 %v1870
  %v2015 = vunpack.c.l.b16 %v1871
  %v2016 = vunpack.c.l.b16 %v1872
  %v2017 = vunpack.c.l.b16 %v1873
  %v2018 = vunpack.c.l.b16 %v1874
  %v2019 = vunpack.c.l.b16 %v1875
  %v2020 = vunpack.c.l.b16 %v1876
  %v2021 = vunpack.c.l.b16 %v1877
  %v2022 = vunpack.c.l.b16 %v1878
  %v2023 = vunpack.c.l.b16 %v1879
  %v2024 = vunpack.c.l.b16 %v1880
  %v2025 = vunpack.c.l.b16 %v1881
  %v2026 = vunpack.c.l.b16 %v1882
  %v2027 = vunpack.c.l.b16 %v1883
  %v2028 = vunpack.c.l.b16 %v1884
  %v2029 = vunpack.c.l.b16 %v1885
  %v2030 = vunpack.c.l.b16 %v1886
  %v2031 = vunpack.c.l.b16 %v1887
  %v2032 = vunpack.c.l.b16 %v1888
  %v2033 = vunpack.c.l.b16 %v1889
  %v2034 = vunpack.c.l.b16 %v1890
  %v2035 = vunpack.c.l.b16 %v1891
  %v2036 = vunpack.c.l.b16 %v1892
  %v2037 = vunpack.c.l.b16 %v1893
  %v2038 = vunpack.c.l.b16 %v1894
  %v2039 = vunpack.c.l.b16 %v1895
  %v2040 = vunpack.c.l.b16 %v1896
  %v2041 = vunpack.c.l.b16 %v1897
  %v2042 = vunpack.c.l.b16 %v1898
  %v2043 = vunpack.c.l.b16 %v1899
  %v2044 = vunpack.c.l.b16 %v1900
  %v2045 = vunpack.c.l.b16 %v1901
  %v2046 = vunpack.c.l.b16 %v1902
  %v2047 = vunpack.c.l.b16 %v1903
  %v2048 = vunpack.c.l.b16 %v1904
  %v2049 = vunpack.c.l.b16 %v1905
  %v2050 = vunpack.c.l.b16 %v1906
  %v2051 = vunpack.c.l.b16 %v1907
  %v2052 = vunpack.c.l.b16 %v1908
  %v2053 = vunpack.c.l.b16 %v1909
  %v2054 = vunpack.c.l.b16 %v1910
  %v2055 = vunpack.c.l.b16 %v1911
  %v2056 = vunpack.c.l.b16 %v1912
  %v2057 = vunpack.c.l.b16 %v1913
  %v2058 = vunpack.c.l.b16 %v1914
  %v2059 = vunpack.c.l.b16 %v1915
  %v2060 = vunpack.c.l.b16 %v1916
  %v2061 = vunpack.c.l.b16 %v1917
  %v2062 = vunpack.c.l.b16 %v1918
  %v2063 = vunpack.c.l.b16 %v1919
  %v2064 = vunpack.c.l.b16 %v1920
  %v2065 = vunpack.c.l.b16 %v1921
  %v2066 = vunpack.c.l.b16 %v1922
  %v2067 = vunpack.c.l.b16 %v1923
  %v2068 = vunpack.c.l.b16 %v1924
  %v2069 = vunpack.c.l.b16 %v1925
  %v2070 = vunpack.c.l.b16 %v1926
  %v2071 = vunpack.c.l.b16 %v1927
  %v2072 = vunpack.c.l.b16 %v1928
  %v2073 = vunpack.c.l.b16 %v1929
  %v2074 = vunpack.c.l.b16 %v1930
  %v2075 = vunpack.c.l.b16 %v1931
  %v2076 = vpack.c.b16 %v2005, %v2004
  %v2077 = vpack.c.b16 %v2007, %v2006
  %v2078 = vpack.c.b16 %v2009, %v2008
  %v2079 = vpack.c.b16 %v2011, %v2010
  %v2080 = vpack.c.b16 %v2013, %v2012
  %v2081 = vpack.c.b16 %v2015, %v2014
  %v2082 = vpack.c.b16 %v2017, %v2016
  %v2083 = vpack.c.b16 %v2019, %v2018
  %v2084 = vpack.c.b16 %v2021, %v2020
  %v2085 = vpack.c.b16 %v2023, %v2022
  %v2086 = vpack.c.b16 %v2025, %v2024
  %v2087 = vpack.c.b16 %v2027, %v2026
  %v2088 = vpack.c.b16 %v2029, %v2028
  %v2089 = vpack.c.b16 %v2031, %v2030
  %v2090 = vpack.c.b16 %v2033, %v2032
  %v2091 = vpack.c.b16 %v2035, %v2034
  %v2092 = vpack.c.b16 %v2037, %v2036
  %v2093 = vpack.c.b16 %v2039, %v2038
  %v2094 = vpack.c.b16 %v2041, %v2040
  %v2095 = vpack.c.b16 %v2043, %v2042
  %v2096 = vpack.c.b16 %v2045, %v2044
  %v2097 = vpack.c.b16 %v2047, %v2046
  %v2098 = vpack.c.b16 %v2049, %v2048
  %v2099 = vpack.c.b16 %v2051, %v2050
  %v2100 = vpack.c.b16 %v2053, %v2052
  %v2101 = vpack.c.b16 %v2055, %v2054
  %v2102 = vpack.c.b16 %v2057, %v2056
  %v2103 = vpack.c.b16 %v2059, %v2058
  %v2104 = vpack.c.b16 %v2061, %v2060
  %v2105 = vpack.c.b16 %v2063, %v2062
  %v2106 = vpack.c.b16 %v2065, %v2064
  %v2107 = vpack.c.b16 %v2067, %v2066
  %v2108 = vpack.c.b16 %v2069, %v2068
  %v2109 = vpack.c.b16 %v2071, %v2070
  %v2110 = vpack.c.b16 %v2073, %v2072
  %v2111 = vpack.c.b16 %v2075, %v2074
  %v2149 = vsel %vm1780, %v1829, 0
  %v2152 = vsel %vm1780, %v1834, 0
  %v2155 = vsel %vm1780, %v1839, 0
  %v2158 = vsel %vm1780, %v1844, 0
  %v2161 = vsel %vm1780, %v1849, 0
  %v2164 = vsel %vm1780, %v1854, 0
  %v2167 = vsel %vm1780, %v1859, 0
  %2169 = vmatprep.subr.bf16.mxu0 0
  %2170 = vmatpush1.bf16.msra.mxu0 %v2083
  %2171 = vmatprep.subr.bf16.mxu0 0
  %2172 = vmatpush1.bf16.msra.mxu0 %v2082
  %2173 = vmatprep.subr.bf16.mxu0 0
  %2174 = vmatpush1.bf16.msra.mxu0 %v2081
  %2175 = vmatprep.subr.bf16.mxu0 0
  %2176 = vmatpush1.bf16.msra.mxu0 %v2080
  %2177 = vmatprep.subr.bf16.mxu0 0
  %2178 = vmatpush1.bf16.msra.mxu0 %v2079
  %2179 = vmatprep.subr.bf16.mxu0 0
  %2180 = vmatpush1.bf16.msra.mxu0 %v2078
  %2181 = vmatprep.subr.bf16.mxu0 0
  %2182 = vmatpush1.bf16.msra.mxu0 %v2077
  %2183 = vmatprep.subr.bf16.mxu0 0
  %2184 = vmatpush1.bf16.msra.mxu0 %v2076
  %2185 = vmatprep.subr.bf16.mxu0 0
  %2186 = vmatpush2.bf16.msra.mxu0 %v2091
  %2187 = vmatprep.subr.bf16.mxu0 0
  %2188 = vmatpush2.bf16.msra.mxu0 %v2090
  %2189 = vmatprep.subr.bf16.mxu0 0
  %2190 = vmatpush2.bf16.msra.mxu0 %v2089
  %2191 = vmatprep.subr.bf16.mxu0 0
  %2192 = vmatpush2.bf16.msra.mxu0 %v2088
  %2193 = vmatprep.subr.bf16.mxu0 0
  %2194 = vmatpush2.bf16.msra.mxu0 %v2087
  %2195 = vmatprep.subr.bf16.mxu0 0
  %2196 = vmatpush2.bf16.msra.mxu0 %v2086
  %2197 = vmatprep.subr.bf16.mxu0 0
  %2198 = vmatpush2.bf16.msra.mxu0 %v2085
  %2199 = vmatprep.subr.bf16.mxu0 0
  %2200 = vmatpush2.bf16.msra.mxu0 %v2084
  %2201 = vmatprep.mubr.bf16.mxu0 %v1826
  %2202 = vmatmul.mubr.bf16.gmra.mxu0 %v1825
  %v2203 = vpop.f32.mrf.mxu0
  %v2204 = vadd.f32 0.0, %v2203
  %v2205 = vpop.f32.mrf.mxu0
  %v2206 = vpop.f32.mrf.mxu0
  %v2207 = vadd.f32 0.0, %v2206
  %v2208 = vpop.f32.mrf.mxu0
  %2209 = vmatprep.mubr.bf16.mxu0 %v1831
  %2210 = vmatmul.mubr.bf16.gmra.mxu0 %v1830
  %v2211 = vpop.f32.mrf.mxu0
  %v2212 = vadd.f32 0.0, %v2211
  %v2213 = vpop.f32.mrf.mxu0
  %v2214 = vpop.f32.mrf.mxu0
  %v2215 = vadd.f32 0.0, %v2214
  %v2216 = vpop.f32.mrf.mxu0
  %2217 = vmatprep.mubr.bf16.mxu0 %v1836
  %2218 = vmatmul.mubr.bf16.gmra.mxu0 %v1835
  %v2219 = vpop.f32.mrf.mxu0
  %v2220 = vadd.f32 0.0, %v2219
  %v2221 = vpop.f32.mrf.mxu0
  %v2222 = vpop.f32.mrf.mxu0
  %v2223 = vadd.f32 0.0, %v2222
  %v2224 = vpop.f32.mrf.mxu0
  %2225 = vmatprep.mubr.bf16.mxu0 %v1841
  %2226 = vmatmul.mubr.bf16.gmra.mxu0 %v1840
  %v2227 = vpop.f32.mrf.mxu0
  %v2228 = vadd.f32 0.0, %v2227
  %v2229 = vpop.f32.mrf.mxu0
  %v2230 = vpop.f32.mrf.mxu0
  %v2231 = vadd.f32 0.0, %v2230
  %v2232 = vpop.f32.mrf.mxu0
  %2233 = vmatprep.mubr.bf16.mxu0 %v1846
  %2234 = vmatmul.mubr.bf16.gmra.mxu0 %v1845
  %v2235 = vpop.f32.mrf.mxu0
  %v2236 = vadd.f32 0.0, %v2235
  %v2237 = vpop.f32.mrf.mxu0
  %v2238 = vpop.f32.mrf.mxu0
  %v2239 = vadd.f32 0.0, %v2238
  %v2240 = vpop.f32.mrf.mxu0
  %2241 = vmatprep.mubr.bf16.mxu0 %v1851
  %2242 = vmatmul.mubr.bf16.gmra.mxu0 %v1850
  %v2243 = vpop.f32.mrf.mxu0
  %v2244 = vadd.f32 0.0, %v2243
  %v2245 = vpop.f32.mrf.mxu0
  %v2246 = vpop.f32.mrf.mxu0
  %v2247 = vadd.f32 0.0, %v2246
  %v2248 = vpop.f32.mrf.mxu0
  %2249 = vmatprep.mubr.bf16.mxu0 %v1856
  %2250 = vmatmul.mubr.bf16.gmra.mxu0 %v1855
  %v2251 = vpop.f32.mrf.mxu0
  %v2252 = vadd.f32 0.0, %v2251
  %v2253 = vpop.f32.mrf.mxu0
  %v2254 = vpop.f32.mrf.mxu0
  %v2255 = vadd.f32 0.0, %v2254
  %v2256 = vpop.f32.mrf.mxu0
  %2257 = vdwg.mxu0
  %2258 = vmatprep.subr.bf16.mxu0 0
  %2259 = vmatpush1.bf16.msra.mxu0 %v2099
  %2260 = vmatprep.subr.bf16.mxu0 0
  %2261 = vmatpush1.bf16.msra.mxu0 %v2098
  %2262 = vmatprep.subr.bf16.mxu0 0
  %2263 = vmatpush1.bf16.msra.mxu0 %v2097
  %2264 = vmatprep.subr.bf16.mxu0 0
  %2265 = vmatpush1.bf16.msra.mxu0 %v2096
  %2266 = vmatprep.subr.bf16.mxu0 0
  %2267 = vmatpush1.bf16.msra.mxu0 %v2095
  %2268 = vmatprep.subr.bf16.mxu0 0
  %2269 = vmatpush1.bf16.msra.mxu0 %v2094
  %2270 = vmatprep.subr.bf16.mxu0 0
  %2271 = vmatpush1.bf16.msra.mxu0 %v2093
  %2272 = vmatprep.subr.bf16.mxu0 0
  %2273 = vmatpush1.bf16.msra.mxu0 %v2092
  %2274 = vmatprep.subr.bf16.mxu0 0
  %2275 = vmatpush2.bf16.msra.mxu0 %v2107
  %2276 = vmatprep.subr.bf16.mxu0 0
  %2277 = vmatpush2.bf16.msra.mxu0 %v2106
  %2278 = vmatprep.subr.bf16.mxu0 0
  %2279 = vmatpush2.bf16.msra.mxu0 %v2105
  %2280 = vmatprep.subr.bf16.mxu0 0
  %2281 = vmatpush2.bf16.msra.mxu0 %v2104
  %2282 = vmatprep.subr.bf16.mxu0 0
  %2283 = vmatpush2.bf16.msra.mxu0 %v2103
  %2284 = vmatprep.subr.bf16.mxu0 0
  %2285 = vmatpush2.bf16.msra.mxu0 %v2102
  %2286 = vmatprep.subr.bf16.mxu0 0
  %2287 = vmatpush2.bf16.msra.mxu0 %v2101
  %2288 = vmatprep.subr.bf16.mxu0 0
  %2289 = vmatpush2.bf16.msra.mxu0 %v2100
  %2290 = vmatprep.mubr.bf16.mxu0 %v1828
  %2291 = vmatmul.mubr.bf16.gmra.mxu0 %v1827
  %v2292 = vpop.f32.mrf.mxu0
  %v2293 = vadd.f32 %v2204, %v2292
  %v2294 = vpop.f32.mrf.mxu0
  %v2295 = vpop.f32.mrf.mxu0
  %v2296 = vadd.f32 %v2207, %v2295
  %v2297 = vpop.f32.mrf.mxu0
  %2298 = vmatprep.mubr.bf16.mxu0 %v1833
  %2299 = vmatmul.mubr.bf16.gmra.mxu0 %v1832
  %v2300 = vpop.f32.mrf.mxu0
  %v2301 = vadd.f32 %v2212, %v2300
  %v2302 = vpop.f32.mrf.mxu0
  %v2303 = vpop.f32.mrf.mxu0
  %v2304 = vadd.f32 %v2215, %v2303
  %v2305 = vpop.f32.mrf.mxu0
  %2306 = vmatprep.mubr.bf16.mxu0 %v1838
  %2307 = vmatmul.mubr.bf16.gmra.mxu0 %v1837
  %v2308 = vpop.f32.mrf.mxu0
  %v2309 = vadd.f32 %v2220, %v2308
  %v2310 = vpop.f32.mrf.mxu0
  %v2311 = vpop.f32.mrf.mxu0
  %v2312 = vadd.f32 %v2223, %v2311
  %v2313 = vpop.f32.mrf.mxu0
  %2314 = vmatprep.mubr.bf16.mxu0 %v1843
  %2315 = vmatmul.mubr.bf16.gmra.mxu0 %v1842
  %v2316 = vpop.f32.mrf.mxu0
  %v2317 = vadd.f32 %v2228, %v2316
  %v2318 = vpop.f32.mrf.mxu0
  %v2319 = vpop.f32.mrf.mxu0
  %v2320 = vadd.f32 %v2231, %v2319
  %v2321 = vpop.f32.mrf.mxu0
  %2322 = vmatprep.mubr.bf16.mxu0 %v1848
  %2323 = vmatmul.mubr.bf16.gmra.mxu0 %v1847
  %v2324 = vpop.f32.mrf.mxu0
  %v2325 = vadd.f32 %v2236, %v2324
  %v2326 = vpop.f32.mrf.mxu0
  %v2327 = vpop.f32.mrf.mxu0
  %v2328 = vadd.f32 %v2239, %v2327
  %v2329 = vpop.f32.mrf.mxu0
  %2330 = vmatprep.mubr.bf16.mxu0 %v1853
  %2331 = vmatmul.mubr.bf16.gmra.mxu0 %v1852
  %v2332 = vpop.f32.mrf.mxu0
  %v2333 = vadd.f32 %v2244, %v2332
  %v2334 = vpop.f32.mrf.mxu0
  %v2335 = vpop.f32.mrf.mxu0
  %v2336 = vadd.f32 %v2247, %v2335
  %v2337 = vpop.f32.mrf.mxu0
  %2338 = vmatprep.mubr.bf16.mxu0 %v1858
  %2339 = vmatmul.mubr.bf16.gmra.mxu0 %v1857
  %v2340 = vpop.f32.mrf.mxu0
  %v2341 = vadd.f32 %v2252, %v2340
  %v2342 = vpop.f32.mrf.mxu0
  %v2343 = vpop.f32.mrf.mxu0
  %v2344 = vadd.f32 %v2255, %v2343
  %v2345 = vpop.f32.mrf.mxu0
  %2346 = vdwg.mxu0
  %2347 = vmatprep.subr.bf16.mxu0 0
  %2348 = vmatpush1.bf16.msra.mxu0 0
  %2349 = vmatprep.subr.bf16.mxu0 0
  %2350 = vmatpush1.bf16.msra.mxu0 0
  %2351 = vmatprep.subr.bf16.mxu0 0
  %2352 = vmatpush1.bf16.msra.mxu0 0
  %2353 = vmatprep.subr.bf16.mxu0 0
  %2354 = vmatpush1.bf16.msra.mxu0 0
  %2355 = vmatprep.subr.bf16.mxu0 0
  %2356 = vmatpush1.bf16.msra.mxu0 %v2111
  %2357 = vmatprep.subr.bf16.mxu0 0
  %2358 = vmatpush1.bf16.msra.mxu0 %v2110
  %2359 = vmatprep.subr.bf16.mxu0 0
  %2360 = vmatpush1.bf16.msra.mxu0 %v2109
  %2361 = vmatprep.subr.bf16.mxu0 0
  %2362 = vmatpush1.bf16.msra.mxu0 %v2108
  %2363 = vmatprep.subr.bf16.mxu0 0
  %2364 = vmatpush2.bf16.msra.mxu0 0
  %2365 = vmatprep.subr.bf16.mxu0 0
  %2366 = vmatpush2.bf16.msra.mxu0 0
  %2367 = vmatprep.subr.bf16.mxu0 0
  %2368 = vmatpush2.bf16.msra.mxu0 0
  %2369 = vmatprep.subr.bf16.mxu0 0
  %2370 = vmatpush2.bf16.msra.mxu0 0
  %2371 = vmatprep.subr.bf16.mxu0 0
  %2372 = vmatpush2.bf16.msra.mxu0 0
  %2373 = vmatprep.subr.bf16.mxu0 0
  %2374 = vmatpush2.bf16.msra.mxu0 0
  %2375 = vmatprep.subr.bf16.mxu0 0
  %2376 = vmatpush2.bf16.msra.mxu0 0
  %2377 = vmatprep.subr.bf16.mxu0 0
  %2378 = vmatpush2.bf16.msra.mxu0 0
  %2379 = vmatprep.mubr.bf16.mxu0 0
  %2380 = vmatmul.mubr.bf16.gmra.mxu0 %v2149
  %v2381 = vpop.f32.mrf.mxu0
  %v2382 = vadd.f32 %v2293, %v2381
  %v2383 = vpop.f32.mrf.mxu0
  %v2384 = vpop.f32.mrf.mxu0
  %v2385 = vadd.f32 %v2296, %v2384
  %v2386 = vpop.f32.mrf.mxu0
  %2387 = vmatprep.mubr.bf16.mxu0 0
  %2388 = vmatmul.mubr.bf16.gmra.mxu0 %v2152
  %v2389 = vpop.f32.mrf.mxu0
  %v2390 = vadd.f32 %v2301, %v2389
  %v2391 = vpop.f32.mrf.mxu0
  %v2392 = vpop.f32.mrf.mxu0
  %v2393 = vadd.f32 %v2304, %v2392
  %v2394 = vpop.f32.mrf.mxu0
  %2395 = vmatprep.mubr.bf16.mxu0 0
  %2396 = vmatmul.mubr.bf16.gmra.mxu0 %v2155
  %v2397 = vpop.f32.mrf.mxu0
  %v2398 = vadd.f32 %v2309, %v2397
  %v2399 = vpop.f32.mrf.mxu0
  %v2400 = vpop.f32.mrf.mxu0
  %v2401 = vadd.f32 %v2312, %v2400
  %v2402 = vpop.f32.mrf.mxu0
  %2403 = vmatprep.mubr.bf16.mxu0 0
  %2404 = vmatmul.mubr.bf16.gmra.mxu0 %v2158
  %v2405 = vpop.f32.mrf.mxu0
  %v2406 = vadd.f32 %v2317, %v2405
  %v2407 = vpop.f32.mrf.mxu0
  %v2408 = vpop.f32.mrf.mxu0
  %v2409 = vadd.f32 %v2320, %v2408
  %v2410 = vpop.f32.mrf.mxu0
  %2411 = vmatprep.mubr.bf16.mxu0 0
  %2412 = vmatmul.mubr.bf16.gmra.mxu0 %v2161
  %v2413 = vpop.f32.mrf.mxu0
  %v2414 = vadd.f32 %v2325, %v2413
  %v2415 = vpop.f32.mrf.mxu0
  %v2416 = vpop.f32.mrf.mxu0
  %v2417 = vadd.f32 %v2328, %v2416
  %v2418 = vpop.f32.mrf.mxu0
  %2419 = vmatprep.mubr.bf16.mxu0 0
  %2420 = vmatmul.mubr.bf16.gmra.mxu0 %v2164
  %v2421 = vpop.f32.mrf.mxu0
  %v2422 = vadd.f32 %v2333, %v2421
  %v2423 = vpop.f32.mrf.mxu0
  %v2424 = vpop.f32.mrf.mxu0
  %v2425 = vadd.f32 %v2336, %v2424
  %v2426 = vpop.f32.mrf.mxu0
  %2427 = vmatprep.mubr.bf16.mxu0 0
  %2428 = vmatmul.mubr.bf16.gmra.mxu0 %v2167
  %v2429 = vpop.f32.mrf.mxu0
  %v2430 = vadd.f32 %v2341, %v2429
  %v2431 = vpop.f32.mrf.mxu0
  %v2432 = vpop.f32.mrf.mxu0
  %v2433 = vadd.f32 %v2344, %v2432
  %v2434 = vpop.f32.mrf.mxu0
  %2435 = vdwg.mxu0
  %v2436 = vlaneseq
  %v2437 = vshrl.u32 %v2436, 7
  %v2438 = vadd.s32 %v2437, 8
  %v2439 = vadd.s32 %v2437, 16
  %v2440 = vadd.s32 %v2437, 24
  %v2441 = vadd.s32 %v2437, 32
  %v2442 = vadd.s32 %v2437, 40
  %v2443 = vadd.s32 %v2437, 48
  %v2444 = vadd.s32 %v2437, 56
  %v2445 = vadd.s32 %v2437, 64
  %v2446 = vadd.s32 %v2437, 72
  %v2447 = vadd.s32 %v2437, 80
  %v2448 = vadd.s32 %v2437, 88
  %v2449 = vadd.s32 %v2437, 96
  %v2450 = vadd.s32 %v2437, 104
  %v2451 = vand.u32 %v2437, 7
  %v2452 = vand.u32 %v2438, 7
  %v2453 = vand.u32 %v2439, 7
  %v2454 = vand.u32 %v2440, 7
  %v2455 = vand.u32 %v2441, 7
  %v2456 = vand.u32 %v2442, 7
  %v2457 = vand.u32 %v2443, 7
  %v2458 = vand.u32 %v2444, 7
  %v2459 = vand.u32 %v2445, 7
  %v2460 = vand.u32 %v2446, 7
  %v2461 = vand.u32 %v2447, 7
  %v2462 = vand.u32 %v2448, 7
  %v2463 = vand.u32 %v2449, 7
  %v2464 = vand.u32 %v2450, 7
  %vm2465 = vcmp.eq.s32.totalorder %v2451, 7
  %vm2466 = vcmp.eq.s32.totalorder %v2452, 7
  %vm2467 = vcmp.eq.s32.totalorder %v2453, 7
  %vm2468 = vcmp.eq.s32.totalorder %v2454, 7
  %vm2469 = vcmp.eq.s32.totalorder %v2455, 7
  %vm2470 = vcmp.eq.s32.totalorder %v2456, 7
  %vm2471 = vcmp.eq.s32.totalorder %v2457, 7
  %vm2472 = vcmp.eq.s32.totalorder %v2458, 7
  %vm2473 = vcmp.eq.s32.totalorder %v2459, 7
  %vm2474 = vcmp.eq.s32.totalorder %v2460, 7
  %vm2475 = vcmp.eq.s32.totalorder %v2461, 7
  %vm2476 = vcmp.eq.s32.totalorder %v2462, 7
  %vm2477 = vcmp.eq.s32.totalorder %v2463, 7
  %vm2478 = vcmp.eq.s32.totalorder %v2464, 7
  %v2479 = vsel %vm2465, 0.0, 1.0
  %v2480 = vsel %vm2466, 0.0, 1.0
  %v2481 = vsel %vm2467, 0.0, 1.0
  %v2482 = vsel %vm2468, 0.0, 1.0
  %v2483 = vsel %vm2469, 0.0, 1.0
  %v2484 = vsel %vm2470, 0.0, 1.0
  %v2485 = vsel %vm2471, 0.0, 1.0
  %v2486 = vsel %vm2472, 0.0, 1.0
  %v2487 = vsel %vm2473, 0.0, 1.0
  %v2488 = vsel %vm2474, 0.0, 1.0
  %v2489 = vsel %vm2475, 0.0, 1.0
  %v2490 = vsel %vm2476, 0.0, 1.0
  %v2491 = vsel %vm2477, 0.0, 1.0
  %v2492 = vsel %vm2478, 0.0, 1.0
  %v2493 = vmul.f32 %v2382, %v2479
  %v2494 = vmul.f32 %v2385, %v2480
  %v2495 = vmul.f32 %v2390, %v2481
  %v2496 = vmul.f32 %v2393, %v2482
  %v2497 = vmul.f32 %v2398, %v2483
  %v2498 = vmul.f32 %v2401, %v2484
  %v2499 = vmul.f32 %v2406, %v2485
  %v2500 = vmul.f32 %v2409, %v2486
  %v2501 = vmul.f32 %v2414, %v2487
  %v2502 = vmul.f32 %v2417, %v2488
  %v2503 = vmul.f32 %v2422, %v2489
  %v2504 = vmul.f32 %v2425, %v2490
  %v2505 = vmul.f32 %v2430, %v2491
  %v2506 = vmul.f32 %v2433, %v2492
  %v2507 = vadd.f32 %v2493, %v2494
  %v2508 = vadd.f32 %v2507, %v2495
  %v2509 = vadd.f32 %v2508, %v2496
  %v2510 = vadd.f32 %v2509, %v2497
  %v2511 = vadd.f32 %v2510, %v2498
  %v2512 = vadd.f32 %v2511, %v2499
  %v2513 = vadd.f32 %v2512, %v2500
  %v2514 = vadd.f32 %v2513, %v2501
  %v2515 = vadd.f32 %v2514, %v2502
  %v2516 = vadd.f32 %v2515, %v2503
  %v2517 = vadd.f32 %v2516, %v2504
  %v2518 = vadd.f32 %v2517, %v2505
  %v2519 = vadd.f32 %v2518, %v2506
  %v2520 = vrot.slane %v2519, 4
  %v2521 = vadd.f32 %v2519, %v2520
  %v2522 = vrot.slane %v2521, 2
  %v2523 = vadd.f32 %v2521, %v2522
  %v2524 = vrot.slane %v2523, 1
  %v2525 = vadd.f32 %v2523, %v2524
  %v2526 = vrcp.pop 98.0
  %v2527 = vmul.f32 %v2525, %v2526
  %v2528 = vmul.f32 %v2493, %v2493
  %v2529 = vmul.f32 %v2494, %v2494
  %v2530 = vmul.f32 %v2495, %v2495
  %v2531 = vmul.f32 %v2496, %v2496
  %v2532 = vmul.f32 %v2497, %v2497
  %v2533 = vmul.f32 %v2498, %v2498
  %v2534 = vmul.f32 %v2499, %v2499
  %v2535 = vmul.f32 %v2500, %v2500
  %v2536 = vmul.f32 %v2501, %v2501
  %v2537 = vmul.f32 %v2502, %v2502
  %v2538 = vmul.f32 %v2503, %v2503
  %v2539 = vmul.f32 %v2504, %v2504
  %v2540 = vmul.f32 %v2505, %v2505
  %v2541 = vmul.f32 %v2506, %v2506
  %v2542 = vadd.f32 %v2528, %v2529
  %v2543 = vadd.f32 %v2542, %v2530
  %v2544 = vadd.f32 %v2543, %v2531
  %v2545 = vadd.f32 %v2544, %v2532
  %v2546 = vadd.f32 %v2545, %v2533
  %v2547 = vadd.f32 %v2546, %v2534
  %v2548 = vadd.f32 %v2547, %v2535
  %v2549 = vadd.f32 %v2548, %v2536
  %v2550 = vadd.f32 %v2549, %v2537
  %v2551 = vadd.f32 %v2550, %v2538
  %v2552 = vadd.f32 %v2551, %v2539
  %v2553 = vadd.f32 %v2552, %v2540
  %v2554 = vadd.f32 %v2553, %v2541
  %v2555 = vrot.slane %v2554, 4
  %v2556 = vadd.f32 %v2554, %v2555
  %v2557 = vrot.slane %v2556, 2
  %v2558 = vadd.f32 %v2556, %v2557
  %v2559 = vrot.slane %v2558, 1
  %v2560 = vadd.f32 %v2558, %v2559
  %v2561 = vmul.f32 %v2560, %v2526
  %v2562 = vmul.f32 %v2527, %v2527
  %v2563 = vsub.f32 %v2561, %v2562
  %v2564 = vsub.f32 %v2382, %v2527
  %v2565 = vsub.f32 %v2385, %v2527
  %v2566 = vsub.f32 %v2390, %v2527
  %v2567 = vsub.f32 %v2393, %v2527
  %v2568 = vsub.f32 %v2398, %v2527
  %v2569 = vsub.f32 %v2401, %v2527
  %v2570 = vsub.f32 %v2406, %v2527
  %v2571 = vsub.f32 %v2409, %v2527
  %v2572 = vsub.f32 %v2414, %v2527
  %v2573 = vsub.f32 %v2417, %v2527
  %v2574 = vsub.f32 %v2422, %v2527
  %v2575 = vsub.f32 %v2425, %v2527
  %v2576 = vsub.f32 %v2430, %v2527
  %v2577 = vsub.f32 %v2433, %v2527
  %v2578 = vadd.f32 %v2563, 1e-05
  %v2579 = vrsqrt.pop %v2578
  %v2580 = vmul.f32 %v2564, %v2579
  %v2581 = vmul.f32 %v2565, %v2579
  %v2582 = vmul.f32 %v2566, %v2579
  %v2583 = vmul.f32 %v2567, %v2579
  %v2584 = vmul.f32 %v2568, %v2579
  %v2585 = vmul.f32 %v2569, %v2579
  %v2586 = vmul.f32 %v2570, %v2579
  %v2587 = vmul.f32 %v2571, %v2579
  %v2588 = vmul.f32 %v2572, %v2579
  %v2589 = vmul.f32 %v2573, %v2579
  %v2590 = vmul.f32 %v2574, %v2579
  %v2591 = vmul.f32 %v2575, %v2579
  %v2592 = vmul.f32 %v2576, %v2579
  %v2593 = vmul.f32 %v2577, %v2579
  %v2594 = vld [vmem:[%s3] sm:$0x1]
  %v2596 = vlaneseq
  %v2597 = vshrl.u32 %v2596, 7
  %v2598 = vsub.s32 0, %v2597
  %v2599 = vrot.slane %v2594, %v2598
  %v2601 = vmul.f32 %v2580, %v2599
  %v2602 = vmul.f32 %v2581, %v2599
  %v2603 = vmul.f32 %v2582, %v2599
  %v2604 = vmul.f32 %v2583, %v2599
  %v2605 = vmul.f32 %v2584, %v2599
  %v2606 = vmul.f32 %v2585, %v2599
  %v2607 = vmul.f32 %v2586, %v2599
  %v2608 = vmul.f32 %v2587, %v2599
  %v2609 = vmul.f32 %v2588, %v2599
  %v2610 = vmul.f32 %v2589, %v2599
  %v2611 = vmul.f32 %v2590, %v2599
  %v2612 = vmul.f32 %v2591, %v2599
  %v2613 = vmul.f32 %v2592, %v2599
  %v2614 = vmul.f32 %v2593, %v2599
  %v2615 = vld [vmem:[%s4] sm:$0x1]
  %v2617 = vlaneseq
  %v2618 = vshrl.u32 %v2617, 7
  %v2619 = vsub.s32 0, %v2618
  %v2620 = vrot.slane %v2615, %v2619
  %v2622 = vadd.f32 %v2601, %v2620
  %v2623 = vadd.f32 %v2602, %v2620
  %v2624 = vadd.f32 %v2603, %v2620
  %v2625 = vadd.f32 %v2604, %v2620
  %v2626 = vadd.f32 %v2605, %v2620
  %v2627 = vadd.f32 %v2606, %v2620
  %v2628 = vadd.f32 %v2607, %v2620
  %v2629 = vadd.f32 %v2608, %v2620
  %v2630 = vadd.f32 %v2609, %v2620
  %v2631 = vadd.f32 %v2610, %v2620
  %v2632 = vadd.f32 %v2611, %v2620
  %v2633 = vadd.f32 %v2612, %v2620
  %v2634 = vadd.f32 %v2613, %v2620
  %v2635 = vadd.f32 %v2614, %v2620
  %vm2636 = vcmp.ge.f32.partialorder %v2622, 0.0
  %vm2637 = vcmp.ge.f32.partialorder %v2623, 0.0
  %vm2638 = vcmp.ge.f32.partialorder %v2624, 0.0
  %vm2639 = vcmp.ge.f32.partialorder %v2625, 0.0
  %vm2640 = vcmp.ge.f32.partialorder %v2626, 0.0
  %vm2641 = vcmp.ge.f32.partialorder %v2627, 0.0
  %vm2642 = vcmp.ge.f32.partialorder %v2628, 0.0
  %vm2643 = vcmp.ge.f32.partialorder %v2629, 0.0
  %vm2644 = vcmp.ge.f32.partialorder %v2630, 0.0
  %vm2645 = vcmp.ge.f32.partialorder %v2631, 0.0
  %vm2646 = vcmp.ge.f32.partialorder %v2632, 0.0
  %vm2647 = vcmp.ge.f32.partialorder %v2633, 0.0
  %vm2648 = vcmp.ge.f32.partialorder %v2634, 0.0
  %vm2649 = vcmp.ge.f32.partialorder %v2635, 0.0
  %v2650 = vmul.f32 %v2622, 0.2
  %v2651 = vmul.f32 %v2623, 0.2
  %v2652 = vmul.f32 %v2624, 0.2
  %v2653 = vmul.f32 %v2625, 0.2
  %v2654 = vmul.f32 %v2626, 0.2
  %v2655 = vmul.f32 %v2627, 0.2
  %v2656 = vmul.f32 %v2628, 0.2
  %v2657 = vmul.f32 %v2629, 0.2
  %v2658 = vmul.f32 %v2630, 0.2
  %v2659 = vmul.f32 %v2631, 0.2
  %v2660 = vmul.f32 %v2632, 0.2
  %v2661 = vmul.f32 %v2633, 0.2
  %v2662 = vmul.f32 %v2634, 0.2
  %v2663 = vmul.f32 %v2635, 0.2
  %v2664 = vsel %vm2636, %v2622, %v2650
  %v2665 = vsel %vm2637, %v2623, %v2651
  %v2666 = vsel %vm2638, %v2624, %v2652
  %v2667 = vsel %vm2639, %v2625, %v2653
  %v2668 = vsel %vm2640, %v2626, %v2654
  %v2669 = vsel %vm2641, %v2627, %v2655
  %v2670 = vsel %vm2642, %v2628, %v2656
  %v2671 = vsel %vm2643, %v2629, %v2657
  %v2672 = vsel %vm2644, %v2630, %v2658
  %v2673 = vsel %vm2645, %v2631, %v2659
  %v2674 = vsel %vm2646, %v2632, %v2660
  %v2675 = vsel %vm2647, %v2633, %v2661
  %v2676 = vsel %vm2648, %v2634, %v2662
  %v2677 = vsel %vm2649, %v2635, %v2663
  %v2680 = vrot.slane %v2671, 7
  %vm2681 = vcmask 1041409
  %v2682 = vsel %vm2681, %v2680, %v2664
  %v2684 = vrot.slane %v2664, 1
  %v2685 = vsel %vm2681, %v2671, %v2684
  %v2687 = vrot.slane %v2664, 2
  %v2688 = vrot.slane %v2671, 1
  %v2689 = vsel %vm2681, %v2688, %v2687
  %v2693 = vrot.slane %v2672, 7
  %v2694 = vsel %vm2681, %v2693, %v2665
  %v2696 = vrot.slane %v2665, 1
  %v2697 = vsel %vm2681, %v2672, %v2696
  %v2699 = vrot.slane %v2665, 2
  %v2700 = vrot.slane %v2672, 1
  %v2701 = vsel %vm2681, %v2700, %v2699
  %v2705 = vrot.slane %v2673, 7
  %v2706 = vsel %vm2681, %v2705, %v2666
  %v2708 = vrot.slane %v2666, 1
  %v2709 = vsel %vm2681, %v2673, %v2708
  %v2711 = vrot.slane %v2666, 2
  %v2712 = vrot.slane %v2673, 1
  %v2713 = vsel %vm2681, %v2712, %v2711
  %vm2715 = vcmask 1043459
  %v2716 = vsel %vm2715, %v2680, %v2664
  %v2718 = vsel %vm2715, %v2671, %v2684
  %v2720 = vsel %vm2715, %v2688, %v2687
  %v2722 = vsel %vm2715, %v2693, %v2665
  %v2724 = vsel %vm2715, %v2672, %v2696
  %v2726 = vsel %vm2715, %v2700, %v2699
  %v2728 = vsel %vm2715, %v2705, %v2666
  %v2730 = vsel %vm2715, %v2673, %v2708
  %v2732 = vsel %vm2715, %v2712, %v2711
  %vm2734 = vcmask 1045509
  %v2735 = vsel %vm2734, %v2680, %v2664
  %v2737 = vsel %vm2734, %v2671, %v2684
  %v2739 = vsel %vm2734, %v2688, %v2687
  %v2741 = vsel %vm2734, %v2693, %v2665
  %v2743 = vsel %vm2734, %v2672, %v2696
  %v2745 = vsel %vm2734, %v2700, %v2699
  %v2747 = vsel %vm2734, %v2705, %v2666
  %v2749 = vsel %vm2734, %v2673, %v2708
  %v2751 = vsel %vm2734, %v2712, %v2711
  %v2755 = vrot.slane %v2674, 7
  %v2756 = vsel %vm2681, %v2755, %v2667
  %v2757 = vrot.slane %v2667, 1
  %v2758 = vsel %vm2681, %v2674, %v2757
  %v2759 = vrot.slane %v2667, 2
  %v2760 = vrot.slane %v2674, 1
  %v2761 = vsel %vm2681, %v2760, %v2759
  %v2764 = vrot.slane %v2675, 7
  %v2765 = vsel %vm2681, %v2764, %v2668
  %v2766 = vrot.slane %v2668, 1
  %v2767 = vsel %vm2681, %v2675, %v2766
  %v2768 = vrot.slane %v2668, 2
  %v2769 = vrot.slane %v2675, 1
  %v2770 = vsel %vm2681, %v2769, %v2768
  %v2771 = vsel %vm2715, %v2755, %v2667
  %v2772 = vsel %vm2715, %v2674, %v2757
  %v2773 = vsel %vm2715, %v2760, %v2759
  %v2774 = vsel %vm2715, %v2764, %v2668
  %v2775 = vsel %vm2715, %v2675, %v2766
  %v2776 = vsel %vm2715, %v2769, %v2768
  %v2777 = vsel %vm2734, %v2755, %v2667
  %v2778 = vsel %vm2734, %v2674, %v2757
  %v2779 = vsel %vm2734, %v2760, %v2759
  %v2780 = vsel %vm2734, %v2764, %v2668
  %v2781 = vsel %vm2734, %v2675, %v2766
  %v2782 = vsel %vm2734, %v2769, %v2768
  %v2785 = vrot.slane %v2676, 7
  %v2786 = vsel %vm2681, %v2785, %v2669
  %v2787 = vrot.slane %v2669, 1
  %v2788 = vsel %vm2681, %v2676, %v2787
  %v2789 = vrot.slane %v2669, 2
  %v2790 = vrot.slane %v2676, 1
  %v2791 = vsel %vm2681, %v2790, %v2789
  %v2794 = vrot.slane %v2677, 7
  %v2795 = vsel %vm2681, %v2794, %v2670
  %v2796 = vrot.slane %v2670, 1
  %v2797 = vsel %vm2681, %v2677, %v2796
  %v2798 = vrot.slane %v2670, 2
  %v2799 = vrot.slane %v2677, 1
  %v2800 = vsel %vm2681, %v2799, %v2798
  %v2801 = vsel %vm2715, %v2785, %v2669
  %v2802 = vsel %vm2715, %v2676, %v2787
  %v2803 = vsel %vm2715, %v2790, %v2789
  %v2804 = vsel %vm2715, %v2794, %v2670
  %v2805 = vsel %vm2715, %v2677, %v2796
  %v2806 = vsel %vm2715, %v2799, %v2798
  %v2807 = vsel %vm2734, %v2785, %v2669
  %v2808 = vsel %vm2734, %v2676, %v2787
  %v2809 = vsel %vm2734, %v2790, %v2789
  %v2810 = vsel %vm2734, %v2794, %v2670
  %v2811 = vsel %vm2734, %v2677, %v2796
  %v2812 = vsel %vm2734, %v2799, %v2798
  %v2813 = vrot.slane %v2706, 2
  %v2814 = vrot.slane %v2709, 2
  %v2815 = vrot.slane %v2713, 2
  %v2816 = vrot.slane %v2756, 2
  %v2817 = vrot.slane %v2758, 2
  %v2818 = vrot.slane %v2761, 2
  %v2819 = vrot.slane %v2765, 2
  %v2820 = vrot.slane %v2767, 2
  %v2821 = vrot.slane %v2770, 2
  %v2831 = vrot.slane %v2728, 2
  %v2832 = vrot.slane %v2730, 2
  %v2833 = vrot.slane %v2732, 2
  %v2834 = vrot.slane %v2771, 2
  %v2835 = vrot.slane %v2772, 2
  %v2836 = vrot.slane %v2773, 2
  %v2837 = vrot.slane %v2774, 2
  %v2838 = vrot.slane %v2775, 2
  %v2839 = vrot.slane %v2776, 2
  %v2849 = vrot.slane %v2747, 2
  %v2850 = vrot.slane %v2749, 2
  %v2851 = vrot.slane %v2751, 2
  %v2852 = vrot.slane %v2777, 2
  %v2853 = vrot.slane %v2778, 2
  %v2854 = vrot.slane %v2779, 2
  %v2855 = vrot.slane %v2780, 2
  %v2856 = vrot.slane %v2781, 2
  %v2857 = vrot.slane %v2782, 2
  %v2867 = vrot.slane %v2765, 4
  %v2868 = vrot.slane %v2767, 4
  %v2869 = vrot.slane %v2770, 4
  %v2870 = vrot.slane %v2786, 4
  %v2871 = vrot.slane %v2788, 4
  %v2872 = vrot.slane %v2791, 4
  %v2873 = vrot.slane %v2795, 4
  %v2874 = vrot.slane %v2797, 4
  %v2875 = vrot.slane %v2800, 4
  %v2885 = vrot.slane %v2774, 4
  %v2886 = vrot.slane %v2775, 4
  %v2887 = vrot.slane %v2776, 4
  %v2888 = vrot.slane %v2801, 4
  %v2889 = vrot.slane %v2802, 4
  %v2890 = vrot.slane %v2803, 4
  %v2891 = vrot.slane %v2804, 4
  %v2892 = vrot.slane %v2805, 4
  %v2893 = vrot.slane %v2806, 4
  %v2903 = vrot.slane %v2780, 4
  %v2904 = vrot.slane %v2781, 4
  %v2905 = vrot.slane %v2782, 4
  %v2906 = vrot.slane %v2807, 4
  %v2907 = vrot.slane %v2808, 4
  %v2908 = vrot.slane %v2809, 4
  %v2909 = vrot.slane %v2810, 4
  %v2910 = vrot.slane %v2811, 4
  %v2911 = vrot.slane %v2812, 4
  %vm2921 = vcmask 1041408
  %v2922 = vsel %vm2921, %v2682, %v2716
  %v2923 = vsel %vm2921, %v2685, %v2718
  %v2924 = vsel %vm2921, %v2689, %v2720
  %v2925 = vsel %vm2921, %v2694, %v2722
  %v2926 = vsel %vm2921, %v2697, %v2724
  %v2927 = vsel %vm2921, %v2701, %v2726
  %v2928 = vsel %vm2921, %v2706, %v2728
  %v2929 = vsel %vm2921, %v2709, %v2730
  %v2930 = vsel %vm2921, %v2713, %v2732
  %vm2931 = vcmask 1043456
  %v2932 = vsel %vm2931, %v2922, %v2735
  %v2933 = vsel %vm2931, %v2923, %v2737
  %v2934 = vsel %vm2931, %v2924, %v2739
  %v2935 = vsel %vm2931, %v2925, %v2741
  %v2936 = vsel %vm2931, %v2926, %v2743
  %v2937 = vsel %vm2931, %v2927, %v2745
  %v2938 = vsel %vm2931, %v2928, %v2747
  %v2939 = vsel %vm2931, %v2929, %v2749
  %v2940 = vsel %vm2931, %v2930, %v2751
  %vm2941 = vcmask 1045504
  %v2942 = vsel %vm2941, %v2932, %v2813
  %v2943 = vsel %vm2941, %v2933, %v2814
  %v2944 = vsel %vm2941, %v2934, %v2815
  %v2945 = vsel %vm2941, %v2935, %v2816
  %v2946 = vsel %vm2941, %v2936, %v2817
  %v2947 = vsel %vm2941, %v2937, %v2818
  %v2948 = vsel %vm2941, %v2938, %v2819
  %v2949 = vsel %vm2941, %v2939, %v2820
  %v2950 = vsel %vm2941, %v2940, %v2821
  %v2951 = vsel %vm2921, %v2831, %v2849
  %v2952 = vsel %vm2921, %v2832, %v2850
  %v2953 = vsel %vm2921, %v2833, %v2851
  %v2954 = vsel %vm2921, %v2834, %v2852
  %v2955 = vsel %vm2921, %v2835, %v2853
  %v2956 = vsel %vm2921, %v2836, %v2854
  %v2957 = vsel %vm2921, %v2837, %v2855
  %v2958 = vsel %vm2921, %v2838, %v2856
  %v2959 = vsel %vm2921, %v2839, %v2857
  %v2960 = vsel %vm2931, %v2951, %v2867
  %v2961 = vsel %vm2931, %v2952, %v2868
  %v2962 = vsel %vm2931, %v2953, %v2869
  %v2963 = vsel %vm2931, %v2954, %v2870
  %v2964 = vsel %vm2931, %v2955, %v2871
  %v2965 = vsel %vm2931, %v2956, %v2872
  %v2966 = vsel %vm2931, %v2957, %v2873
  %v2967 = vsel %vm2931, %v2958, %v2874
  %v2968 = vsel %vm2931, %v2959, %v2875
  %v2969 = vsel %vm2941, %v2960, %v2885
  %v2970 = vsel %vm2941, %v2961, %v2886
  %v2971 = vsel %vm2941, %v2962, %v2887
  %v2972 = vsel %vm2941, %v2963, %v2888
  %v2973 = vsel %vm2941, %v2964, %v2889
  %v2974 = vsel %vm2941, %v2965, %v2890
  %v2975 = vsel %vm2941, %v2966, %v2891
  %v2976 = vsel %vm2941, %v2967, %v2892
  %v2977 = vsel %vm2941, %v2968, %v2893
  %v2978 = vsel %vm2921, %v2903, 0.0
  %v2979 = vsel %vm2921, %v2904, 0.0
  %v2980 = vsel %vm2921, %v2905, 0.0
  %v2981 = vsel %vm2921, %v2906, 0.0
  %v2982 = vsel %vm2921, %v2907, 0.0
  %v2983 = vsel %vm2921, %v2908, 0.0
  %v2984 = vsel %vm2921, %v2909, 0.0
  %v2985 = vsel %vm2921, %v2910, 0.0
  %v2986 = vsel %vm2921, %v2911, 0.0
  %v2987 = vpack.c.bf16 %v2969, %v2942
  %v2988 = vpack.c.bf16 %v2970, %v2943
  %v2989 = vpack.c.bf16 %v2971, %v2944
  %v2990 = vpack.c.bf16 %v2972, %v2945
  %v2991 = vpack.c.bf16 %v2973, %v2946
  %v2992 = vpack.c.bf16 %v2974, %v2947
  %v2993 = vpack.c.bf16 %v2975, %v2948
  %v2994 = vpack.c.bf16 %v2976, %v2949
  %v2995 = vpack.c.bf16 %v2977, %v2950
  %v2996 = vpack.c.bf16 %v2978, %v2978
  %v2997 = vpack.c.bf16 %v2979, %v2979
  %v2998 = vpack.c.bf16 %v2980, %v2980
  %v2999 = vpack.c.bf16 %v2981, %v2981
  %v3000 = vpack.c.bf16 %v2982, %v2982
  %v3001 = vpack.c.bf16 %v2983, %v2983
  %v3002 = vpack.c.bf16 %v2984, %v2984
  %v3003 = vpack.c.bf16 %v2985, %v2985
  %v3004 = vpack.c.bf16 %v2986, %v2986
  %v3005 = vld [vmem:[%s5] sm:$0xff]
  %v3006 = vld [vmem:[%s5 + $0x8] sm:$0xff]
  %v3007 = vld [vmem:[%s5 + $0x10] sm:$0xff]
  %v3008 = vld [vmem:[%s5 + $0x18] sm:$0xff]
  %v3009 = vld [vmem:[%s5 + $0x20] sm:$0xff]
  %v3010 = vld [vmem:[%s5 + $0x28] sm:$0xff]
  %v3011 = vld [vmem:[%s5 + $0x30] sm:$0xff]
  %v3012 = vld [vmem:[%s5 + $0x38] sm:$0xff]
  %v3013 = vld [vmem:[%s5 + $0x40] sm:$0xff]
  %v3014 = vld [vmem:[%s5 + $0x48] sm:$0xff]
  %v3015 = vld [vmem:[%s5 + $0x50] sm:$0xff]
  %v3016 = vld [vmem:[%s5 + $0x58] sm:$0xff]
  %v3017 = vld [vmem:[%s5 + $0x60] sm:$0xff]
  %v3018 = vld [vmem:[%s5 + $0x68] sm:$0xff]
  %v3019 = vld [vmem:[%s5 + $0x70] sm:$0xff]
  %v3020 = vld [vmem:[%s5 + $0x78] sm:$0xff]
  %v3021 = vld [vmem:[%s5 + $0x80] sm:$0xff]
  %v3022 = vld [vmem:[%s5 + $0x88] sm:$0xff]
  %v3023 = vld [vmem:[%s5 + $0x90] sm:$0xff]
  %v3024 = vld [vmem:[%s5 + $0x98] sm:$0xff]
  %v3025 = vld [vmem:[%s5 + $0xa0] sm:$0xff]
  %v3026 = vld [vmem:[%s5 + $0xa8] sm:$0xff]
  %v3027 = vld [vmem:[%s5 + $0xb0] sm:$0xff]
  %v3028 = vld [vmem:[%s5 + $0xb8] sm:$0xff]
  %v3029 = vld [vmem:[%s5 + $0xc0] sm:$0xff]
  %v3030 = vld [vmem:[%s5 + $0xc8] sm:$0xff]
  %v3031 = vld [vmem:[%s5 + $0xd0] sm:$0xff]
  %v3032 = vld [vmem:[%s5 + $0xd8] sm:$0xff]
  %v3033 = vld [vmem:[%s5 + $0xe0] sm:$0xff]
  %v3034 = vld [vmem:[%s5 + $0xe8] sm:$0xff]
  %v3035 = vld [vmem:[%s5 + $0xf0] sm:$0xff]
  %v3036 = vld [vmem:[%s5 + $0xf8] sm:$0xff]
  %v3037 = vld [vmem:[%s5 + $0x100] sm:$0xff]
  %v3038 = vld [vmem:[%s5 + $0x108] sm:$0xff]
  %v3039 = vld [vmem:[%s5 + $0x110] sm:$0xff]
  %v3040 = vld [vmem:[%s5 + $0x118] sm:$0xff]
  %v3041 = vld [vmem:[%s5 + $0x120] sm:$0xff]
  %v3042 = vld [vmem:[%s5 + $0x128] sm:$0xff]
  %v3043 = vld [vmem:[%s5 + $0x130] sm:$0xff]
  %v3044 = vld [vmem:[%s5 + $0x138] sm:$0xff]
  %v3045 = vld [vmem:[%s5 + $0x140] sm:$0xff]
  %v3046 = vld [vmem:[%s5 + $0x148] sm:$0xff]
  %v3047 = vld [vmem:[%s5 + $0x150] sm:$0xff]
  %v3048 = vld [vmem:[%s5 + $0x158] sm:$0xff]
  %v3049 = vld [vmem:[%s5 + $0x160] sm:$0xff]
  %v3050 = vld [vmem:[%s5 + $0x168] sm:$0xff]
  %v3051 = vld [vmem:[%s5 + $0x170] sm:$0xff]
  %v3052 = vld [vmem:[%s5 + $0x178] sm:$0xff]
  %v3053 = vld [vmem:[%s5 + $0x180] sm:$0xff]
  %v3054 = vld [vmem:[%s5 + $0x188] sm:$0xff]
  %v3055 = vld [vmem:[%s5 + $0x190] sm:$0xff]
  %v3056 = vld [vmem:[%s5 + $0x198] sm:$0xff]
  %v3057 = vld [vmem:[%s5 + $0x1a0] sm:$0xff]
  %v3058 = vld [vmem:[%s5 + $0x1a8] sm:$0xff]
  %v3059 = vld [vmem:[%s5 + $0x1b0] sm:$0xff]
  %v3060 = vld [vmem:[%s5 + $0x1b8] sm:$0xff]
  %v3061 = vld [vmem:[%s5 + $0x1c0] sm:$0xff]
  %v3062 = vld [vmem:[%s5 + $0x1c8] sm:$0xff]
  %v3063 = vld [vmem:[%s5 + $0x1d0] sm:$0xff]
  %v3064 = vld [vmem:[%s5 + $0x1d8] sm:$0xff]
  %v3065 = vld [vmem:[%s5 + $0x1e0] sm:$0xff]
  %v3066 = vld [vmem:[%s5 + $0x1e8] sm:$0xff]
  %v3067 = vld [vmem:[%s5 + $0x1f0] sm:$0xff]
  %v3068 = vld [vmem:[%s5 + $0x1f8] sm:$0xff]
  %v3069 = vld [vmem:[%s5 + $0x200] sm:$0xff]
  %v3070 = vld [vmem:[%s5 + $0x208] sm:$0xff]
  %v3071 = vld [vmem:[%s5 + $0x210] sm:$0xff]
  %v3072 = vld [vmem:[%s5 + $0x218] sm:$0xff]
  %v3073 = vld [vmem:[%s5 + $0x220] sm:$0xff]
  %v3074 = vld [vmem:[%s5 + $0x228] sm:$0xff]
  %v3075 = vld [vmem:[%s5 + $0x230] sm:$0xff]
  %v3076 = vld [vmem:[%s5 + $0x238] sm:$0xff]
  %v3077 = vld [vmem:[%s5 + $0x240] sm:$0xff]
  %v3078 = vld [vmem:[%s5 + $0x248] sm:$0xff]
  %v3079 = vld [vmem:[%s5 + $0x250] sm:$0xff]
  %v3080 = vld [vmem:[%s5 + $0x258] sm:$0xff]
  %v3081 = vld [vmem:[%s5 + $0x260] sm:$0xff]
  %v3082 = vld [vmem:[%s5 + $0x268] sm:$0xff]
  %v3083 = vld [vmem:[%s5 + $0x270] sm:$0xff]
  %v3084 = vld [vmem:[%s5 + $0x278] sm:$0xff]
  %v3085 = vld [vmem:[%s5 + $0x280] sm:$0xff]
  %v3086 = vld [vmem:[%s5 + $0x288] sm:$0xff]
  %v3087 = vld [vmem:[%s5 + $0x290] sm:$0xff]
  %v3088 = vld [vmem:[%s5 + $0x298] sm:$0xff]
  %v3089 = vld [vmem:[%s5 + $0x2a0] sm:$0xff]
  %v3090 = vld [vmem:[%s5 + $0x2a8] sm:$0xff]
  %v3091 = vld [vmem:[%s5 + $0x2b0] sm:$0xff]
  %v3092 = vld [vmem:[%s5 + $0x2b8] sm:$0xff]
  %v3093 = vld [vmem:[%s5 + $0x2c0] sm:$0xff]
  %v3094 = vld [vmem:[%s5 + $0x2c8] sm:$0xff]
  %v3095 = vld [vmem:[%s5 + $0x2d0] sm:$0xff]
  %v3096 = vld [vmem:[%s5 + $0x2d8] sm:$0xff]
  %v3097 = vld [vmem:[%s5 + $0x2e0] sm:$0xff]
  %v3098 = vld [vmem:[%s5 + $0x2e8] sm:$0xff]
  %v3099 = vld [vmem:[%s5 + $0x2f0] sm:$0xff]
  %v3100 = vld [vmem:[%s5 + $0x2f8] sm:$0xff]
  %v3101 = vld [vmem:[%s5 + $0x300] sm:$0xff]
  %v3102 = vld [vmem:[%s5 + $0x308] sm:$0xff]
  %v3103 = vld [vmem:[%s5 + $0x310] sm:$0xff]
  %v3104 = vld [vmem:[%s5 + $0x318] sm:$0xff]
  %v3105 = vld [vmem:[%s5 + $0x320] sm:$0xff]
  %v3106 = vld [vmem:[%s5 + $0x328] sm:$0xff]
  %v3107 = vld [vmem:[%s5 + $0x330] sm:$0xff]
  %v3108 = vld [vmem:[%s5 + $0x338] sm:$0xff]
  %v3109 = vld [vmem:[%s5 + $0x340] sm:$0xff]
  %v3110 = vld [vmem:[%s5 + $0x348] sm:$0xff]
  %v3111 = vld [vmem:[%s5 + $0x350] sm:$0xff]
  %v3112 = vld [vmem:[%s5 + $0x358] sm:$0xff]
  %v3113 = vld [vmem:[%s5 + $0x360] sm:$0xff]
  %v3114 = vld [vmem:[%s5 + $0x368] sm:$0xff]
  %v3115 = vld [vmem:[%s5 + $0x370] sm:$0xff]
  %v3116 = vld [vmem:[%s5 + $0x378] sm:$0xff]
  %v3117 = vld [vmem:[%s5 + $0x380] sm:$0xff]
  %v3118 = vld [vmem:[%s5 + $0x388] sm:$0xff]
  %v3119 = vld [vmem:[%s5 + $0x390] sm:$0xff]
  %v3120 = vld [vmem:[%s5 + $0x398] sm:$0xff]
  %v3121 = vld [vmem:[%s5 + $0x3a0] sm:$0xff]
  %v3122 = vld [vmem:[%s5 + $0x3a8] sm:$0xff]
  %v3123 = vld [vmem:[%s5 + $0x3b0] sm:$0xff]
  %v3124 = vld [vmem:[%s5 + $0x3b8] sm:$0xff]
  %v3125 = vld [vmem:[%s5 + $0x3c0] sm:$0xff]
  %v3126 = vld [vmem:[%s5 + $0x3c8] sm:$0xff]
  %v3127 = vld [vmem:[%s5 + $0x3d0] sm:$0xff]
  %v3128 = vld [vmem:[%s5 + $0x3d8] sm:$0xff]
  %v3129 = vld [vmem:[%s5 + $0x3e0] sm:$0xff]
  %v3130 = vld [vmem:[%s5 + $0x3e8] sm:$0xff]
  %v3131 = vld [vmem:[%s5 + $0x3f0] sm:$0xff]
  %v3132 = vld [vmem:[%s5 + $0x3f8] sm:$0xff]
  %v3133 = vld [vmem:[%s5 + $0x400] sm:$0xff]
  %v3134 = vld [vmem:[%s5 + $0x408] sm:$0xff]
  %v3135 = vld [vmem:[%s5 + $0x410] sm:$0xff]
  %v3136 = vld [vmem:[%s5 + $0x418] sm:$0xff]
  %v3137 = vld [vmem:[%s5 + $0x420] sm:$0xff]
  %v3138 = vld [vmem:[%s5 + $0x428] sm:$0xff]
  %v3139 = vld [vmem:[%s5 + $0x430] sm:$0xff]
  %v3140 = vld [vmem:[%s5 + $0x438] sm:$0xff]
  %v3141 = vld [vmem:[%s5 + $0x440] sm:$0xff]
  %v3142 = vld [vmem:[%s5 + $0x448] sm:$0xff]
  %v3143 = vld [vmem:[%s5 + $0x450] sm:$0xff]
  %v3144 = vld [vmem:[%s5 + $0x458] sm:$0xff]
  %v3145 = vld [vmem:[%s5 + $0x460] sm:$0xff]
  %v3146 = vld [vmem:[%s5 + $0x468] sm:$0xff]
  %v3147 = vld [vmem:[%s5 + $0x470] sm:$0xff]
  %v3148 = vld [vmem:[%s5 + $0x478] sm:$0xff]
  %v3293 = vunpack.c.l.b16 %v3005
  %v3294 = vunpack.c.h.b16 %v3005
  %v3295 = vunpack.c.l.b16 %v3006
  %v3296 = vunpack.c.h.b16 %v3006
  %v3297 = vunpack.c.l.b16 %v3007
  %v3298 = vunpack.c.h.b16 %v3007
  %v3299 = vunpack.c.l.b16 %v3008
  %v3300 = vunpack.c.h.b16 %v3008
  %v3301 = vunpack.c.l.b16 %v3009
  %v3302 = vunpack.c.h.b16 %v3009
  %v3303 = vunpack.c.l.b16 %v3010
  %v3304 = vunpack.c.h.b16 %v3010
  %v3305 = vunpack.c.l.b16 %v3011
  %v3306 = vunpack.c.h.b16 %v3011
  %v3307 = vunpack.c.l.b16 %v3012
  %v3308 = vunpack.c.h.b16 %v3012
  %v3309 = vunpack.c.l.b16 %v3013
  %v3310 = vunpack.c.h.b16 %v3013
  %v3311 = vunpack.c.l.b16 %v3014
  %v3312 = vunpack.c.h.b16 %v3014
  %v3313 = vunpack.c.l.b16 %v3015
  %v3314 = vunpack.c.h.b16 %v3015
  %v3315 = vunpack.c.l.b16 %v3016
  %v3316 = vunpack.c.h.b16 %v3016
  %v3317 = vunpack.c.l.b16 %v3017
  %v3318 = vunpack.c.h.b16 %v3017
  %v3319 = vunpack.c.l.b16 %v3018
  %v3320 = vunpack.c.h.b16 %v3018
  %v3321 = vunpack.c.l.b16 %v3019
  %v3322 = vunpack.c.h.b16 %v3019
  %v3323 = vunpack.c.l.b16 %v3020
  %v3324 = vunpack.c.h.b16 %v3020
  %v3325 = vunpack.c.l.b16 %v3021
  %v3326 = vunpack.c.h.b16 %v3021
  %v3327 = vunpack.c.l.b16 %v3022
  %v3328 = vunpack.c.h.b16 %v3022
  %v3329 = vunpack.c.l.b16 %v3023
  %v3330 = vunpack.c.h.b16 %v3023
  %v3331 = vunpack.c.l.b16 %v3024
  %v3332 = vunpack.c.h.b16 %v3024
  %v3333 = vunpack.c.l.b16 %v3025
  %v3334 = vunpack.c.h.b16 %v3025
  %v3335 = vunpack.c.l.b16 %v3026
  %v3336 = vunpack.c.h.b16 %v3026
  %v3337 = vunpack.c.l.b16 %v3027
  %v3338 = vunpack.c.h.b16 %v3027
  %v3339 = vunpack.c.l.b16 %v3028
  %v3340 = vunpack.c.h.b16 %v3028
  %v3341 = vunpack.c.l.b16 %v3029
  %v3342 = vunpack.c.h.b16 %v3029
  %v3343 = vunpack.c.l.b16 %v3030
  %v3344 = vunpack.c.h.b16 %v3030
  %v3345 = vunpack.c.l.b16 %v3031
  %v3346 = vunpack.c.h.b16 %v3031
  %v3347 = vunpack.c.l.b16 %v3032
  %v3348 = vunpack.c.h.b16 %v3032
  %v3349 = vunpack.c.l.b16 %v3033
  %v3350 = vunpack.c.h.b16 %v3033
  %v3351 = vunpack.c.l.b16 %v3034
  %v3352 = vunpack.c.h.b16 %v3034
  %v3353 = vunpack.c.l.b16 %v3035
  %v3354 = vunpack.c.h.b16 %v3035
  %v3355 = vunpack.c.l.b16 %v3036
  %v3356 = vunpack.c.h.b16 %v3036
  %v3357 = vunpack.c.l.b16 %v3037
  %v3358 = vunpack.c.h.b16 %v3037
  %v3359 = vunpack.c.l.b16 %v3038
  %v3360 = vunpack.c.h.b16 %v3038
  %v3361 = vunpack.c.l.b16 %v3039
  %v3362 = vunpack.c.h.b16 %v3039
  %v3363 = vunpack.c.l.b16 %v3040
  %v3364 = vunpack.c.h.b16 %v3040
  %v3365 = vunpack.c.l.b16 %v3041
  %v3366 = vunpack.c.h.b16 %v3041
  %v3367 = vunpack.c.l.b16 %v3042
  %v3368 = vunpack.c.h.b16 %v3042
  %v3369 = vunpack.c.l.b16 %v3043
  %v3370 = vunpack.c.h.b16 %v3043
  %v3371 = vunpack.c.l.b16 %v3044
  %v3372 = vunpack.c.h.b16 %v3044
  %v3373 = vunpack.c.l.b16 %v3045
  %v3374 = vunpack.c.h.b16 %v3045
  %v3375 = vunpack.c.l.b16 %v3046
  %v3376 = vunpack.c.h.b16 %v3046
  %v3377 = vunpack.c.l.b16 %v3047
  %v3378 = vunpack.c.h.b16 %v3047
  %v3379 = vunpack.c.l.b16 %v3048
  %v3380 = vunpack.c.h.b16 %v3048
  %v3381 = vunpack.c.l.b16 %v3049
  %v3382 = vunpack.c.h.b16 %v3049
  %v3383 = vunpack.c.l.b16 %v3050
  %v3384 = vunpack.c.h.b16 %v3050
  %v3385 = vunpack.c.l.b16 %v3051
  %v3386 = vunpack.c.h.b16 %v3051
  %v3387 = vunpack.c.l.b16 %v3052
  %v3388 = vunpack.c.h.b16 %v3052
  %v3389 = vunpack.c.l.b16 %v3053
  %v3390 = vunpack.c.h.b16 %v3053
  %v3391 = vunpack.c.l.b16 %v3054
  %v3392 = vunpack.c.h.b16 %v3054
  %v3393 = vunpack.c.l.b16 %v3055
  %v3394 = vunpack.c.h.b16 %v3055
  %v3395 = vunpack.c.l.b16 %v3056
  %v3396 = vunpack.c.h.b16 %v3056
  %v3397 = vunpack.c.l.b16 %v3057
  %v3398 = vunpack.c.h.b16 %v3057
  %v3399 = vunpack.c.l.b16 %v3058
  %v3400 = vunpack.c.h.b16 %v3058
  %v3401 = vunpack.c.l.b16 %v3059
  %v3402 = vunpack.c.h.b16 %v3059
  %v3403 = vunpack.c.l.b16 %v3060
  %v3404 = vunpack.c.h.b16 %v3060
  %v3405 = vunpack.c.l.b16 %v3061
  %v3406 = vunpack.c.h.b16 %v3061
  %v3407 = vunpack.c.l.b16 %v3062
  %v3408 = vunpack.c.h.b16 %v3062
  %v3409 = vunpack.c.l.b16 %v3063
  %v3410 = vunpack.c.h.b16 %v3063
  %v3411 = vunpack.c.l.b16 %v3064
  %v3412 = vunpack.c.h.b16 %v3064
  %v3413 = vunpack.c.l.b16 %v3065
  %v3414 = vunpack.c.h.b16 %v3065
  %v3415 = vunpack.c.l.b16 %v3066
  %v3416 = vunpack.c.h.b16 %v3066
  %v3417 = vunpack.c.l.b16 %v3067
  %v3418 = vunpack.c.h.b16 %v3067
  %v3419 = vunpack.c.l.b16 %v3068
  %v3420 = vunpack.c.h.b16 %v3068
  %v3421 = vunpack.c.l.b16 %v3069
  %v3422 = vunpack.c.h.b16 %v3069
  %v3423 = vunpack.c.l.b16 %v3070
  %v3424 = vunpack.c.h.b16 %v3070
  %v3425 = vunpack.c.l.b16 %v3071
  %v3426 = vunpack.c.h.b16 %v3071
  %v3427 = vunpack.c.l.b16 %v3072
  %v3428 = vunpack.c.h.b16 %v3072
  %v3429 = vunpack.c.l.b16 %v3073
  %v3430 = vunpack.c.h.b16 %v3073
  %v3431 = vunpack.c.l.b16 %v3074
  %v3432 = vunpack.c.h.b16 %v3074
  %v3433 = vunpack.c.l.b16 %v3075
  %v3434 = vunpack.c.h.b16 %v3075
  %v3435 = vunpack.c.l.b16 %v3076
  %v3436 = vunpack.c.h.b16 %v3076
  %v3437 = vunpack.c.l.b16 %v3077
  %v3438 = vunpack.c.h.b16 %v3077
  %v3439 = vunpack.c.l.b16 %v3078
  %v3440 = vunpack.c.h.b16 %v3078
  %v3441 = vunpack.c.l.b16 %v3079
  %v3442 = vunpack.c.h.b16 %v3079
  %v3443 = vunpack.c.l.b16 %v3080
  %v3444 = vunpack.c.h.b16 %v3080
  %v3445 = vunpack.c.l.b16 %v3081
  %v3446 = vunpack.c.h.b16 %v3081
  %v3447 = vunpack.c.l.b16 %v3082
  %v3448 = vunpack.c.h.b16 %v3082
  %v3449 = vunpack.c.l.b16 %v3083
  %v3450 = vunpack.c.h.b16 %v3083
  %v3451 = vunpack.c.l.b16 %v3084
  %v3452 = vunpack.c.h.b16 %v3084
  %v3453 = vunpack.c.l.b16 %v3085
  %v3454 = vunpack.c.h.b16 %v3085
  %v3455 = vunpack.c.l.b16 %v3086
  %v3456 = vunpack.c.h.b16 %v3086
  %v3457 = vunpack.c.l.b16 %v3087
  %v3458 = vunpack.c.h.b16 %v3087
  %v3459 = vunpack.c.l.b16 %v3088
  %v3460 = vunpack.c.h.b16 %v3088
  %v3461 = vunpack.c.l.b16 %v3089
  %v3462 = vunpack.c.h.b16 %v3089
  %v3463 = vunpack.c.l.b16 %v3090
  %v3464 = vunpack.c.h.b16 %v3090
  %v3465 = vunpack.c.l.b16 %v3091
  %v3466 = vunpack.c.h.b16 %v3091
  %v3467 = vunpack.c.l.b16 %v3092
  %v3468 = vunpack.c.h.b16 %v3092
  %v3469 = vunpack.c.l.b16 %v3093
  %v3470 = vunpack.c.h.b16 %v3093
  %v3471 = vunpack.c.l.b16 %v3094
  %v3472 = vunpack.c.h.b16 %v3094
  %v3473 = vunpack.c.l.b16 %v3095
  %v3474 = vunpack.c.h.b16 %v3095
  %v3475 = vunpack.c.l.b16 %v3096
  %v3476 = vunpack.c.h.b16 %v3096
  %v3477 = vunpack.c.l.b16 %v3097
  %v3478 = vunpack.c.h.b16 %v3097
  %v3479 = vunpack.c.l.b16 %v3098
  %v3480 = vunpack.c.h.b16 %v3098
  %v3481 = vunpack.c.l.b16 %v3099
  %v3482 = vunpack.c.h.b16 %v3099
  %v3483 = vunpack.c.l.b16 %v3100
  %v3484 = vunpack.c.h.b16 %v3100
  %v3485 = vunpack.c.l.b16 %v3101
  %v3486 = vunpack.c.h.b16 %v3101
  %v3487 = vunpack.c.l.b16 %v3102
  %v3488 = vunpack.c.h.b16 %v3102
  %v3489 = vunpack.c.l.b16 %v3103
  %v3490 = vunpack.c.h.b16 %v3103
  %v3491 = vunpack.c.l.b16 %v3104
  %v3492 = vunpack.c.h.b16 %v3104
  %v3493 = vunpack.c.l.b16 %v3105
  %v3494 = vunpack.c.h.b16 %v3105
  %v3495 = vunpack.c.l.b16 %v3106
  %v3496 = vunpack.c.h.b16 %v3106
  %v3497 = vunpack.c.l.b16 %v3107
  %v3498 = vunpack.c.h.b16 %v3107
  %v3499 = vunpack.c.l.b16 %v3108
  %v3500 = vunpack.c.h.b16 %v3108
  %v3501 = vunpack.c.l.b16 %v3109
  %v3502 = vunpack.c.h.b16 %v3109
  %v3503 = vunpack.c.l.b16 %v3110
  %v3504 = vunpack.c.h.b16 %v3110
  %v3505 = vunpack.c.l.b16 %v3111
  %v3506 = vunpack.c.h.b16 %v3111
  %v3507 = vunpack.c.l.b16 %v3112
  %v3508 = vunpack.c.h.b16 %v3112
  %v3509 = vunpack.c.l.b16 %v3113
  %v3510 = vunpack.c.h.b16 %v3113
  %v3511 = vunpack.c.l.b16 %v3114
  %v3512 = vunpack.c.h.b16 %v3114
  %v3513 = vunpack.c.l.b16 %v3115
  %v3514 = vunpack.c.h.b16 %v3115
  %v3515 = vunpack.c.l.b16 %v3116
  %v3516 = vunpack.c.h.b16 %v3116
  %v3517 = vunpack.c.l.b16 %v3117
  %v3518 = vunpack.c.h.b16 %v3117
  %v3519 = vunpack.c.l.b16 %v3118
  %v3520 = vunpack.c.h.b16 %v3118
  %v3521 = vunpack.c.l.b16 %v3119
  %v3522 = vunpack.c.h.b16 %v3119
  %v3523 = vunpack.c.l.b16 %v3120
  %v3524 = vunpack.c.h.b16 %v3120
  %v3525 = vunpack.c.l.b16 %v3121
  %v3526 = vunpack.c.h.b16 %v3121
  %v3527 = vunpack.c.l.b16 %v3122
  %v3528 = vunpack.c.h.b16 %v3122
  %v3529 = vunpack.c.l.b16 %v3123
  %v3530 = vunpack.c.h.b16 %v3123
  %v3531 = vunpack.c.l.b16 %v3124
  %v3532 = vunpack.c.h.b16 %v3124
  %v3533 = vunpack.c.l.b16 %v3125
  %v3534 = vunpack.c.h.b16 %v3125
  %v3535 = vunpack.c.l.b16 %v3126
  %v3536 = vunpack.c.h.b16 %v3126
  %v3537 = vunpack.c.l.b16 %v3127
  %v3538 = vunpack.c.h.b16 %v3127
  %v3539 = vunpack.c.l.b16 %v3128
  %v3540 = vunpack.c.h.b16 %v3128
  %v3541 = vunpack.c.l.b16 %v3129
  %v3542 = vunpack.c.h.b16 %v3129
  %v3543 = vunpack.c.l.b16 %v3130
  %v3544 = vunpack.c.h.b16 %v3130
  %v3545 = vunpack.c.l.b16 %v3131
  %v3546 = vunpack.c.h.b16 %v3131
  %v3547 = vunpack.c.l.b16 %v3132
  %v3548 = vunpack.c.h.b16 %v3132
  %v3549 = vunpack.c.l.b16 %v3133
  %v3550 = vunpack.c.h.b16 %v3133
  %v3551 = vunpack.c.l.b16 %v3134
  %v3552 = vunpack.c.h.b16 %v3134
  %v3553 = vunpack.c.l.b16 %v3135
  %v3554 = vunpack.c.h.b16 %v3135
  %v3555 = vunpack.c.l.b16 %v3136
  %v3556 = vunpack.c.h.b16 %v3136
  %v3557 = vunpack.c.l.b16 %v3137
  %v3558 = vunpack.c.h.b16 %v3137
  %v3559 = vunpack.c.l.b16 %v3138
  %v3560 = vunpack.c.h.b16 %v3138
  %v3561 = vunpack.c.l.b16 %v3139
  %v3562 = vunpack.c.h.b16 %v3139
  %v3563 = vunpack.c.l.b16 %v3140
  %v3564 = vunpack.c.h.b16 %v3140
  %v3565 = vunpack.c.l.b16 %v3141
  %v3566 = vunpack.c.h.b16 %v3141
  %v3567 = vunpack.c.l.b16 %v3142
  %v3568 = vunpack.c.h.b16 %v3142
  %v3569 = vunpack.c.l.b16 %v3143
  %v3570 = vunpack.c.h.b16 %v3143
  %v3571 = vunpack.c.l.b16 %v3144
  %v3572 = vunpack.c.h.b16 %v3144
  %v3573 = vunpack.c.l.b16 %v3145
  %v3574 = vunpack.c.h.b16 %v3145
  %v3575 = vunpack.c.l.b16 %v3146
  %v3576 = vunpack.c.h.b16 %v3146
  %v3577 = vunpack.c.l.b16 %v3147
  %v3578 = vunpack.c.h.b16 %v3147
  %v3579 = vunpack.c.l.b16 %v3148
  %v3580 = vunpack.c.h.b16 %v3148
  %v3581 = vpack.c.b16 %v3295, %v3293
  %v3582 = vpack.c.b16 %v3296, %v3294
  %v3583 = vpack.c.b16 %v3299, %v3297
  %v3584 = vpack.c.b16 %v3300, %v3298
  %v3585 = vpack.c.b16 %v3303, %v3301
  %v3586 = vpack.c.b16 %v3304, %v3302
  %v3587 = vpack.c.b16 %v3307, %v3305
  %v3588 = vpack.c.b16 %v3308, %v3306
  %v3589 = vpack.c.b16 %v3311, %v3309
  %v3590 = vpack.c.b16 %v3312, %v3310
  %v3591 = vpack.c.b16 %v3315, %v3313
  %v3592 = vpack.c.b16 %v3316, %v3314
  %v3593 = vpack.c.b16 %v3319, %v3317
  %v3594 = vpack.c.b16 %v3320, %v3318
  %v3595 = vpack.c.b16 %v3323, %v3321
  %v3596 = vpack.c.b16 %v3324, %v3322
  %v3597 = vpack.c.b16 %v3327, %v3325
  %v3598 = vpack.c.b16 %v3328, %v3326
  %v3599 = vpack.c.b16 %v3331, %v3329
  %v3600 = vpack.c.b16 %v3332, %v3330
  %v3601 = vpack.c.b16 %v3335, %v3333
  %v3602 = vpack.c.b16 %v3336, %v3334
  %v3603 = vpack.c.b16 %v3339, %v3337
  %v3604 = vpack.c.b16 %v3340, %v3338
  %v3605 = vpack.c.b16 %v3343, %v3341
  %v3606 = vpack.c.b16 %v3344, %v3342
  %v3607 = vpack.c.b16 %v3347, %v3345
  %v3608 = vpack.c.b16 %v3348, %v3346
  %v3609 = vpack.c.b16 %v3351, %v3349
  %v3610 = vpack.c.b16 %v3352, %v3350
  %v3611 = vpack.c.b16 %v3355, %v3353
  %v3612 = vpack.c.b16 %v3356, %v3354
  %v3613 = vpack.c.b16 %v3359, %v3357
  %v3614 = vpack.c.b16 %v3360, %v3358
  %v3615 = vpack.c.b16 %v3363, %v3361
  %v3616 = vpack.c.b16 %v3364, %v3362
  %v3617 = vpack.c.b16 %v3367, %v3365
  %v3618 = vpack.c.b16 %v3368, %v3366
  %v3619 = vpack.c.b16 %v3371, %v3369
  %v3620 = vpack.c.b16 %v3372, %v3370
  %v3621 = vpack.c.b16 %v3375, %v3373
  %v3622 = vpack.c.b16 %v3376, %v3374
  %v3623 = vpack.c.b16 %v3379, %v3377
  %v3624 = vpack.c.b16 %v3380, %v3378
  %v3625 = vpack.c.b16 %v3383, %v3381
  %v3626 = vpack.c.b16 %v3384, %v3382
  %v3627 = vpack.c.b16 %v3387, %v3385
  %v3628 = vpack.c.b16 %v3388, %v3386
  %v3629 = vpack.c.b16 %v3391, %v3389
  %v3630 = vpack.c.b16 %v3392, %v3390
  %v3631 = vpack.c.b16 %v3395, %v3393
  %v3632 = vpack.c.b16 %v3396, %v3394
  %v3633 = vpack.c.b16 %v3399, %v3397
  %v3634 = vpack.c.b16 %v3400, %v3398
  %v3635 = vpack.c.b16 %v3403, %v3401
  %v3636 = vpack.c.b16 %v3404, %v3402
  %v3637 = vpack.c.b16 %v3407, %v3405
  %v3638 = vpack.c.b16 %v3408, %v3406
  %v3639 = vpack.c.b16 %v3411, %v3409
  %v3640 = vpack.c.b16 %v3412, %v3410
  %v3641 = vpack.c.b16 %v3415, %v3413
  %v3642 = vpack.c.b16 %v3416, %v3414
  %v3643 = vpack.c.b16 %v3419, %v3417
  %v3644 = vpack.c.b16 %v3420, %v3418
  %v3645 = vpack.c.b16 %v3423, %v3421
  %v3646 = vpack.c.b16 %v3424, %v3422
  %v3647 = vpack.c.b16 %v3427, %v3425
  %v3648 = vpack.c.b16 %v3428, %v3426
  %v3649 = vpack.c.b16 %v3431, %v3429
  %v3650 = vpack.c.b16 %v3432, %v3430
  %v3651 = vpack.c.b16 %v3435, %v3433
  %v3652 = vpack.c.b16 %v3436, %v3434
  %v3653 = vpack.c.b16 %v3439, %v3437
  %v3654 = vpack.c.b16 %v3440, %v3438
  %v3655 = vpack.c.b16 %v3443, %v3441
  %v3656 = vpack.c.b16 %v3444, %v3442
  %v3657 = vpack.c.b16 %v3447, %v3445
  %v3658 = vpack.c.b16 %v3448, %v3446
  %v3659 = vpack.c.b16 %v3451, %v3449
  %v3660 = vpack.c.b16 %v3452, %v3450
  %v3661 = vpack.c.b16 %v3455, %v3453
  %v3662 = vpack.c.b16 %v3456, %v3454
  %v3663 = vpack.c.b16 %v3459, %v3457
  %v3664 = vpack.c.b16 %v3460, %v3458
  %v3665 = vpack.c.b16 %v3463, %v3461
  %v3666 = vpack.c.b16 %v3464, %v3462
  %v3667 = vpack.c.b16 %v3467, %v3465
  %v3668 = vpack.c.b16 %v3468, %v3466
  %v3669 = vpack.c.b16 %v3471, %v3469
  %v3670 = vpack.c.b16 %v3472, %v3470
  %v3671 = vpack.c.b16 %v3475, %v3473
  %v3672 = vpack.c.b16 %v3476, %v3474
  %v3673 = vpack.c.b16 %v3479, %v3477
  %v3674 = vpack.c.b16 %v3480, %v3478
  %v3675 = vpack.c.b16 %v3483, %v3481
  %v3676 = vpack.c.b16 %v3484, %v3482
  %v3677 = vpack.c.b16 %v3487, %v3485
  %v3678 = vpack.c.b16 %v3488, %v3486
  %v3679 = vpack.c.b16 %v3491, %v3489
  %v3680 = vpack.c.b16 %v3492, %v3490
  %v3681 = vpack.c.b16 %v3495, %v3493
  %v3682 = vpack.c.b16 %v3496, %v3494
  %v3683 = vpack.c.b16 %v3499, %v3497
  %v3684 = vpack.c.b16 %v3500, %v3498
  %v3685 = vpack.c.b16 %v3503, %v3501
  %v3686 = vpack.c.b16 %v3504, %v3502
  %v3687 = vpack.c.b16 %v3507, %v3505
  %v3688 = vpack.c.b16 %v3508, %v3506
  %v3689 = vpack.c.b16 %v3511, %v3509
  %v3690 = vpack.c.b16 %v3512, %v3510
  %v3691 = vpack.c.b16 %v3515, %v3513
  %v3692 = vpack.c.b16 %v3516, %v3514
  %v3693 = vpack.c.b16 %v3519, %v3517
  %v3694 = vpack.c.b16 %v3520, %v3518
  %v3695 = vpack.c.b16 %v3523, %v3521
  %v3696 = vpack.c.b16 %v3524, %v3522
  %v3697 = vpack.c.b16 %v3527, %v3525
  %v3698 = vpack.c.b16 %v3528, %v3526
  %v3699 = vpack.c.b16 %v3531, %v3529
  %v3700 = vpack.c.b16 %v3532, %v3530
  %v3701 = vpack.c.b16 %v3535, %v3533
  %v3702 = vpack.c.b16 %v3536, %v3534
  %v3703 = vpack.c.b16 %v3539, %v3537
  %v3704 = vpack.c.b16 %v3540, %v3538
  %v3705 = vpack.c.b16 %v3543, %v3541
  %v3706 = vpack.c.b16 %v3544, %v3542
  %v3707 = vpack.c.b16 %v3547, %v3545
  %v3708 = vpack.c.b16 %v3548, %v3546
  %v3709 = vpack.c.b16 %v3551, %v3549
  %v3710 = vpack.c.b16 %v3552, %v3550
  %v3711 = vpack.c.b16 %v3555, %v3553
  %v3712 = vpack.c.b16 %v3556, %v3554
  %v3713 = vpack.c.b16 %v3559, %v3557
  %v3714 = vpack.c.b16 %v3560, %v3558
  %v3715 = vpack.c.b16 %v3563, %v3561
  %v3716 = vpack.c.b16 %v3564, %v3562
  %v3717 = vpack.c.b16 %v3567, %v3565
  %v3718 = vpack.c.b16 %v3568, %v3566
  %v3719 = vpack.c.b16 %v3571, %v3569
  %v3720 = vpack.c.b16 %v3572, %v3570
  %v3721 = vpack.c.b16 %v3575, %v3573
  %v3722 = vpack.c.b16 %v3576, %v3574
  %v3723 = vpack.c.b16 %v3579, %v3577
  %v3724 = vpack.c.b16 %v3580, %v3578
  %3869 = vmatprep.subr.bf16.mxu0 %v3596
  %3870 = vmatpush1.bf16.msra.mxu0 %v3595
  %3871 = vmatprep.subr.bf16.mxu0 %v3594
  %3872 = vmatpush1.bf16.msra.mxu0 %v3593
  %3873 = vmatprep.subr.bf16.mxu0 %v3592
  %3874 = vmatpush1.bf16.msra.mxu0 %v3591
  %3875 = vmatprep.subr.bf16.mxu0 %v3590
  %3876 = vmatpush1.bf16.msra.mxu0 %v3589
  %3877 = vmatprep.subr.bf16.mxu0 %v3588
  %3878 = vmatpush1.bf16.msra.mxu0 %v3587
  %3879 = vmatprep.subr.bf16.mxu0 %v3586
  %3880 = vmatpush1.bf16.msra.mxu0 %v3585
  %3881 = vmatprep.subr.bf16.mxu0 %v3584
  %3882 = vmatpush1.bf16.msra.mxu0 %v3583
  %3883 = vmatprep.subr.bf16.mxu0 %v3582
  %3884 = vmatpush1.bf16.msra.mxu0 %v3581
  %3885 = vmatprep.subr.bf16.mxu0 %v3612
  %3886 = vmatpush2.bf16.msra.mxu0 %v3611
  %3887 = vmatprep.subr.bf16.mxu0 %v3610
  %3888 = vmatpush2.bf16.msra.mxu0 %v3609
  %3889 = vmatprep.subr.bf16.mxu0 %v3608
  %3890 = vmatpush2.bf16.msra.mxu0 %v3607
  %3891 = vmatprep.subr.bf16.mxu0 %v3606
  %3892 = vmatpush2.bf16.msra.mxu0 %v3605
  %3893 = vmatprep.subr.bf16.mxu0 %v3604
  %3894 = vmatpush2.bf16.msra.mxu0 %v3603
  %3895 = vmatprep.subr.bf16.mxu0 %v3602
  %3896 = vmatpush2.bf16.msra.mxu0 %v3601
  %3897 = vmatprep.subr.bf16.mxu0 %v3600
  %3898 = vmatpush2.bf16.msra.mxu0 %v3599
  %3899 = vmatprep.subr.bf16.mxu0 %v3598
  %3900 = vmatpush2.bf16.msra.mxu0 %v3597
  %3901 = vmatprep.mubr.bf16.mxu0 %v2988
  %3902 = vmatmul.mubr.bf16.gmra.mxu0 %v2987
  %v3903 = vpop.f32.mrf.mxu0
  %v3904 = vadd.f32 0.0, %v3903
  %v3905 = vpop.f32.mrf.mxu0
  %v3906 = vadd.f32 0.0, %v3905
  %v3907 = vpop.f32.mrf.mxu0
  %v3908 = vadd.f32 0.0, %v3907
  %v3909 = vpop.f32.mrf.mxu0
  %v3910 = vadd.f32 0.0, %v3909
  %3911 = vmatprep.mubr.bf16.mxu0 %v2997
  %3912 = vmatmul.mubr.bf16.gmra.mxu0 %v2996
  %v3913 = vpop.f32.mrf.mxu0
  %v3914 = vadd.f32 0.0, %v3913
  %v3915 = vpop.f32.mrf.mxu0
  %v3916 = vadd.f32 0.0, %v3915
  %v3917 = vpop.f32.mrf.mxu0
  %v3918 = vpop.f32.mrf.mxu0
  %3919 = vdwg.mxu0
  %3920 = vmatprep.subr.bf16.mxu0 %v3628
  %3921 = vmatpush1.bf16.msra.mxu0 %v3627
  %3922 = vmatprep.subr.bf16.mxu0 %v3626
  %3923 = vmatpush1.bf16.msra.mxu0 %v3625
  %3924 = vmatprep.subr.bf16.mxu0 %v3624
  %3925 = vmatpush1.bf16.msra.mxu0 %v3623
  %3926 = vmatprep.subr.bf16.mxu0 %v3622
  %3927 = vmatpush1.bf16.msra.mxu0 %v3621
  %3928 = vmatprep.subr.bf16.mxu0 %v3620
  %3929 = vmatpush1.bf16.msra.mxu0 %v3619
  %3930 = vmatprep.subr.bf16.mxu0 %v3618
  %3931 = vmatpush1.bf16.msra.mxu0 %v3617
  %3932 = vmatprep.subr.bf16.mxu0 %v3616
  %3933 = vmatpush1.bf16.msra.mxu0 %v3615
  %3934 = vmatprep.subr.bf16.mxu0 %v3614
  %3935 = vmatpush1.bf16.msra.mxu0 %v3613
  %3936 = vmatprep.subr.bf16.mxu0 %v3644
  %3937 = vmatpush2.bf16.msra.mxu0 %v3643
  %3938 = vmatprep.subr.bf16.mxu0 %v3642
  %3939 = vmatpush2.bf16.msra.mxu0 %v3641
  %3940 = vmatprep.subr.bf16.mxu0 %v3640
  %3941 = vmatpush2.bf16.msra.mxu0 %v3639
  %3942 = vmatprep.subr.bf16.mxu0 %v3638
  %3943 = vmatpush2.bf16.msra.mxu0 %v3637
  %3944 = vmatprep.subr.bf16.mxu0 %v3636
  %3945 = vmatpush2.bf16.msra.mxu0 %v3635
  %3946 = vmatprep.subr.bf16.mxu0 %v3634
  %3947 = vmatpush2.bf16.msra.mxu0 %v3633
  %3948 = vmatprep.subr.bf16.mxu0 %v3632
  %3949 = vmatpush2.bf16.msra.mxu0 %v3631
  %3950 = vmatprep.subr.bf16.mxu0 %v3630
  %3951 = vmatpush2.bf16.msra.mxu0 %v3629
  %3952 = vmatprep.mubr.bf16.mxu0 %v2990
  %3953 = vmatmul.mubr.bf16.gmra.mxu0 %v2989
  %v3954 = vpop.f32.mrf.mxu0
  %v3955 = vadd.f32 %v3904, %v3954
  %v3956 = vpop.f32.mrf.mxu0
  %v3957 = vadd.f32 %v3906, %v3956
  %v3958 = vpop.f32.mrf.mxu0
  %v3959 = vadd.f32 %v3908, %v3958
  %v3960 = vpop.f32.mrf.mxu0
  %v3961 = vadd.f32 %v3910, %v3960
  %3962 = vmatprep.mubr.bf16.mxu0 %v2999
  %3963 = vmatmul.mubr.bf16.gmra.mxu0 %v2998
  %v3964 = vpop.f32.mrf.mxu0
  %v3965 = vadd.f32 %v3914, %v3964
  %v3966 = vpop.f32.mrf.mxu0
  %v3967 = vadd.f32 %v3916, %v3966
  %v3968 = vpop.f32.mrf.mxu0
  %v3969 = vpop.f32.mrf.mxu0
  %3970 = vdwg.mxu0
  %3971 = vmatprep.subr.bf16.mxu0 %v3660
  %3972 = vmatpush1.bf16.msra.mxu0 %v3659
  %3973 = vmatprep.subr.bf16.mxu0 %v3658
  %3974 = vmatpush1.bf16.msra.mxu0 %v3657
  %3975 = vmatprep.subr.bf16.mxu0 %v3656
  %3976 = vmatpush1.bf16.msra.mxu0 %v3655
  %3977 = vmatprep.subr.bf16.mxu0 %v3654
  %3978 = vmatpush1.bf16.msra.mxu0 %v3653
  %3979 = vmatprep.subr.bf16.mxu0 %v3652
  %3980 = vmatpush1.bf16.msra.mxu0 %v3651
  %3981 = vmatprep.subr.bf16.mxu0 %v3650
  %3982 = vmatpush1.bf16.msra.mxu0 %v3649
  %3983 = vmatprep.subr.bf16.mxu0 %v3648
  %3984 = vmatpush1.bf16.msra.mxu0 %v3647
  %3985 = vmatprep.subr.bf16.mxu0 %v3646
  %3986 = vmatpush1.bf16.msra.mxu0 %v3645
  %3987 = vmatprep.subr.bf16.mxu0 %v3676
  %3988 = vmatpush2.bf16.msra.mxu0 %v3675
  %3989 = vmatprep.subr.bf16.mxu0 %v3674
  %3990 = vmatpush2.bf16.msra.mxu0 %v3673
  %3991 = vmatprep.subr.bf16.mxu0 %v3672
  %3992 = vmatpush2.bf16.msra.mxu0 %v3671
  %3993 = vmatprep.subr.bf16.mxu0 %v3670
  %3994 = vmatpush2.bf16.msra.mxu0 %v3669
  %3995 = vmatprep.subr.bf16.mxu0 %v3668
  %3996 = vmatpush2.bf16.msra.mxu0 %v3667
  %3997 = vmatprep.subr.bf16.mxu0 %v3666
  %3998 = vmatpush2.bf16.msra.mxu0 %v3665
  %3999 = vmatprep.subr.bf16.mxu0 %v3664
  %4000 = vmatpush2.bf16.msra.mxu0 %v3663
  %4001 = vmatprep.subr.bf16.mxu0 %v3662
  %4002 = vmatpush2.bf16.msra.mxu0 %v3661
  %4003 = vmatprep.mubr.bf16.mxu0 %v2992
  %4004 = vmatmul.mubr.bf16.gmra.mxu0 %v2991
  %v4005 = vpop.f32.mrf.mxu0
  %v4006 = vadd.f32 %v3955, %v4005
  %v4007 = vpop.f32.mrf.mxu0
  %v4008 = vadd.f32 %v3957, %v4007
  %v4009 = vpop.f32.mrf.mxu0
  %v4010 = vadd.f32 %v3959, %v4009
  %v4011 = vpop.f32.mrf.mxu0
  %v4012 = vadd.f32 %v3961, %v4011
  %4013 = vmatprep.mubr.bf16.mxu0 %v3001
  %4014 = vmatmul.mubr.bf16.gmra.mxu0 %v3000
  %v4015 = vpop.f32.mrf.mxu0
  %v4016 = vadd.f32 %v3965, %v4015
  %v4017 = vpop.f32.mrf.mxu0
  %v4018 = vadd.f32 %v3967, %v4017
  %v4019 = vpop.f32.mrf.mxu0
  %v4020 = vpop.f32.mrf.mxu0
  %4021 = vdwg.mxu0
  %4022 = vmatprep.subr.bf16.mxu0 %v3692
  %4023 = vmatpush1.bf16.msra.mxu0 %v3691
  %4024 = vmatprep.subr.bf16.mxu0 %v3690
  %4025 = vmatpush1.bf16.msra.mxu0 %v3689
  %4026 = vmatprep.subr.bf16.mxu0 %v3688
  %4027 = vmatpush1.bf16.msra.mxu0 %v3687
  %4028 = vmatprep.subr.bf16.mxu0 %v3686
  %4029 = vmatpush1.bf16.msra.mxu0 %v3685
  %4030 = vmatprep.subr.bf16.mxu0 %v3684
  %4031 = vmatpush1.bf16.msra.mxu0 %v3683
  %4032 = vmatprep.subr.bf16.mxu0 %v3682
  %4033 = vmatpush1.bf16.msra.mxu0 %v3681
  %4034 = vmatprep.subr.bf16.mxu0 %v3680
  %4035 = vmatpush1.bf16.msra.mxu0 %v3679
  %4036 = vmatprep.subr.bf16.mxu0 %v3678
  %4037 = vmatpush1.bf16.msra.mxu0 %v3677
  %4038 = vmatprep.subr.bf16.mxu0 %v3708
  %4039 = vmatpush2.bf16.msra.mxu0 %v3707
  %4040 = vmatprep.subr.bf16.mxu0 %v3706
  %4041 = vmatpush2.bf16.msra.mxu0 %v3705
  %4042 = vmatprep.subr.bf16.mxu0 %v3704
  %4043 = vmatpush2.bf16.msra.mxu0 %v3703
  %4044 = vmatprep.subr.bf16.mxu0 %v3702
  %4045 = vmatpush2.bf16.msra.mxu0 %v3701
  %4046 = vmatprep.subr.bf16.mxu0 %v3700
  %4047 = vmatpush2.bf16.msra.mxu0 %v3699
  %4048 = vmatprep.subr.bf16.mxu0 %v3698
  %4049 = vmatpush2.bf16.msra.mxu0 %v3697
  %4050 = vmatprep.subr.bf16.mxu0 %v3696
  %4051 = vmatpush2.bf16.msra.mxu0 %v3695
  %4052 = vmatprep.subr.bf16.mxu0 %v3694
  %4053 = vmatpush2.bf16.msra.mxu0 %v3693
  %4054 = vmatprep.mubr.bf16.mxu0 %v2994
  %4055 = vmatmul.mubr.bf16.gmra.mxu0 %v2993
  %v4056 = vpop.f32.mrf.mxu0
  %v4057 = vadd.f32 %v4006, %v4056
  %v4058 = vpop.f32.mrf.mxu0
  %v4059 = vadd.f32 %v4008, %v4058
  %v4060 = vpop.f32.mrf.mxu0
  %v4061 = vadd.f32 %v4010, %v4060
  %v4062 = vpop.f32.mrf.mxu0
  %v4063 = vadd.f32 %v4012, %v4062
  %4064 = vmatprep.mubr.bf16.mxu0 %v3003
  %4065 = vmatmul.mubr.bf16.gmra.mxu0 %v3002
  %v4066 = vpop.f32.mrf.mxu0
  %v4067 = vadd.f32 %v4016, %v4066
  %v4068 = vpop.f32.mrf.mxu0
  %v4069 = vadd.f32 %v4018, %v4068
  %v4070 = vpop.f32.mrf.mxu0
  %v4071 = vpop.f32.mrf.mxu0
  %4072 = vdwg.mxu0
  %4073 = vmatprep.subr.bf16.mxu0 %v3724
  %4074 = vmatpush1.bf16.msra.mxu0 %v3723
  %4075 = vmatprep.subr.bf16.mxu0 %v3722
  %4076 = vmatpush1.bf16.msra.mxu0 %v3721
  %4077 = vmatprep.subr.bf16.mxu0 %v3720
  %4078 = vmatpush1.bf16.msra.mxu0 %v3719
  %4079 = vmatprep.subr.bf16.mxu0 %v3718
  %4080 = vmatpush1.bf16.msra.mxu0 %v3717
  %4081 = vmatprep.subr.bf16.mxu0 %v3716
  %4082 = vmatpush1.bf16.msra.mxu0 %v3715
  %4083 = vmatprep.subr.bf16.mxu0 %v3714
  %4084 = vmatpush1.bf16.msra.mxu0 %v3713
  %4085 = vmatprep.subr.bf16.mxu0 %v3712
  %4086 = vmatpush1.bf16.msra.mxu0 %v3711
  %4087 = vmatprep.subr.bf16.mxu0 %v3710
  %4088 = vmatpush1.bf16.msra.mxu0 %v3709
  %4089 = vmatprep.subr.bf16.mxu0 0
  %4090 = vmatpush2.bf16.msra.mxu0 0
  %4091 = vmatprep.subr.bf16.mxu0 0
  %4092 = vmatpush2.bf16.msra.mxu0 0
  %4093 = vmatprep.subr.bf16.mxu0 0
  %4094 = vmatpush2.bf16.msra.mxu0 0
  %4095 = vmatprep.subr.bf16.mxu0 0
  %4096 = vmatpush2.bf16.msra.mxu0 0
  %4097 = vmatprep.subr.bf16.mxu0 0
  %4098 = vmatpush2.bf16.msra.mxu0 0
  %4099 = vmatprep.subr.bf16.mxu0 0
  %4100 = vmatpush2.bf16.msra.mxu0 0
  %4101 = vmatprep.subr.bf16.mxu0 0
  %4102 = vmatpush2.bf16.msra.mxu0 0
  %4103 = vmatprep.subr.bf16.mxu0 0
  %4104 = vmatpush2.bf16.msra.mxu0 0
  %4105 = vmatprep.mubr.bf16.mxu0 0
  %4106 = vmatmul.mubr.bf16.gmra.mxu0 %v2995
  %v4107 = vpop.f32.mrf.mxu0
  %v4108 = vadd.f32 %v4057, %v4107
  %v4109 = vpop.f32.mrf.mxu0
  %v4110 = vadd.f32 %v4059, %v4109
  %v4111 = vpop.f32.mrf.mxu0
  %v4112 = vadd.f32 %v4061, %v4111
  %v4113 = vpop.f32.mrf.mxu0
  %v4114 = vadd.f32 %v4063, %v4113
  %4115 = vmatprep.mubr.bf16.mxu0 0
  %4116 = vmatmul.mubr.bf16.gmra.mxu0 %v3004
  %v4117 = vpop.f32.mrf.mxu0
  %v4118 = vadd.f32 %v4067, %v4117
  %v4119 = vpop.f32.mrf.mxu0
  %v4120 = vadd.f32 %v4069, %v4119
  %v4121 = vpop.f32.mrf.mxu0
  %v4122 = vpop.f32.mrf.mxu0
  %4123 = vdwg.mxu0
  %v4124 = vadd.f32 %v4108, %v4112
  %v4125 = vadd.f32 %v4124, %v4118
  %v4126 = vrot.slane %v4125, 4
  %v4127 = vadd.f32 %v4125, %v4126
  %v4128 = vrot.slane %v4127, 2
  %v4129 = vadd.f32 %v4127, %v4128
  %v4130 = vrot.slane %v4129, 1
  %v4131 = vadd.f32 %v4129, %v4130
  %v4132 = vadd.f32 %v4110, %v4114
  %v4133 = vadd.f32 %v4132, %v4120
  %v4134 = vrot.slane %v4133, 4
  %v4135 = vadd.f32 %v4133, %v4134
  %v4136 = vrot.slane %v4135, 2
  %v4137 = vadd.f32 %v4135, %v4136
  %v4138 = vrot.slane %v4137, 1
  %v4139 = vadd.f32 %v4137, %v4138
  %v4140 = vrcp.pop 18.0
  %v4141 = vmul.f32 %v4131, %v4140
  %v4142 = vmul.f32 %v4139, %v4140
  %v4143 = vmul.f32 %v4108, %v4108
  %v4144 = vmul.f32 %v4110, %v4110
  %v4145 = vmul.f32 %v4112, %v4112
  %v4146 = vmul.f32 %v4114, %v4114
  %v4147 = vmul.f32 %v4118, %v4118
  %v4148 = vmul.f32 %v4120, %v4120
  %v4149 = vadd.f32 %v4143, %v4145
  %v4150 = vadd.f32 %v4149, %v4147
  %v4151 = vrot.slane %v4150, 4
  %v4152 = vadd.f32 %v4150, %v4151
  %v4153 = vrot.slane %v4152, 2
  %v4154 = vadd.f32 %v4152, %v4153
  %v4155 = vrot.slane %v4154, 1
  %v4156 = vadd.f32 %v4154, %v4155
  %v4157 = vadd.f32 %v4144, %v4146
  %v4158 = vadd.f32 %v4157, %v4148
  %v4159 = vrot.slane %v4158, 4
  %v4160 = vadd.f32 %v4158, %v4159
  %v4161 = vrot.slane %v4160, 2
  %v4162 = vadd.f32 %v4160, %v4161
  %v4163 = vrot.slane %v4162, 1
  %v4164 = vadd.f32 %v4162, %v4163
  %v4165 = vmul.f32 %v4156, %v4140
  %v4166 = vmul.f32 %v4164, %v4140
  %v4167 = vmul.f32 %v4141, %v4141
  %v4168 = vmul.f32 %v4142, %v4142
  %v4169 = vsub.f32 %v4165, %v4167
  %v4170 = vsub.f32 %v4166, %v4168
  %v4171 = vsub.f32 %v4108, %v4141
  %v4172 = vsub.f32 %v4110, %v4142
  %v4173 = vsub.f32 %v4112, %v4141
  %v4174 = vsub.f32 %v4114, %v4142
  %v4175 = vsub.f32 %v4118, %v4141
  %v4176 = vsub.f32 %v4120, %v4142
  %v4177 = vadd.f32 %v4169, 1e-05
  %v4178 = vadd.f32 %v4170, 1e-05
  %v4179 = vrsqrt.pop %v4177
  %v4180 = vrsqrt.pop %v4178
  %v4181 = vmul.f32 %v4171, %v4179
  %v4182 = vmul.f32 %v4172, %v4180
  %v4183 = vmul.f32 %v4173, %v4179
  %v4184 = vmul.f32 %v4174, %v4180
  %v4185 = vmul.f32 %v4175, %v4179
  %v4186 = vmul.f32 %v4176, %v4180
  %v4187 = vld [vmem:[%s6] sm:$0x3]
  %v4189 = vlaneseq
  %v4190 = vshrl.u32 %v4189, 7
  %v4191 = vsub.s32 0, %v4190
  %v4192 = vrot.slane %v4187, %v4191
  %v4193 = vlaneseq
  %v4194 = vshrl.u32 %v4193, 7
  %v4195 = vsub.s32 1, %v4194
  %v4196 = vrot.slane %v4187, %v4195
  %v4199 = vmul.f32 %v4181, %v4192
  %v4200 = vmul.f32 %v4182, %v4196
  %v4201 = vmul.f32 %v4183, %v4192
  %v4202 = vmul.f32 %v4184, %v4196
  %v4203 = vmul.f32 %v4185, %v4192
  %v4204 = vmul.f32 %v4186, %v4196
  %v4205 = vld [vmem:[%s7] sm:$0x3]
  %v4207 = vlaneseq
  %v4208 = vshrl.u32 %v4207, 7
  %v4209 = vsub.s32 0, %v4208
  %v4210 = vrot.slane %v4205, %v4209
  %v4211 = vlaneseq
  %v4212 = vshrl.u32 %v4211, 7
  %v4213 = vsub.s32 1, %v4212
  %v4214 = vrot.slane %v4205, %v4213
  %v4217 = vadd.f32 %v4199, %v4210
  %v4218 = vadd.f32 %v4200, %v4214
  %v4219 = vadd.f32 %v4201, %v4210
  %v4220 = vadd.f32 %v4202, %v4214
  %v4221 = vadd.f32 %v4203, %v4210
  %v4222 = vadd.f32 %v4204, %v4214
  %vm4223 = vcmp.ge.f32.partialorder %v4217, 0.0
  %vm4224 = vcmp.ge.f32.partialorder %v4218, 0.0
  %vm4225 = vcmp.ge.f32.partialorder %v4219, 0.0
  %vm4226 = vcmp.ge.f32.partialorder %v4220, 0.0
  %vm4227 = vcmp.ge.f32.partialorder %v4221, 0.0
  %vm4228 = vcmp.ge.f32.partialorder %v4222, 0.0
  %v4229 = vmul.f32 %v4217, 0.2
  %v4230 = vmul.f32 %v4218, 0.2
  %v4231 = vmul.f32 %v4219, 0.2
  %v4232 = vmul.f32 %v4220, 0.2
  %v4233 = vmul.f32 %v4221, 0.2
  %v4234 = vmul.f32 %v4222, 0.2
  %v4235 = vsel %vm4223, %v4217, %v4229
  %v4236 = vsel %vm4224, %v4218, %v4230
  %v4237 = vsel %vm4225, %v4219, %v4231
  %v4238 = vsel %vm4226, %v4220, %v4232
  %v4239 = vsel %vm4227, %v4221, %v4233
  %v4240 = vsel %vm4228, %v4222, %v4234
  %v4243 = vrot.slane %v4235, 2
  %v4244 = vrot.slane %v4236, 2
  %v4247 = vrot.slane %v4235, 4
  %v4248 = vrot.slane %v4236, 4
  %v4251 = vrot.slane %v4235, 6
  %v4252 = vrot.slane %v4236, 6
  %v4257 = vrot.slane %v4237, 2
  %v4258 = vrot.slane %v4238, 2
  %v4261 = vrot.slane %v4237, 4
  %v4262 = vrot.slane %v4238, 4
  %v4265 = vrot.slane %v4237, 6
  %v4266 = vrot.slane %v4238, 6
  %v4269 = vsel %vm2921, %v4235, 0.0
  %v4270 = vsel %vm2921, %v4236, 0.0
  %v4271 = vsel %vm2921, %v4243, 0.0
  %v4272 = vsel %vm2921, %v4244, 0.0
  %v4273 = vsel %vm2921, %v4247, 0.0
  %v4274 = vsel %vm2921, %v4248, 0.0
  %v4275 = vsel %vm2921, %v4251, 0.0
  %v4276 = vsel %vm2921, %v4252, 0.0
  %v4277 = vsel %vm2921, %v4237, 0.0
  %v4278 = vsel %vm2921, %v4238, 0.0
  %v4279 = vsel %vm2921, %v4257, 0.0
  %v4280 = vsel %vm2921, %v4258, 0.0
  %v4281 = vsel %vm2921, %v4261, 0.0
  %v4282 = vsel %vm2921, %v4262, 0.0
  %v4283 = vsel %vm2921, %v4265, 0.0
  %v4284 = vsel %vm2921, %v4266, 0.0
  %v4285 = vsel %vm2921, %v4239, 0.0
  %v4286 = vsel %vm2921, %v4240, 0.0
  %v4287 = vpack.c.bf16 %v4269, %v4269
  %v4288 = vpack.c.bf16 %v4270, %v4270
  %v4289 = vpack.c.bf16 %v4271, %v4271
  %v4290 = vpack.c.bf16 %v4272, %v4272
  %v4291 = vpack.c.bf16 %v4273, %v4273
  %v4292 = vpack.c.bf16 %v4274, %v4274
  %v4293 = vpack.c.bf16 %v4275, %v4275
  %v4294 = vpack.c.bf16 %v4276, %v4276
  %v4295 = vpack.c.bf16 %v4277, %v4277
  %v4296 = vpack.c.bf16 %v4278, %v4278
  %v4297 = vpack.c.bf16 %v4279, %v4279
  %v4298 = vpack.c.bf16 %v4280, %v4280
  %v4299 = vpack.c.bf16 %v4281, %v4281
  %v4300 = vpack.c.bf16 %v4282, %v4282
  %v4301 = vpack.c.bf16 %v4283, %v4283
  %v4302 = vpack.c.bf16 %v4284, %v4284
  %v4303 = vpack.c.bf16 %v4285, %v4285
  %v4304 = vpack.c.bf16 %v4286, %v4286
  %v4305 = vld [vmem:[%s8] sm:$0xf]
  %v4306 = vld [vmem:[%s8 + $0x4] sm:$0xf]
  %v4307 = vld [vmem:[%s8 + $0x8] sm:$0xf]
  %v4308 = vld [vmem:[%s8 + $0xc] sm:$0xf]
  %v4309 = vld [vmem:[%s8 + $0x10] sm:$0xf]
  %v4310 = vld [vmem:[%s8 + $0x14] sm:$0xf]
  %v4311 = vld [vmem:[%s8 + $0x18] sm:$0xf]
  %v4312 = vld [vmem:[%s8 + $0x1c] sm:$0xf]
  %v4313 = vld [vmem:[%s8 + $0x20] sm:$0xf]
  %v4314 = vld [vmem:[%s8 + $0x24] sm:$0xf]
  %v4315 = vld [vmem:[%s8 + $0x28] sm:$0xf]
  %v4316 = vld [vmem:[%s8 + $0x2c] sm:$0xf]
  %v4317 = vld [vmem:[%s8 + $0x30] sm:$0xf]
  %v4318 = vld [vmem:[%s8 + $0x34] sm:$0xf]
  %v4319 = vld [vmem:[%s8 + $0x38] sm:$0xf]
  %v4320 = vld [vmem:[%s8 + $0x3c] sm:$0xf]
  %v4321 = vld [vmem:[%s8 + $0x40] sm:$0xf]
  %v4322 = vld [vmem:[%s8 + $0x44] sm:$0xf]
  %v4323 = vld [vmem:[%s8 + $0x48] sm:$0xf]
  %v4324 = vld [vmem:[%s8 + $0x4c] sm:$0xf]
  %v4325 = vld [vmem:[%s8 + $0x50] sm:$0xf]
  %v4326 = vld [vmem:[%s8 + $0x54] sm:$0xf]
  %v4327 = vld [vmem:[%s8 + $0x58] sm:$0xf]
  %v4328 = vld [vmem:[%s8 + $0x5c] sm:$0xf]
  %v4329 = vld [vmem:[%s8 + $0x60] sm:$0xf]
  %v4330 = vld [vmem:[%s8 + $0x64] sm:$0xf]
  %v4331 = vld [vmem:[%s8 + $0x68] sm:$0xf]
  %v4332 = vld [vmem:[%s8 + $0x6c] sm:$0xf]
  %v4333 = vld [vmem:[%s8 + $0x70] sm:$0xf]
  %v4334 = vld [vmem:[%s8 + $0x74] sm:$0xf]
  %v4335 = vld [vmem:[%s8 + $0x78] sm:$0xf]
  %v4336 = vld [vmem:[%s8 + $0x7c] sm:$0xf]
  %v4337 = vld [vmem:[%s8 + $0x80] sm:$0xf]
  %v4338 = vld [vmem:[%s8 + $0x84] sm:$0xf]
  %v4339 = vld [vmem:[%s8 + $0x88] sm:$0xf]
  %v4340 = vld [vmem:[%s8 + $0x8c] sm:$0xf]
  %v4341 = vld [vmem:[%s8 + $0x90] sm:$0xf]
  %v4342 = vld [vmem:[%s8 + $0x94] sm:$0xf]
  %v4343 = vld [vmem:[%s8 + $0x98] sm:$0xf]
  %v4344 = vld [vmem:[%s8 + $0x9c] sm:$0xf]
  %v4345 = vld [vmem:[%s8 + $0xa0] sm:$0xf]
  %v4346 = vld [vmem:[%s8 + $0xa4] sm:$0xf]
  %v4347 = vld [vmem:[%s8 + $0xa8] sm:$0xf]
  %v4348 = vld [vmem:[%s8 + $0xac] sm:$0xf]
  %v4349 = vld [vmem:[%s8 + $0xb0] sm:$0xf]
  %v4350 = vld [vmem:[%s8 + $0xb4] sm:$0xf]
  %v4351 = vld [vmem:[%s8 + $0xb8] sm:$0xf]
  %v4352 = vld [vmem:[%s8 + $0xbc] sm:$0xf]
  %v4353 = vld [vmem:[%s8 + $0xc0] sm:$0xf]
  %v4354 = vld [vmem:[%s8 + $0xc4] sm:$0xf]
  %v4355 = vld [vmem:[%s8 + $0xc8] sm:$0xf]
  %v4356 = vld [vmem:[%s8 + $0xcc] sm:$0xf]
  %v4357 = vld [vmem:[%s8 + $0xd0] sm:$0xf]
  %v4358 = vld [vmem:[%s8 + $0xd4] sm:$0xf]
  %v4359 = vld [vmem:[%s8 + $0xd8] sm:$0xf]
  %v4360 = vld [vmem:[%s8 + $0xdc] sm:$0xf]
  %v4361 = vld [vmem:[%s8 + $0xe0] sm:$0xf]
  %v4362 = vld [vmem:[%s8 + $0xe4] sm:$0xf]
  %v4363 = vld [vmem:[%s8 + $0xe8] sm:$0xf]
  %v4364 = vld [vmem:[%s8 + $0xec] sm:$0xf]
  %v4365 = vld [vmem:[%s8 + $0xf0] sm:$0xf]
  %v4366 = vld [vmem:[%s8 + $0xf4] sm:$0xf]
  %v4367 = vld [vmem:[%s8 + $0xf8] sm:$0xf]
  %v4368 = vld [vmem:[%s8 + $0xfc] sm:$0xf]
  %v4369 = vld [vmem:[%s8 + $0x100] sm:$0xf]
  %v4370 = vld [vmem:[%s8 + $0x104] sm:$0xf]
  %v4371 = vld [vmem:[%s8 + $0x108] sm:$0xf]
  %v4372 = vld [vmem:[%s8 + $0x10c] sm:$0xf]
  %v4373 = vld [vmem:[%s8 + $0x110] sm:$0xf]
  %v4374 = vld [vmem:[%s8 + $0x114] sm:$0xf]
  %v4375 = vld [vmem:[%s8 + $0x118] sm:$0xf]
  %v4376 = vld [vmem:[%s8 + $0x11c] sm:$0xf]
  %v4377 = vld [vmem:[%s8 + $0x120] sm:$0xf]
  %v4378 = vld [vmem:[%s8 + $0x124] sm:$0xf]
  %v4379 = vld [vmem:[%s8 + $0x128] sm:$0xf]
  %v4380 = vld [vmem:[%s8 + $0x12c] sm:$0xf]
  %v4381 = vld [vmem:[%s8 + $0x130] sm:$0xf]
  %v4382 = vld [vmem:[%s8 + $0x134] sm:$0xf]
  %v4383 = vld [vmem:[%s8 + $0x138] sm:$0xf]
  %v4384 = vld [vmem:[%s8 + $0x13c] sm:$0xf]
  %v4385 = vld [vmem:[%s8 + $0x140] sm:$0xf]
  %v4386 = vld [vmem:[%s8 + $0x144] sm:$0xf]
  %v4387 = vld [vmem:[%s8 + $0x148] sm:$0xf]
  %v4388 = vld [vmem:[%s8 + $0x14c] sm:$0xf]
  %v4389 = vld [vmem:[%s8 + $0x150] sm:$0xf]
  %v4390 = vld [vmem:[%s8 + $0x154] sm:$0xf]
  %v4391 = vld [vmem:[%s8 + $0x158] sm:$0xf]
  %v4392 = vld [vmem:[%s8 + $0x15c] sm:$0xf]
  %v4393 = vld [vmem:[%s8 + $0x160] sm:$0xf]
  %v4394 = vld [vmem:[%s8 + $0x164] sm:$0xf]
  %v4395 = vld [vmem:[%s8 + $0x168] sm:$0xf]
  %v4396 = vld [vmem:[%s8 + $0x16c] sm:$0xf]
  %v4397 = vld [vmem:[%s8 + $0x170] sm:$0xf]
  %v4398 = vld [vmem:[%s8 + $0x174] sm:$0xf]
  %v4399 = vld [vmem:[%s8 + $0x178] sm:$0xf]
  %v4400 = vld [vmem:[%s8 + $0x17c] sm:$0xf]
  %v4401 = vld [vmem:[%s8 + $0x180] sm:$0xf]
  %v4402 = vld [vmem:[%s8 + $0x184] sm:$0xf]
  %v4403 = vld [vmem:[%s8 + $0x188] sm:$0xf]
  %v4404 = vld [vmem:[%s8 + $0x18c] sm:$0xf]
  %v4405 = vld [vmem:[%s8 + $0x190] sm:$0xf]
  %v4406 = vld [vmem:[%s8 + $0x194] sm:$0xf]
  %v4407 = vld [vmem:[%s8 + $0x198] sm:$0xf]
  %v4408 = vld [vmem:[%s8 + $0x19c] sm:$0xf]
  %v4409 = vld [vmem:[%s8 + $0x1a0] sm:$0xf]
  %v4410 = vld [vmem:[%s8 + $0x1a4] sm:$0xf]
  %v4411 = vld [vmem:[%s8 + $0x1a8] sm:$0xf]
  %v4412 = vld [vmem:[%s8 + $0x1ac] sm:$0xf]
  %v4413 = vld [vmem:[%s8 + $0x1b0] sm:$0xf]
  %v4414 = vld [vmem:[%s8 + $0x1b4] sm:$0xf]
  %v4415 = vld [vmem:[%s8 + $0x1b8] sm:$0xf]
  %v4416 = vld [vmem:[%s8 + $0x1bc] sm:$0xf]
  %v4417 = vld [vmem:[%s8 + $0x1c0] sm:$0xf]
  %v4418 = vld [vmem:[%s8 + $0x1c4] sm:$0xf]
  %v4419 = vld [vmem:[%s8 + $0x1c8] sm:$0xf]
  %v4420 = vld [vmem:[%s8 + $0x1cc] sm:$0xf]
  %v4421 = vld [vmem:[%s8 + $0x1d0] sm:$0xf]
  %v4422 = vld [vmem:[%s8 + $0x1d4] sm:$0xf]
  %v4423 = vld [vmem:[%s8 + $0x1d8] sm:$0xf]
  %v4424 = vld [vmem:[%s8 + $0x1dc] sm:$0xf]
  %v4425 = vld [vmem:[%s8 + $0x1e0] sm:$0xf]
  %v4426 = vld [vmem:[%s8 + $0x1e4] sm:$0xf]
  %v4427 = vld [vmem:[%s8 + $0x1e8] sm:$0xf]
  %v4428 = vld [vmem:[%s8 + $0x1ec] sm:$0xf]
  %v4429 = vld [vmem:[%s8 + $0x1f0] sm:$0xf]
  %v4430 = vld [vmem:[%s8 + $0x1f4] sm:$0xf]
  %v4431 = vld [vmem:[%s8 + $0x1f8] sm:$0xf]
  %v4432 = vld [vmem:[%s8 + $0x1fc] sm:$0xf]
  %v4433 = vld [vmem:[%s8 + $0x200] sm:$0xf]
  %v4434 = vld [vmem:[%s8 + $0x204] sm:$0xf]
  %v4435 = vld [vmem:[%s8 + $0x208] sm:$0xf]
  %v4436 = vld [vmem:[%s8 + $0x20c] sm:$0xf]
  %v4437 = vld [vmem:[%s8 + $0x210] sm:$0xf]
  %v4438 = vld [vmem:[%s8 + $0x214] sm:$0xf]
  %v4439 = vld [vmem:[%s8 + $0x218] sm:$0xf]
  %v4440 = vld [vmem:[%s8 + $0x21c] sm:$0xf]
  %v4441 = vld [vmem:[%s8 + $0x220] sm:$0xf]
  %v4442 = vld [vmem:[%s8 + $0x224] sm:$0xf]
  %v4443 = vld [vmem:[%s8 + $0x228] sm:$0xf]
  %v4444 = vld [vmem:[%s8 + $0x22c] sm:$0xf]
  %v4445 = vld [vmem:[%s8 + $0x230] sm:$0xf]
  %v4446 = vld [vmem:[%s8 + $0x234] sm:$0xf]
  %v4447 = vld [vmem:[%s8 + $0x238] sm:$0xf]
  %v4448 = vld [vmem:[%s8 + $0x23c] sm:$0xf]
  %v4449 = vld [vmem:[%s8 + $0x240] sm:$0xf]
  %v4450 = vld [vmem:[%s8 + $0x244] sm:$0xf]
  %v4451 = vld [vmem:[%s8 + $0x248] sm:$0xf]
  %v4452 = vld [vmem:[%s8 + $0x24c] sm:$0xf]
  %v4453 = vld [vmem:[%s8 + $0x250] sm:$0xf]
  %v4454 = vld [vmem:[%s8 + $0x254] sm:$0xf]
  %v4455 = vld [vmem:[%s8 + $0x258] sm:$0xf]
  %v4456 = vld [vmem:[%s8 + $0x25c] sm:$0xf]
  %v4457 = vld [vmem:[%s8 + $0x260] sm:$0xf]
  %v4458 = vld [vmem:[%s8 + $0x264] sm:$0xf]
  %v4459 = vld [vmem:[%s8 + $0x268] sm:$0xf]
  %v4460 = vld [vmem:[%s8 + $0x26c] sm:$0xf]
  %v4461 = vld [vmem:[%s8 + $0x270] sm:$0xf]
  %v4462 = vld [vmem:[%s8 + $0x274] sm:$0xf]
  %v4463 = vld [vmem:[%s8 + $0x278] sm:$0xf]
  %v4464 = vld [vmem:[%s8 + $0x27c] sm:$0xf]
  %v4465 = vld [vmem:[%s8 + $0x280] sm:$0xf]
  %v4466 = vld [vmem:[%s8 + $0x284] sm:$0xf]
  %v4467 = vld [vmem:[%s8 + $0x288] sm:$0xf]
  %v4468 = vld [vmem:[%s8 + $0x28c] sm:$0xf]
  %v4469 = vld [vmem:[%s8 + $0x290] sm:$0xf]
  %v4470 = vld [vmem:[%s8 + $0x294] sm:$0xf]
  %v4471 = vld [vmem:[%s8 + $0x298] sm:$0xf]
  %v4472 = vld [vmem:[%s8 + $0x29c] sm:$0xf]
  %v4473 = vld [vmem:[%s8 + $0x2a0] sm:$0xf]
  %v4474 = vld [vmem:[%s8 + $0x2a4] sm:$0xf]
  %v4475 = vld [vmem:[%s8 + $0x2a8] sm:$0xf]
  %v4476 = vld [vmem:[%s8 + $0x2ac] sm:$0xf]
  %v4477 = vld [vmem:[%s8 + $0x2b0] sm:$0xf]
  %v4478 = vld [vmem:[%s8 + $0x2b4] sm:$0xf]
  %v4479 = vld [vmem:[%s8 + $0x2b8] sm:$0xf]
  %v4480 = vld [vmem:[%s8 + $0x2bc] sm:$0xf]
  %v4481 = vld [vmem:[%s8 + $0x2c0] sm:$0xf]
  %v4482 = vld [vmem:[%s8 + $0x2c4] sm:$0xf]
  %v4483 = vld [vmem:[%s8 + $0x2c8] sm:$0xf]
  %v4484 = vld [vmem:[%s8 + $0x2cc] sm:$0xf]
  %v4485 = vld [vmem:[%s8 + $0x2d0] sm:$0xf]
  %v4486 = vld [vmem:[%s8 + $0x2d4] sm:$0xf]
  %v4487 = vld [vmem:[%s8 + $0x2d8] sm:$0xf]
  %v4488 = vld [vmem:[%s8 + $0x2dc] sm:$0xf]
  %v4489 = vld [vmem:[%s8 + $0x2e0] sm:$0xf]
  %v4490 = vld [vmem:[%s8 + $0x2e4] sm:$0xf]
  %v4491 = vld [vmem:[%s8 + $0x2e8] sm:$0xf]
  %v4492 = vld [vmem:[%s8 + $0x2ec] sm:$0xf]
  %v4493 = vld [vmem:[%s8 + $0x2f0] sm:$0xf]
  %v4494 = vld [vmem:[%s8 + $0x2f4] sm:$0xf]
  %v4495 = vld [vmem:[%s8 + $0x2f8] sm:$0xf]
  %v4496 = vld [vmem:[%s8 + $0x2fc] sm:$0xf]
  %v4497 = vld [vmem:[%s8 + $0x300] sm:$0xf]
  %v4498 = vld [vmem:[%s8 + $0x304] sm:$0xf]
  %v4499 = vld [vmem:[%s8 + $0x308] sm:$0xf]
  %v4500 = vld [vmem:[%s8 + $0x30c] sm:$0xf]
  %v4501 = vld [vmem:[%s8 + $0x310] sm:$0xf]
  %v4502 = vld [vmem:[%s8 + $0x314] sm:$0xf]
  %v4503 = vld [vmem:[%s8 + $0x318] sm:$0xf]
  %v4504 = vld [vmem:[%s8 + $0x31c] sm:$0xf]
  %v4505 = vld [vmem:[%s8 + $0x320] sm:$0xf]
  %v4506 = vld [vmem:[%s8 + $0x324] sm:$0xf]
  %v4507 = vld [vmem:[%s8 + $0x328] sm:$0xf]
  %v4508 = vld [vmem:[%s8 + $0x32c] sm:$0xf]
  %v4509 = vld [vmem:[%s8 + $0x330] sm:$0xf]
  %v4510 = vld [vmem:[%s8 + $0x334] sm:$0xf]
  %v4511 = vld [vmem:[%s8 + $0x338] sm:$0xf]
  %v4512 = vld [vmem:[%s8 + $0x33c] sm:$0xf]
  %v4513 = vld [vmem:[%s8 + $0x340] sm:$0xf]
  %v4514 = vld [vmem:[%s8 + $0x344] sm:$0xf]
  %v4515 = vld [vmem:[%s8 + $0x348] sm:$0xf]
  %v4516 = vld [vmem:[%s8 + $0x34c] sm:$0xf]
  %v4517 = vld [vmem:[%s8 + $0x350] sm:$0xf]
  %v4518 = vld [vmem:[%s8 + $0x354] sm:$0xf]
  %v4519 = vld [vmem:[%s8 + $0x358] sm:$0xf]
  %v4520 = vld [vmem:[%s8 + $0x35c] sm:$0xf]
  %v4521 = vld [vmem:[%s8 + $0x360] sm:$0xf]
  %v4522 = vld [vmem:[%s8 + $0x364] sm:$0xf]
  %v4523 = vld [vmem:[%s8 + $0x368] sm:$0xf]
  %v4524 = vld [vmem:[%s8 + $0x36c] sm:$0xf]
  %v4525 = vld [vmem:[%s8 + $0x370] sm:$0xf]
  %v4526 = vld [vmem:[%s8 + $0x374] sm:$0xf]
  %v4527 = vld [vmem:[%s8 + $0x378] sm:$0xf]
  %v4528 = vld [vmem:[%s8 + $0x37c] sm:$0xf]
  %v4529 = vld [vmem:[%s8 + $0x380] sm:$0xf]
  %v4530 = vld [vmem:[%s8 + $0x384] sm:$0xf]
  %v4531 = vld [vmem:[%s8 + $0x388] sm:$0xf]
  %v4532 = vld [vmem:[%s8 + $0x38c] sm:$0xf]
  %v4533 = vld [vmem:[%s8 + $0x390] sm:$0xf]
  %v4534 = vld [vmem:[%s8 + $0x394] sm:$0xf]
  %v4535 = vld [vmem:[%s8 + $0x398] sm:$0xf]
  %v4536 = vld [vmem:[%s8 + $0x39c] sm:$0xf]
  %v4537 = vld [vmem:[%s8 + $0x3a0] sm:$0xf]
  %v4538 = vld [vmem:[%s8 + $0x3a4] sm:$0xf]
  %v4539 = vld [vmem:[%s8 + $0x3a8] sm:$0xf]
  %v4540 = vld [vmem:[%s8 + $0x3ac] sm:$0xf]
  %v4541 = vld [vmem:[%s8 + $0x3b0] sm:$0xf]
  %v4542 = vld [vmem:[%s8 + $0x3b4] sm:$0xf]
  %v4543 = vld [vmem:[%s8 + $0x3b8] sm:$0xf]
  %v4544 = vld [vmem:[%s8 + $0x3bc] sm:$0xf]
  %v4545 = vld [vmem:[%s8 + $0x3c0] sm:$0xf]
  %v4546 = vld [vmem:[%s8 + $0x3c4] sm:$0xf]
  %v4547 = vld [vmem:[%s8 + $0x3c8] sm:$0xf]
  %v4548 = vld [vmem:[%s8 + $0x3cc] sm:$0xf]
  %v4549 = vld [vmem:[%s8 + $0x3d0] sm:$0xf]
  %v4550 = vld [vmem:[%s8 + $0x3d4] sm:$0xf]
  %v4551 = vld [vmem:[%s8 + $0x3d8] sm:$0xf]
  %v4552 = vld [vmem:[%s8 + $0x3dc] sm:$0xf]
  %v4553 = vld [vmem:[%s8 + $0x3e0] sm:$0xf]
  %v4554 = vld [vmem:[%s8 + $0x3e4] sm:$0xf]
  %v4555 = vld [vmem:[%s8 + $0x3e8] sm:$0xf]
  %v4556 = vld [vmem:[%s8 + $0x3ec] sm:$0xf]
  %v4557 = vld [vmem:[%s8 + $0x3f0] sm:$0xf]
  %v4558 = vld [vmem:[%s8 + $0x3f4] sm:$0xf]
  %v4559 = vld [vmem:[%s8 + $0x3f8] sm:$0xf]
  %v4560 = vld [vmem:[%s8 + $0x3fc] sm:$0xf]
  %v4561 = vld [vmem:[%s8 + $0x400] sm:$0xf]
  %v4562 = vld [vmem:[%s8 + $0x404] sm:$0xf]
  %v4563 = vld [vmem:[%s8 + $0x408] sm:$0xf]
  %v4564 = vld [vmem:[%s8 + $0x40c] sm:$0xf]
  %v4565 = vld [vmem:[%s8 + $0x410] sm:$0xf]
  %v4566 = vld [vmem:[%s8 + $0x414] sm:$0xf]
  %v4567 = vld [vmem:[%s8 + $0x418] sm:$0xf]
  %v4568 = vld [vmem:[%s8 + $0x41c] sm:$0xf]
  %v4569 = vld [vmem:[%s8 + $0x420] sm:$0xf]
  %v4570 = vld [vmem:[%s8 + $0x424] sm:$0xf]
  %v4571 = vld [vmem:[%s8 + $0x428] sm:$0xf]
  %v4572 = vld [vmem:[%s8 + $0x42c] sm:$0xf]
  %v4573 = vld [vmem:[%s8 + $0x430] sm:$0xf]
  %v4574 = vld [vmem:[%s8 + $0x434] sm:$0xf]
  %v4575 = vld [vmem:[%s8 + $0x438] sm:$0xf]
  %v4576 = vld [vmem:[%s8 + $0x43c] sm:$0xf]
  %v4577 = vld [vmem:[%s8 + $0x440] sm:$0xf]
  %v4578 = vld [vmem:[%s8 + $0x444] sm:$0xf]
  %v4579 = vld [vmem:[%s8 + $0x448] sm:$0xf]
  %v4580 = vld [vmem:[%s8 + $0x44c] sm:$0xf]
  %v4581 = vld [vmem:[%s8 + $0x450] sm:$0xf]
  %v4582 = vld [vmem:[%s8 + $0x454] sm:$0xf]
  %v4583 = vld [vmem:[%s8 + $0x458] sm:$0xf]
  %v4584 = vld [vmem:[%s8 + $0x45c] sm:$0xf]
  %v4585 = vld [vmem:[%s8 + $0x460] sm:$0xf]
  %v4586 = vld [vmem:[%s8 + $0x464] sm:$0xf]
  %v4587 = vld [vmem:[%s8 + $0x468] sm:$0xf]
  %v4588 = vld [vmem:[%s8 + $0x46c] sm:$0xf]
  %v4589 = vld [vmem:[%s8 + $0x470] sm:$0xf]
  %v4590 = vld [vmem:[%s8 + $0x474] sm:$0xf]
  %v4591 = vld [vmem:[%s8 + $0x478] sm:$0xf]
  %v4592 = vld [vmem:[%s8 + $0x47c] sm:$0xf]
  %v4593 = vld [vmem:[%s9] sm:$0x1]
  %v4595 = vlaneseq
  %v4596 = vshrl.u32 %v4595, 7
  %v4597 = vsub.s32 0, %v4596
  %v4598 = vrot.slane %v4593, %v4597
  %v4888 = vunpack.c.l.b16 %v4305
  %v4889 = vunpack.c.l.b16 %v4306
  %v4890 = vunpack.c.l.b16 %v4307
  %v4891 = vunpack.c.l.b16 %v4308
  %v4892 = vunpack.c.l.b16 %v4309
  %v4893 = vunpack.c.l.b16 %v4310
  %v4894 = vunpack.c.l.b16 %v4311
  %v4895 = vunpack.c.l.b16 %v4312
  %v4896 = vunpack.c.l.b16 %v4313
  %v4897 = vunpack.c.l.b16 %v4314
  %v4898 = vunpack.c.l.b16 %v4315
  %v4899 = vunpack.c.l.b16 %v4316
  %v4900 = vunpack.c.l.b16 %v4317
  %v4901 = vunpack.c.l.b16 %v4318
  %v4902 = vunpack.c.l.b16 %v4319
  %v4903 = vunpack.c.l.b16 %v4320
  %v4904 = vunpack.c.l.b16 %v4321
  %v4905 = vunpack.c.l.b16 %v4322
  %v4906 = vunpack.c.l.b16 %v4323
  %v4907 = vunpack.c.l.b16 %v4324
  %v4908 = vunpack.c.l.b16 %v4325
  %v4909 = vunpack.c.l.b16 %v4326
  %v4910 = vunpack.c.l.b16 %v4327
  %v4911 = vunpack.c.l.b16 %v4328
  %v4912 = vunpack.c.l.b16 %v4329
  %v4913 = vunpack.c.l.b16 %v4330
  %v4914 = vunpack.c.l.b16 %v4331
  %v4915 = vunpack.c.l.b16 %v4332
  %v4916 = vunpack.c.l.b16 %v4333
  %v4917 = vunpack.c.l.b16 %v4334
  %v4918 = vunpack.c.l.b16 %v4335
  %v4919 = vunpack.c.l.b16 %v4336
  %v4920 = vunpack.c.l.b16 %v4337
  %v4921 = vunpack.c.l.b16 %v4338
  %v4922 = vunpack.c.l.b16 %v4339
  %v4923 = vunpack.c.l.b16 %v4340
  %v4924 = vunpack.c.l.b16 %v4341
  %v4925 = vunpack.c.l.b16 %v4342
  %v4926 = vunpack.c.l.b16 %v4343
  %v4927 = vunpack.c.l.b16 %v4344
  %v4928 = vunpack.c.l.b16 %v4345
  %v4929 = vunpack.c.l.b16 %v4346
  %v4930 = vunpack.c.l.b16 %v4347
  %v4931 = vunpack.c.l.b16 %v4348
  %v4932 = vunpack.c.l.b16 %v4349
  %v4933 = vunpack.c.l.b16 %v4350
  %v4934 = vunpack.c.l.b16 %v4351
  %v4935 = vunpack.c.l.b16 %v4352
  %v4936 = vunpack.c.l.b16 %v4353
  %v4937 = vunpack.c.l.b16 %v4354
  %v4938 = vunpack.c.l.b16 %v4355
  %v4939 = vunpack.c.l.b16 %v4356
  %v4940 = vunpack.c.l.b16 %v4357
  %v4941 = vunpack.c.l.b16 %v4358
  %v4942 = vunpack.c.l.b16 %v4359
  %v4943 = vunpack.c.l.b16 %v4360
  %v4944 = vunpack.c.l.b16 %v4361
  %v4945 = vunpack.c.l.b16 %v4362
  %v4946 = vunpack.c.l.b16 %v4363
  %v4947 = vunpack.c.l.b16 %v4364
  %v4948 = vunpack.c.l.b16 %v4365
  %v4949 = vunpack.c.l.b16 %v4366
  %v4950 = vunpack.c.l.b16 %v4367
  %v4951 = vunpack.c.l.b16 %v4368
  %v4952 = vunpack.c.l.b16 %v4369
  %v4953 = vunpack.c.l.b16 %v4370
  %v4954 = vunpack.c.l.b16 %v4371
  %v4955 = vunpack.c.l.b16 %v4372
  %v4956 = vunpack.c.l.b16 %v4373
  %v4957 = vunpack.c.l.b16 %v4374
  %v4958 = vunpack.c.l.b16 %v4375
  %v4959 = vunpack.c.l.b16 %v4376
  %v4960 = vunpack.c.l.b16 %v4377
  %v4961 = vunpack.c.l.b16 %v4378
  %v4962 = vunpack.c.l.b16 %v4379
  %v4963 = vunpack.c.l.b16 %v4380
  %v4964 = vunpack.c.l.b16 %v4381
  %v4965 = vunpack.c.l.b16 %v4382
  %v4966 = vunpack.c.l.b16 %v4383
  %v4967 = vunpack.c.l.b16 %v4384
  %v4968 = vunpack.c.l.b16 %v4385
  %v4969 = vunpack.c.l.b16 %v4386
  %v4970 = vunpack.c.l.b16 %v4387
  %v4971 = vunpack.c.l.b16 %v4388
  %v4972 = vunpack.c.l.b16 %v4389
  %v4973 = vunpack.c.l.b16 %v4390
  %v4974 = vunpack.c.l.b16 %v4391
  %v4975 = vunpack.c.l.b16 %v4392
  %v4976 = vunpack.c.l.b16 %v4393
  %v4977 = vunpack.c.l.b16 %v4394
  %v4978 = vunpack.c.l.b16 %v4395
  %v4979 = vunpack.c.l.b16 %v4396
  %v4980 = vunpack.c.l.b16 %v4397
  %v4981 = vunpack.c.l.b16 %v4398
  %v4982 = vunpack.c.l.b16 %v4399
  %v4983 = vunpack.c.l.b16 %v4400
  %v4984 = vunpack.c.l.b16 %v4401
  %v4985 = vunpack.c.l.b16 %v4402
  %v4986 = vunpack.c.l.b16 %v4403
  %v4987 = vunpack.c.l.b16 %v4404
  %v4988 = vunpack.c.l.b16 %v4405
  %v4989 = vunpack.c.l.b16 %v4406
  %v4990 = vunpack.c.l.b16 %v4407
  %v4991 = vunpack.c.l.b16 %v4408
  %v4992 = vunpack.c.l.b16 %v4409
  %v4993 = vunpack.c.l.b16 %v4410
  %v4994 = vunpack.c.l.b16 %v4411
  %v4995 = vunpack.c.l.b16 %v4412
  %v4996 = vunpack.c.l.b16 %v4413
  %v4997 = vunpack.c.l.b16 %v4414
  %v4998 = vunpack.c.l.b16 %v4415
  %v4999 = vunpack.c.l.b16 %v4416
  %v5000 = vunpack.c.l.b16 %v4417
  %v5001 = vunpack.c.l.b16 %v4418
  %v5002 = vunpack.c.l.b16 %v4419
  %v5003 = vunpack.c.l.b16 %v4420
  %v5004 = vunpack.c.l.b16 %v4421
  %v5005 = vunpack.c.l.b16 %v4422
  %v5006 = vunpack.c.l.b16 %v4423
  %v5007 = vunpack.c.l.b16 %v4424
  %v5008 = vunpack.c.l.b16 %v4425
  %v5009 = vunpack.c.l.b16 %v4426
  %v5010 = vunpack.c.l.b16 %v4427
  %v5011 = vunpack.c.l.b16 %v4428
  %v5012 = vunpack.c.l.b16 %v4429
  %v5013 = vunpack.c.l.b16 %v4430
  %v5014 = vunpack.c.l.b16 %v4431
  %v5015 = vunpack.c.l.b16 %v4432
  %v5016 = vunpack.c.l.b16 %v4433
  %v5017 = vunpack.c.l.b16 %v4434
  %v5018 = vunpack.c.l.b16 %v4435
  %v5019 = vunpack.c.l.b16 %v4436
  %v5020 = vunpack.c.l.b16 %v4437
  %v5021 = vunpack.c.l.b16 %v4438
  %v5022 = vunpack.c.l.b16 %v4439
  %v5023 = vunpack.c.l.b16 %v4440
  %v5024 = vunpack.c.l.b16 %v4441
  %v5025 = vunpack.c.l.b16 %v4442
  %v5026 = vunpack.c.l.b16 %v4443
  %v5027 = vunpack.c.l.b16 %v4444
  %v5028 = vunpack.c.l.b16 %v4445
  %v5029 = vunpack.c.l.b16 %v4446
  %v5030 = vunpack.c.l.b16 %v4447
  %v5031 = vunpack.c.l.b16 %v4448
  %v5032 = vunpack.c.l.b16 %v4449
  %v5033 = vunpack.c.l.b16 %v4450
  %v5034 = vunpack.c.l.b16 %v4451
  %v5035 = vunpack.c.l.b16 %v4452
  %v5036 = vunpack.c.l.b16 %v4453
  %v5037 = vunpack.c.l.b16 %v4454
  %v5038 = vunpack.c.l.b16 %v4455
  %v5039 = vunpack.c.l.b16 %v4456
  %v5040 = vunpack.c.l.b16 %v4457
  %v5041 = vunpack.c.l.b16 %v4458
  %v5042 = vunpack.c.l.b16 %v4459
  %v5043 = vunpack.c.l.b16 %v4460
  %v5044 = vunpack.c.l.b16 %v4461
  %v5045 = vunpack.c.l.b16 %v4462
  %v5046 = vunpack.c.l.b16 %v4463
  %v5047 = vunpack.c.l.b16 %v4464
  %v5048 = vunpack.c.l.b16 %v4465
  %v5049 = vunpack.c.l.b16 %v4466
  %v5050 = vunpack.c.l.b16 %v4467
  %v5051 = vunpack.c.l.b16 %v4468
  %v5052 = vunpack.c.l.b16 %v4469
  %v5053 = vunpack.c.l.b16 %v4470
  %v5054 = vunpack.c.l.b16 %v4471
  %v5055 = vunpack.c.l.b16 %v4472
  %v5056 = vunpack.c.l.b16 %v4473
  %v5057 = vunpack.c.l.b16 %v4474
  %v5058 = vunpack.c.l.b16 %v4475
  %v5059 = vunpack.c.l.b16 %v4476
  %v5060 = vunpack.c.l.b16 %v4477
  %v5061 = vunpack.c.l.b16 %v4478
  %v5062 = vunpack.c.l.b16 %v4479
  %v5063 = vunpack.c.l.b16 %v4480
  %v5064 = vunpack.c.l.b16 %v4481
  %v5065 = vunpack.c.l.b16 %v4482
  %v5066 = vunpack.c.l.b16 %v4483
  %v5067 = vunpack.c.l.b16 %v4484
  %v5068 = vunpack.c.l.b16 %v4485
  %v5069 = vunpack.c.l.b16 %v4486
  %v5070 = vunpack.c.l.b16 %v4487
  %v5071 = vunpack.c.l.b16 %v4488
  %v5072 = vunpack.c.l.b16 %v4489
  %v5073 = vunpack.c.l.b16 %v4490
  %v5074 = vunpack.c.l.b16 %v4491
  %v5075 = vunpack.c.l.b16 %v4492
  %v5076 = vunpack.c.l.b16 %v4493
  %v5077 = vunpack.c.l.b16 %v4494
  %v5078 = vunpack.c.l.b16 %v4495
  %v5079 = vunpack.c.l.b16 %v4496
  %v5080 = vunpack.c.l.b16 %v4497
  %v5081 = vunpack.c.l.b16 %v4498
  %v5082 = vunpack.c.l.b16 %v4499
  %v5083 = vunpack.c.l.b16 %v4500
  %v5084 = vunpack.c.l.b16 %v4501
  %v5085 = vunpack.c.l.b16 %v4502
  %v5086 = vunpack.c.l.b16 %v4503
  %v5087 = vunpack.c.l.b16 %v4504
  %v5088 = vunpack.c.l.b16 %v4505
  %v5089 = vunpack.c.l.b16 %v4506
  %v5090 = vunpack.c.l.b16 %v4507
  %v5091 = vunpack.c.l.b16 %v4508
  %v5092 = vunpack.c.l.b16 %v4509
  %v5093 = vunpack.c.l.b16 %v4510
  %v5094 = vunpack.c.l.b16 %v4511
  %v5095 = vunpack.c.l.b16 %v4512
  %v5096 = vunpack.c.l.b16 %v4513
  %v5097 = vunpack.c.l.b16 %v4514
  %v5098 = vunpack.c.l.b16 %v4515
  %v5099 = vunpack.c.l.b16 %v4516
  %v5100 = vunpack.c.l.b16 %v4517
  %v5101 = vunpack.c.l.b16 %v4518
  %v5102 = vunpack.c.l.b16 %v4519
  %v5103 = vunpack.c.l.b16 %v4520
  %v5104 = vunpack.c.l.b16 %v4521
  %v5105 = vunpack.c.l.b16 %v4522
  %v5106 = vunpack.c.l.b16 %v4523
  %v5107 = vunpack.c.l.b16 %v4524
  %v5108 = vunpack.c.l.b16 %v4525
  %v5109 = vunpack.c.l.b16 %v4526
  %v5110 = vunpack.c.l.b16 %v4527
  %v5111 = vunpack.c.l.b16 %v4528
  %v5112 = vunpack.c.l.b16 %v4529
  %v5113 = vunpack.c.l.b16 %v4530
  %v5114 = vunpack.c.l.b16 %v4531
  %v5115 = vunpack.c.l.b16 %v4532
  %v5116 = vunpack.c.l.b16 %v4533
  %v5117 = vunpack.c.l.b16 %v4534
  %v5118 = vunpack.c.l.b16 %v4535
  %v5119 = vunpack.c.l.b16 %v4536
  %v5120 = vunpack.c.l.b16 %v4537
  %v5121 = vunpack.c.l.b16 %v4538
  %v5122 = vunpack.c.l.b16 %v4539
  %v5123 = vunpack.c.l.b16 %v4540
  %v5124 = vunpack.c.l.b16 %v4541
  %v5125 = vunpack.c.l.b16 %v4542
  %v5126 = vunpack.c.l.b16 %v4543
  %v5127 = vunpack.c.l.b16 %v4544
  %v5128 = vunpack.c.l.b16 %v4545
  %v5129 = vunpack.c.l.b16 %v4546
  %v5130 = vunpack.c.l.b16 %v4547
  %v5131 = vunpack.c.l.b16 %v4548
  %v5132 = vunpack.c.l.b16 %v4549
  %v5133 = vunpack.c.l.b16 %v4550
  %v5134 = vunpack.c.l.b16 %v4551
  %v5135 = vunpack.c.l.b16 %v4552
  %v5136 = vunpack.c.l.b16 %v4553
  %v5137 = vunpack.c.l.b16 %v4554
  %v5138 = vunpack.c.l.b16 %v4555
  %v5139 = vunpack.c.l.b16 %v4556
  %v5140 = vunpack.c.l.b16 %v4557
  %v5141 = vunpack.c.l.b16 %v4558
  %v5142 = vunpack.c.l.b16 %v4559
  %v5143 = vunpack.c.l.b16 %v4560
  %v5144 = vunpack.c.l.b16 %v4561
  %v5145 = vunpack.c.l.b16 %v4562
  %v5146 = vunpack.c.l.b16 %v4563
  %v5147 = vunpack.c.l.b16 %v4564
  %v5148 = vunpack.c.l.b16 %v4565
  %v5149 = vunpack.c.l.b16 %v4566
  %v5150 = vunpack.c.l.b16 %v4567
  %v5151 = vunpack.c.l.b16 %v4568
  %v5152 = vunpack.c.l.b16 %v4569
  %v5153 = vunpack.c.l.b16 %v4570
  %v5154 = vunpack.c.l.b16 %v4571
  %v5155 = vunpack.c.l.b16 %v4572
  %v5156 = vunpack.c.l.b16 %v4573
  %v5157 = vunpack.c.l.b16 %v4574
  %v5158 = vunpack.c.l.b16 %v4575
  %v5159 = vunpack.c.l.b16 %v4576
  %v5160 = vunpack.c.l.b16 %v4577
  %v5161 = vunpack.c.l.b16 %v4578
  %v5162 = vunpack.c.l.b16 %v4579
  %v5163 = vunpack.c.l.b16 %v4580
  %v5164 = vunpack.c.l.b16 %v4581
  %v5165 = vunpack.c.l.b16 %v4582
  %v5166 = vunpack.c.l.b16 %v4583
  %v5167 = vunpack.c.l.b16 %v4584
  %v5168 = vunpack.c.l.b16 %v4585
  %v5169 = vunpack.c.l.b16 %v4586
  %v5170 = vunpack.c.l.b16 %v4587
  %v5171 = vunpack.c.l.b16 %v4588
  %v5172 = vunpack.c.l.b16 %v4589
  %v5173 = vunpack.c.l.b16 %v4590
  %v5174 = vunpack.c.l.b16 %v4591
  %v5175 = vunpack.c.l.b16 %v4592
  %v5176 = vpack.c.b16 %v4889, %v4888
  %v5177 = vpack.c.b16 %v4891, %v4890
  %v5178 = vpack.c.b16 %v4893, %v4892
  %v5179 = vpack.c.b16 %v4895, %v4894
  %v5180 = vpack.c.b16 %v4897, %v4896
  %v5181 = vpack.c.b16 %v4899, %v4898
  %v5182 = vpack.c.b16 %v4901, %v4900
  %v5183 = vpack.c.b16 %v4903, %v4902
  %v5184 = vpack.c.b16 %v4905, %v4904
  %v5185 = vpack.c.b16 %v4907, %v4906
  %v5186 = vpack.c.b16 %v4909, %v4908
  %v5187 = vpack.c.b16 %v4911, %v4910
  %v5188 = vpack.c.b16 %v4913, %v4912
  %v5189 = vpack.c.b16 %v4915, %v4914
  %v5190 = vpack.c.b16 %v4917, %v4916
  %v5191 = vpack.c.b16 %v4919, %v4918
  %v5192 = vpack.c.b16 %v4921, %v4920
  %v5193 = vpack.c.b16 %v4923, %v4922
  %v5194 = vpack.c.b16 %v4925, %v4924
  %v5195 = vpack.c.b16 %v4927, %v4926
  %v5196 = vpack.c.b16 %v4929, %v4928
  %v5197 = vpack.c.b16 %v4931, %v4930
  %v5198 = vpack.c.b16 %v4933, %v4932
  %v5199 = vpack.c.b16 %v4935, %v4934
  %v5200 = vpack.c.b16 %v4937, %v4936
  %v5201 = vpack.c.b16 %v4939, %v4938
  %v5202 = vpack.c.b16 %v4941, %v4940
  %v5203 = vpack.c.b16 %v4943, %v4942
  %v5204 = vpack.c.b16 %v4945, %v4944
  %v5205 = vpack.c.b16 %v4947, %v4946
  %v5206 = vpack.c.b16 %v4949, %v4948
  %v5207 = vpack.c.b16 %v4951, %v4950
  %v5208 = vpack.c.b16 %v4953, %v4952
  %v5209 = vpack.c.b16 %v4955, %v4954
  %v5210 = vpack.c.b16 %v4957, %v4956
  %v5211 = vpack.c.b16 %v4959, %v4958
  %v5212 = vpack.c.b16 %v4961, %v4960
  %v5213 = vpack.c.b16 %v4963, %v4962
  %v5214 = vpack.c.b16 %v4965, %v4964
  %v5215 = vpack.c.b16 %v4967, %v4966
  %v5216 = vpack.c.b16 %v4969, %v4968
  %v5217 = vpack.c.b16 %v4971, %v4970
  %v5218 = vpack.c.b16 %v4973, %v4972
  %v5219 = vpack.c.b16 %v4975, %v4974
  %v5220 = vpack.c.b16 %v4977, %v4976
  %v5221 = vpack.c.b16 %v4979, %v4978
  %v5222 = vpack.c.b16 %v4981, %v4980
  %v5223 = vpack.c.b16 %v4983, %v4982
  %v5224 = vpack.c.b16 %v4985, %v4984
  %v5225 = vpack.c.b16 %v4987, %v4986
  %v5226 = vpack.c.b16 %v4989, %v4988
  %v5227 = vpack.c.b16 %v4991, %v4990
  %v5228 = vpack.c.b16 %v4993, %v4992
  %v5229 = vpack.c.b16 %v4995, %v4994
  %v5230 = vpack.c.b16 %v4997, %v4996
  %v5231 = vpack.c.b16 %v4999, %v4998
  %v5232 = vpack.c.b16 %v5001, %v5000
  %v5233 = vpack.c.b16 %v5003, %v5002
  %v5234 = vpack.c.b16 %v5005, %v5004
  %v5235 = vpack.c.b16 %v5007, %v5006
  %v5236 = vpack.c.b16 %v5009, %v5008
  %v5237 = vpack.c.b16 %v5011, %v5010
  %v5238 = vpack.c.b16 %v5013, %v5012
  %v5239 = vpack.c.b16 %v5015, %v5014
  %v5240 = vpack.c.b16 %v5017, %v5016
  %v5241 = vpack.c.b16 %v5019, %v5018
  %v5242 = vpack.c.b16 %v5021, %v5020
  %v5243 = vpack.c.b16 %v5023, %v5022
  %v5244 = vpack.c.b16 %v5025, %v5024
  %v5245 = vpack.c.b16 %v5027, %v5026
  %v5246 = vpack.c.b16 %v5029, %v5028
  %v5247 = vpack.c.b16 %v5031, %v5030
  %v5248 = vpack.c.b16 %v5033, %v5032
  %v5249 = vpack.c.b16 %v5035, %v5034
  %v5250 = vpack.c.b16 %v5037, %v5036
  %v5251 = vpack.c.b16 %v5039, %v5038
  %v5252 = vpack.c.b16 %v5041, %v5040
  %v5253 = vpack.c.b16 %v5043, %v5042
  %v5254 = vpack.c.b16 %v5045, %v5044
  %v5255 = vpack.c.b16 %v5047, %v5046
  %v5256 = vpack.c.b16 %v5049, %v5048
  %v5257 = vpack.c.b16 %v5051, %v5050
  %v5258 = vpack.c.b16 %v5053, %v5052
  %v5259 = vpack.c.b16 %v5055, %v5054
  %v5260 = vpack.c.b16 %v5057, %v5056
  %v5261 = vpack.c.b16 %v5059, %v5058
  %v5262 = vpack.c.b16 %v5061, %v5060
  %v5263 = vpack.c.b16 %v5063, %v5062
  %v5264 = vpack.c.b16 %v5065, %v5064
  %v5265 = vpack.c.b16 %v5067, %v5066
  %v5266 = vpack.c.b16 %v5069, %v5068
  %v5267 = vpack.c.b16 %v5071, %v5070
  %v5268 = vpack.c.b16 %v5073, %v5072
  %v5269 = vpack.c.b16 %v5075, %v5074
  %v5270 = vpack.c.b16 %v5077, %v5076
  %v5271 = vpack.c.b16 %v5079, %v5078
  %v5272 = vpack.c.b16 %v5081, %v5080
  %v5273 = vpack.c.b16 %v5083, %v5082
  %v5274 = vpack.c.b16 %v5085, %v5084
  %v5275 = vpack.c.b16 %v5087, %v5086
  %v5276 = vpack.c.b16 %v5089, %v5088
  %v5277 = vpack.c.b16 %v5091, %v5090
  %v5278 = vpack.c.b16 %v5093, %v5092
  %v5279 = vpack.c.b16 %v5095, %v5094
  %v5280 = vpack.c.b16 %v5097, %v5096
  %v5281 = vpack.c.b16 %v5099, %v5098
  %v5282 = vpack.c.b16 %v5101, %v5100
  %v5283 = vpack.c.b16 %v5103, %v5102
  %v5284 = vpack.c.b16 %v5105, %v5104
  %v5285 = vpack.c.b16 %v5107, %v5106
  %v5286 = vpack.c.b16 %v5109, %v5108
  %v5287 = vpack.c.b16 %v5111, %v5110
  %v5288 = vpack.c.b16 %v5113, %v5112
  %v5289 = vpack.c.b16 %v5115, %v5114
  %v5290 = vpack.c.b16 %v5117, %v5116
  %v5291 = vpack.c.b16 %v5119, %v5118
  %v5292 = vpack.c.b16 %v5121, %v5120
  %v5293 = vpack.c.b16 %v5123, %v5122
  %v5294 = vpack.c.b16 %v5125, %v5124
  %v5295 = vpack.c.b16 %v5127, %v5126
  %v5296 = vpack.c.b16 %v5129, %v5128
  %v5297 = vpack.c.b16 %v5131, %v5130
  %v5298 = vpack.c.b16 %v5133, %v5132
  %v5299 = vpack.c.b16 %v5135, %v5134
  %v5300 = vpack.c.b16 %v5137, %v5136
  %v5301 = vpack.c.b16 %v5139, %v5138
  %v5302 = vpack.c.b16 %v5141, %v5140
  %v5303 = vpack.c.b16 %v5143, %v5142
  %v5304 = vpack.c.b16 %v5145, %v5144
  %v5305 = vpack.c.b16 %v5147, %v5146
  %v5306 = vpack.c.b16 %v5149, %v5148
  %v5307 = vpack.c.b16 %v5151, %v5150
  %v5308 = vpack.c.b16 %v5153, %v5152
  %v5309 = vpack.c.b16 %v5155, %v5154
  %v5310 = vpack.c.b16 %v5157, %v5156
  %v5311 = vpack.c.b16 %v5159, %v5158
  %v5312 = vpack.c.b16 %v5161, %v5160
  %v5313 = vpack.c.b16 %v5163, %v5162
  %v5314 = vpack.c.b16 %v5165, %v5164
  %v5315 = vpack.c.b16 %v5167, %v5166
  %v5316 = vpack.c.b16 %v5169, %v5168
  %v5317 = vpack.c.b16 %v5171, %v5170
  %v5318 = vpack.c.b16 %v5173, %v5172
  %v5319 = vpack.c.b16 %v5175, %v5174
  %5464 = vmatprep.subr.bf16.mxu0 0
  %5465 = vmatpush1.bf16.msra.mxu0 %v5183
  %5466 = vmatprep.subr.bf16.mxu0 0
  %5467 = vmatpush1.bf16.msra.mxu0 %v5182
  %5468 = vmatprep.subr.bf16.mxu0 0
  %5469 = vmatpush1.bf16.msra.mxu0 %v5181
  %5470 = vmatprep.subr.bf16.mxu0 0
  %5471 = vmatpush1.bf16.msra.mxu0 %v5180
  %5472 = vmatprep.subr.bf16.mxu0 0
  %5473 = vmatpush1.bf16.msra.mxu0 %v5179
  %5474 = vmatprep.subr.bf16.mxu0 0
  %5475 = vmatpush1.bf16.msra.mxu0 %v5178
  %5476 = vmatprep.subr.bf16.mxu0 0
  %5477 = vmatpush1.bf16.msra.mxu0 %v5177
  %5478 = vmatprep.subr.bf16.mxu0 0
  %5479 = vmatpush1.bf16.msra.mxu0 %v5176
  %5480 = vmatprep.subr.bf16.mxu0 0
  %5481 = vmatpush2.bf16.msra.mxu0 %v5191
  %5482 = vmatprep.subr.bf16.mxu0 0
  %5483 = vmatpush2.bf16.msra.mxu0 %v5190
  %5484 = vmatprep.subr.bf16.mxu0 0
  %5485 = vmatpush2.bf16.msra.mxu0 %v5189
  %5486 = vmatprep.subr.bf16.mxu0 0
  %5487 = vmatpush2.bf16.msra.mxu0 %v5188
  %5488 = vmatprep.subr.bf16.mxu0 0
  %5489 = vmatpush2.bf16.msra.mxu0 %v5187
  %5490 = vmatprep.subr.bf16.mxu0 0
  %5491 = vmatpush2.bf16.msra.mxu0 %v5186
  %5492 = vmatprep.subr.bf16.mxu0 0
  %5493 = vmatpush2.bf16.msra.mxu0 %v5185
  %5494 = vmatprep.subr.bf16.mxu0 0
  %5495 = vmatpush2.bf16.msra.mxu0 %v5184
  %5496 = vmatprep.mubr.bf16.mxu0 %v4288
  %5497 = vmatmul.mubr.bf16.gmra.mxu0 %v4287
  %v5498 = vpop.f32.mrf.mxu0
  %v5499 = vadd.f32 %v4598, %v5498
  %v5500 = vpop.f32.mrf.mxu0
  %v5501 = vpop.f32.mrf.mxu0
  %v5502 = vpop.f32.mrf.mxu0
  %5503 = vdwg.mxu0
  %5504 = vmatprep.subr.bf16.mxu0 0
  %5505 = vmatpush1.bf16.msra.mxu0 %v5199
  %5506 = vmatprep.subr.bf16.mxu0 0
  %5507 = vmatpush1.bf16.msra.mxu0 %v5198
  %5508 = vmatprep.subr.bf16.mxu0 0
  %5509 = vmatpush1.bf16.msra.mxu0 %v5197
  %5510 = vmatprep.subr.bf16.mxu0 0
  %5511 = vmatpush1.bf16.msra.mxu0 %v5196
  %5512 = vmatprep.subr.bf16.mxu0 0
  %5513 = vmatpush1.bf16.msra.mxu0 %v5195
  %5514 = vmatprep.subr.bf16.mxu0 0
  %5515 = vmatpush1.bf16.msra.mxu0 %v5194
  %5516 = vmatprep.subr.bf16.mxu0 0
  %5517 = vmatpush1.bf16.msra.mxu0 %v5193
  %5518 = vmatprep.subr.bf16.mxu0 0
  %5519 = vmatpush1.bf16.msra.mxu0 %v5192
  %5520 = vmatprep.subr.bf16.mxu0 0
  %5521 = vmatpush2.bf16.msra.mxu0 %v5207
  %5522 = vmatprep.subr.bf16.mxu0 0
  %5523 = vmatpush2.bf16.msra.mxu0 %v5206
  %5524 = vmatprep.subr.bf16.mxu0 0
  %5525 = vmatpush2.bf16.msra.mxu0 %v5205
  %5526 = vmatprep.subr.bf16.mxu0 0
  %5527 = vmatpush2.bf16.msra.mxu0 %v5204
  %5528 = vmatprep.subr.bf16.mxu0 0
  %5529 = vmatpush2.bf16.msra.mxu0 %v5203
  %5530 = vmatprep.subr.bf16.mxu0 0
  %5531 = vmatpush2.bf16.msra.mxu0 %v5202
  %5532 = vmatprep.subr.bf16.mxu0 0
  %5533 = vmatpush2.bf16.msra.mxu0 %v5201
  %5534 = vmatprep.subr.bf16.mxu0 0
  %5535 = vmatpush2.bf16.msra.mxu0 %v5200
  %5536 = vmatprep.mubr.bf16.mxu0 %v4290
  %5537 = vmatmul.mubr.bf16.gmra.mxu0 %v4289
  %v5538 = vpop.f32.mrf.mxu0
  %v5539 = vadd.f32 %v5499, %v5538
  %v5540 = vpop.f32.mrf.mxu0
  %v5541 = vpop.f32.mrf.mxu0
  %v5542 = vpop.f32.mrf.mxu0
  %5543 = vdwg.mxu0
  %5544 = vmatprep.subr.bf16.mxu0 0
  %5545 = vmatpush1.bf16.msra.mxu0 %v5215
  %5546 = vmatprep.subr.bf16.mxu0 0
  %5547 = vmatpush1.bf16.msra.mxu0 %v5214
  %5548 = vmatprep.subr.bf16.mxu0 0
  %5549 = vmatpush1.bf16.msra.mxu0 %v5213
  %5550 = vmatprep.subr.bf16.mxu0 0
  %5551 = vmatpush1.bf16.msra.mxu0 %v5212
  %5552 = vmatprep.subr.bf16.mxu0 0
  %5553 = vmatpush1.bf16.msra.mxu0 %v5211
  %5554 = vmatprep.subr.bf16.mxu0 0
  %5555 = vmatpush1.bf16.msra.mxu0 %v5210
  %5556 = vmatprep.subr.bf16.mxu0 0
  %5557 = vmatpush1.bf16.msra.mxu0 %v5209
  %5558 = vmatprep.subr.bf16.mxu0 0
  %5559 = vmatpush1.bf16.msra.mxu0 %v5208
  %5560 = vmatprep.subr.bf16.mxu0 0
  %5561 = vmatpush2.bf16.msra.mxu0 %v5223
  %5562 = vmatprep.subr.bf16.mxu0 0
  %5563 = vmatpush2.bf16.msra.mxu0 %v5222
  %5564 = vmatprep.subr.bf16.mxu0 0
  %5565 = vmatpush2.bf16.msra.mxu0 %v5221
  %5566 = vmatprep.subr.bf16.mxu0 0
  %5567 = vmatpush2.bf16.msra.mxu0 %v5220
  %5568 = vmatprep.subr.bf16.mxu0 0
  %5569 = vmatpush2.bf16.msra.mxu0 %v5219
  %5570 = vmatprep.subr.bf16.mxu0 0
  %5571 = vmatpush2.bf16.msra.mxu0 %v5218
  %5572 = vmatprep.subr.bf16.mxu0 0
  %5573 = vmatpush2.bf16.msra.mxu0 %v5217
  %5574 = vmatprep.subr.bf16.mxu0 0
  %5575 = vmatpush2.bf16.msra.mxu0 %v5216
  %5576 = vmatprep.mubr.bf16.mxu0 %v4292
  %5577 = vmatmul.mubr.bf16.gmra.mxu0 %v4291
  %v5578 = vpop.f32.mrf.mxu0
  %v5579 = vadd.f32 %v5539, %v5578
  %v5580 = vpop.f32.mrf.mxu0
  %v5581 = vpop.f32.mrf.mxu0
  %v5582 = vpop.f32.mrf.mxu0
  %5583 = vdwg.mxu0
  %5584 = vmatprep.subr.bf16.mxu0 0
  %5585 = vmatpush1.bf16.msra.mxu0 %v5231
  %5586 = vmatprep.subr.bf16.mxu0 0
  %5587 = vmatpush1.bf16.msra.mxu0 %v5230
  %5588 = vmatprep.subr.bf16.mxu0 0
  %5589 = vmatpush1.bf16.msra.mxu0 %v5229
  %5590 = vmatprep.subr.bf16.mxu0 0
  %5591 = vmatpush1.bf16.msra.mxu0 %v5228
  %5592 = vmatprep.subr.bf16.mxu0 0
  %5593 = vmatpush1.bf16.msra.mxu0 %v5227
  %5594 = vmatprep.subr.bf16.mxu0 0
  %5595 = vmatpush1.bf16.msra.mxu0 %v5226
  %5596 = vmatprep.subr.bf16.mxu0 0
  %5597 = vmatpush1.bf16.msra.mxu0 %v5225
  %5598 = vmatprep.subr.bf16.mxu0 0
  %5599 = vmatpush1.bf16.msra.mxu0 %v5224
  %5600 = vmatprep.subr.bf16.mxu0 0
  %5601 = vmatpush2.bf16.msra.mxu0 %v5239
  %5602 = vmatprep.subr.bf16.mxu0 0
  %5603 = vmatpush2.bf16.msra.mxu0 %v5238
  %5604 = vmatprep.subr.bf16.mxu0 0
  %5605 = vmatpush2.bf16.msra.mxu0 %v5237
  %5606 = vmatprep.subr.bf16.mxu0 0
  %5607 = vmatpush2.bf16.msra.mxu0 %v5236
  %5608 = vmatprep.subr.bf16.mxu0 0
  %5609 = vmatpush2.bf16.msra.mxu0 %v5235
  %5610 = vmatprep.subr.bf16.mxu0 0
  %5611 = vmatpush2.bf16.msra.mxu0 %v5234
  %5612 = vmatprep.subr.bf16.mxu0 0
  %5613 = vmatpush2.bf16.msra.mxu0 %v5233
  %5614 = vmatprep.subr.bf16.mxu0 0
  %5615 = vmatpush2.bf16.msra.mxu0 %v5232
  %5616 = vmatprep.mubr.bf16.mxu0 %v4294
  %5617 = vmatmul.mubr.bf16.gmra.mxu0 %v4293
  %v5618 = vpop.f32.mrf.mxu0
  %v5619 = vadd.f32 %v5579, %v5618
  %v5620 = vpop.f32.mrf.mxu0
  %v5621 = vpop.f32.mrf.mxu0
  %v5622 = vpop.f32.mrf.mxu0
  %5623 = vdwg.mxu0
  %5624 = vmatprep.subr.bf16.mxu0 0
  %5625 = vmatpush1.bf16.msra.mxu0 %v5247
  %5626 = vmatprep.subr.bf16.mxu0 0
  %5627 = vmatpush1.bf16.msra.mxu0 %v5246
  %5628 = vmatprep.subr.bf16.mxu0 0
  %5629 = vmatpush1.bf16.msra.mxu0 %v5245
  %5630 = vmatprep.subr.bf16.mxu0 0
  %5631 = vmatpush1.bf16.msra.mxu0 %v5244
  %5632 = vmatprep.subr.bf16.mxu0 0
  %5633 = vmatpush1.bf16.msra.mxu0 %v5243
  %5634 = vmatprep.subr.bf16.mxu0 0
  %5635 = vmatpush1.bf16.msra.mxu0 %v5242
  %5636 = vmatprep.subr.bf16.mxu0 0
  %5637 = vmatpush1.bf16.msra.mxu0 %v5241
  %5638 = vmatprep.subr.bf16.mxu0 0
  %5639 = vmatpush1.bf16.msra.mxu0 %v5240
  %5640 = vmatprep.subr.bf16.mxu0 0
  %5641 = vmatpush2.bf16.msra.mxu0 %v5255
  %5642 = vmatprep.subr.bf16.mxu0 0
  %5643 = vmatpush2.bf16.msra.mxu0 %v5254
  %5644 = vmatprep.subr.bf16.mxu0 0
  %5645 = vmatpush2.bf16.msra.mxu0 %v5253
  %5646 = vmatprep.subr.bf16.mxu0 0
  %5647 = vmatpush2.bf16.msra.mxu0 %v5252
  %5648 = vmatprep.subr.bf16.mxu0 0
  %5649 = vmatpush2.bf16.msra.mxu0 %v5251
  %5650 = vmatprep.subr.bf16.mxu0 0
  %5651 = vmatpush2.bf16.msra.mxu0 %v5250
  %5652 = vmatprep.subr.bf16.mxu0 0
  %5653 = vmatpush2.bf16.msra.mxu0 %v5249
  %5654 = vmatprep.subr.bf16.mxu0 0
  %5655 = vmatpush2.bf16.msra.mxu0 %v5248
  %5656 = vmatprep.mubr.bf16.mxu0 %v4296
  %5657 = vmatmul.mubr.bf16.gmra.mxu0 %v4295
  %v5658 = vpop.f32.mrf.mxu0
  %v5659 = vadd.f32 %v5619, %v5658
  %v5660 = vpop.f32.mrf.mxu0
  %v5661 = vpop.f32.mrf.mxu0
  %v5662 = vpop.f32.mrf.mxu0
  %5663 = vdwg.mxu0
  %5664 = vmatprep.subr.bf16.mxu0 0
  %5665 = vmatpush1.bf16.msra.mxu0 %v5263
  %5666 = vmatprep.subr.bf16.mxu0 0
  %5667 = vmatpush1.bf16.msra.mxu0 %v5262
  %5668 = vmatprep.subr.bf16.mxu0 0
  %5669 = vmatpush1.bf16.msra.mxu0 %v5261
  %5670 = vmatprep.subr.bf16.mxu0 0
  %5671 = vmatpush1.bf16.msra.mxu0 %v5260
  %5672 = vmatprep.subr.bf16.mxu0 0
  %5673 = vmatpush1.bf16.msra.mxu0 %v5259
  %5674 = vmatprep.subr.bf16.mxu0 0
  %5675 = vmatpush1.bf16.msra.mxu0 %v5258
  %5676 = vmatprep.subr.bf16.mxu0 0
  %5677 = vmatpush1.bf16.msra.mxu0 %v5257
  %5678 = vmatprep.subr.bf16.mxu0 0
  %5679 = vmatpush1.bf16.msra.mxu0 %v5256
  %5680 = vmatprep.subr.bf16.mxu0 0
  %5681 = vmatpush2.bf16.msra.mxu0 %v5271
  %5682 = vmatprep.subr.bf16.mxu0 0
  %5683 = vmatpush2.bf16.msra.mxu0 %v5270
  %5684 = vmatprep.subr.bf16.mxu0 0
  %5685 = vmatpush2.bf16.msra.mxu0 %v5269
  %5686 = vmatprep.subr.bf16.mxu0 0
  %5687 = vmatpush2.bf16.msra.mxu0 %v5268
  %5688 = vmatprep.subr.bf16.mxu0 0
  %5689 = vmatpush2.bf16.msra.mxu0 %v5267
  %5690 = vmatprep.subr.bf16.mxu0 0
  %5691 = vmatpush2.bf16.msra.mxu0 %v5266
  %5692 = vmatprep.subr.bf16.mxu0 0
  %5693 = vmatpush2.bf16.msra.mxu0 %v5265
  %5694 = vmatprep.subr.bf16.mxu0 0
  %5695 = vmatpush2.bf16.msra.mxu0 %v5264
  %5696 = vmatprep.mubr.bf16.mxu0 %v4298
  %5697 = vmatmul.mubr.bf16.gmra.mxu0 %v4297
  %v5698 = vpop.f32.mrf.mxu0
  %v5699 = vadd.f32 %v5659, %v5698
  %v5700 = vpop.f32.mrf.mxu0
  %v5701 = vpop.f32.mrf.mxu0
  %v5702 = vpop.f32.mrf.mxu0
  %5703 = vdwg.mxu0
  %5704 = vmatprep.subr.bf16.mxu0 0
  %5705 = vmatpush1.bf16.msra.mxu0 %v5279
  %5706 = vmatprep.subr.bf16.mxu0 0
  %5707 = vmatpush1.bf16.msra.mxu0 %v5278
  %5708 = vmatprep.subr.bf16.mxu0 0
  %5709 = vmatpush1.bf16.msra.mxu0 %v5277
  %5710 = vmatprep.subr.bf16.mxu0 0
  %5711 = vmatpush1.bf16.msra.mxu0 %v5276
  %5712 = vmatprep.subr.bf16.mxu0 0
  %5713 = vmatpush1.bf16.msra.mxu0 %v5275
  %5714 = vmatprep.subr.bf16.mxu0 0
  %5715 = vmatpush1.bf16.msra.mxu0 %v5274
  %5716 = vmatprep.subr.bf16.mxu0 0
  %5717 = vmatpush1.bf16.msra.mxu0 %v5273
  %5718 = vmatprep.subr.bf16.mxu0 0
  %5719 = vmatpush1.bf16.msra.mxu0 %v5272
  %5720 = vmatprep.subr.bf16.mxu0 0
  %5721 = vmatpush2.bf16.msra.mxu0 %v5287
  %5722 = vmatprep.subr.bf16.mxu0 0
  %5723 = vmatpush2.bf16.msra.mxu0 %v5286
  %5724 = vmatprep.subr.bf16.mxu0 0
  %5725 = vmatpush2.bf16.msra.mxu0 %v5285
  %5726 = vmatprep.subr.bf16.mxu0 0
  %5727 = vmatpush2.bf16.msra.mxu0 %v5284
  %5728 = vmatprep.subr.bf16.mxu0 0
  %5729 = vmatpush2.bf16.msra.mxu0 %v5283
  %5730 = vmatprep.subr.bf16.mxu0 0
  %5731 = vmatpush2.bf16.msra.mxu0 %v5282
  %5732 = vmatprep.subr.bf16.mxu0 0
  %5733 = vmatpush2.bf16.msra.mxu0 %v5281
  %5734 = vmatprep.subr.bf16.mxu0 0
  %5735 = vmatpush2.bf16.msra.mxu0 %v5280
  %5736 = vmatprep.mubr.bf16.mxu0 %v4300
  %5737 = vmatmul.mubr.bf16.gmra.mxu0 %v4299
  %v5738 = vpop.f32.mrf.mxu0
  %v5739 = vadd.f32 %v5699, %v5738
  %v5740 = vpop.f32.mrf.mxu0
  %v5741 = vpop.f32.mrf.mxu0
  %v5742 = vpop.f32.mrf.mxu0
  %5743 = vdwg.mxu0
  %5744 = vmatprep.subr.bf16.mxu0 0
  %5745 = vmatpush1.bf16.msra.mxu0 %v5295
  %5746 = vmatprep.subr.bf16.mxu0 0
  %5747 = vmatpush1.bf16.msra.mxu0 %v5294
  %5748 = vmatprep.subr.bf16.mxu0 0
  %5749 = vmatpush1.bf16.msra.mxu0 %v5293
  %5750 = vmatprep.subr.bf16.mxu0 0
  %5751 = vmatpush1.bf16.msra.mxu0 %v5292
  %5752 = vmatprep.subr.bf16.mxu0 0
  %5753 = vmatpush1.bf16.msra.mxu0 %v5291
  %5754 = vmatprep.subr.bf16.mxu0 0
  %5755 = vmatpush1.bf16.msra.mxu0 %v5290
  %5756 = vmatprep.subr.bf16.mxu0 0
  %5757 = vmatpush1.bf16.msra.mxu0 %v5289
  %5758 = vmatprep.subr.bf16.mxu0 0
  %5759 = vmatpush1.bf16.msra.mxu0 %v5288
  %5760 = vmatprep.subr.bf16.mxu0 0
  %5761 = vmatpush2.bf16.msra.mxu0 %v5303
  %5762 = vmatprep.subr.bf16.mxu0 0
  %5763 = vmatpush2.bf16.msra.mxu0 %v5302
  %5764 = vmatprep.subr.bf16.mxu0 0
  %5765 = vmatpush2.bf16.msra.mxu0 %v5301
  %5766 = vmatprep.subr.bf16.mxu0 0
  %5767 = vmatpush2.bf16.msra.mxu0 %v5300
  %5768 = vmatprep.subr.bf16.mxu0 0
  %5769 = vmatpush2.bf16.msra.mxu0 %v5299
  %5770 = vmatprep.subr.bf16.mxu0 0
  %5771 = vmatpush2.bf16.msra.mxu0 %v5298
  %5772 = vmatprep.subr.bf16.mxu0 0
  %5773 = vmatpush2.bf16.msra.mxu0 %v5297
  %5774 = vmatprep.subr.bf16.mxu0 0
  %5775 = vmatpush2.bf16.msra.mxu0 %v5296
  %5776 = vmatprep.mubr.bf16.mxu0 %v4302
  %5777 = vmatmul.mubr.bf16.gmra.mxu0 %v4301
  %v5778 = vpop.f32.mrf.mxu0
  %v5779 = vadd.f32 %v5739, %v5778
  %v5780 = vpop.f32.mrf.mxu0
  %v5781 = vpop.f32.mrf.mxu0
  %v5782 = vpop.f32.mrf.mxu0
  %5783 = vdwg.mxu0
  %5784 = vmatprep.subr.bf16.mxu0 0
  %5785 = vmatpush1.bf16.msra.mxu0 %v5311
  %5786 = vmatprep.subr.bf16.mxu0 0
  %5787 = vmatpush1.bf16.msra.mxu0 %v5310
  %5788 = vmatprep.subr.bf16.mxu0 0
  %5789 = vmatpush1.bf16.msra.mxu0 %v5309
  %5790 = vmatprep.subr.bf16.mxu0 0
  %5791 = vmatpush1.bf16.msra.mxu0 %v5308
  %5792 = vmatprep.subr.bf16.mxu0 0
  %5793 = vmatpush1.bf16.msra.mxu0 %v5307
  %5794 = vmatprep.subr.bf16.mxu0 0
  %5795 = vmatpush1.bf16.msra.mxu0 %v5306
  %5796 = vmatprep.subr.bf16.mxu0 0
  %5797 = vmatpush1.bf16.msra.mxu0 %v5305
  %5798 = vmatprep.subr.bf16.mxu0 0
  %5799 = vmatpush1.bf16.msra.mxu0 %v5304
  %5800 = vmatprep.subr.bf16.mxu0 0
  %5801 = vmatpush2.bf16.msra.mxu0 %v5319
  %5802 = vmatprep.subr.bf16.mxu0 0
  %5803 = vmatpush2.bf16.msra.mxu0 %v5318
  %5804 = vmatprep.subr.bf16.mxu0 0
  %5805 = vmatpush2.bf16.msra.mxu0 %v5317
  %5806 = vmatprep.subr.bf16.mxu0 0
  %5807 = vmatpush2.bf16.msra.mxu0 %v5316
  %5808 = vmatprep.subr.bf16.mxu0 0
  %5809 = vmatpush2.bf16.msra.mxu0 %v5315
  %5810 = vmatprep.subr.bf16.mxu0 0
  %5811 = vmatpush2.bf16.msra.mxu0 %v5314
  %5812 = vmatprep.subr.bf16.mxu0 0
  %5813 = vmatpush2.bf16.msra.mxu0 %v5313
  %5814 = vmatprep.subr.bf16.mxu0 0
  %5815 = vmatpush2.bf16.msra.mxu0 %v5312
  %5816 = vmatprep.mubr.bf16.mxu0 %v4304
  %5817 = vmatmul.mubr.bf16.gmra.mxu0 %v4303
  %v5818 = vpop.f32.mrf.mxu0
  %v5819 = vadd.f32 %v5779, %v5818
  %v5820 = vpop.f32.mrf.mxu0
  %v5821 = vpop.f32.mrf.mxu0
  %v5822 = vpop.f32.mrf.mxu0
  %5823 = vdwg.mxu0
  %5824 = vst [vmem:[%s10] sm:$0xff] %v5819
  // Predicated region
  $region42: #{cnn_forward.1} parent=0 // pred_check
    _
  $region43: #{cnn_forward.1} parent=0 // pred_check_branch
    %5826 = sbr.rel (0) target = $region45
  $region44: #{cnn_forward.1} parent=0 // pred_region
    _
  $region45: #{cnn_forward.1} parent=0 // pred_fallthru
    _
  // Predicated region
  $region46: #{cnn_forward.1} parent=0 // pred_check
    _
  $region47: #{cnn_forward.1} parent=0 // pred_check_branch
    %5828 = sbr.rel (0) target = $region49
  $region48: #{cnn_forward.1} parent=0 // pred_region
    _
  $region49: #{cnn_forward.1} parent=0 // pred_fallthru
    _

</llo_original>
